<compile_context>
chip_gen: v7x
topology: tpu7x:2x2x1
jax: 0.10.0
libtpu: 0.0.40
codegen_flags: <defaults>
</compile_context>

<pallas_src>
import functools

import jax
import jax.numpy as jnp
from jax.experimental import pallas as pl
from jax.experimental.pallas import tpu as pltpu

EPS = 1e-5


def _round_up(n, m):
    return -(-n // m) * m


def _vmem_limit_bytes():
    """Generation-aware VMEM budget (headroom on v7x, ~100 MiB on v5e/v6e)."""
    try:
        cap = pltpu.get_tpu_info().vmem_capacity_bytes
    except Exception:  # API drift / no TPU at trace time -> conservative default
        cap = 64 * 1024 * 1024
    return int(min(max(cap - 16 * 1024 * 1024, 32 * 1024 * 1024),
                   100 * 1024 * 1024))


# --------------------------------------------------------------------------
# Fused generator kernel: style encoder + gamma/beta MLP + content encoder +
# instance norm + AdaIN + output 3x3 conv + tanh, one batch image per step.
# --------------------------------------------------------------------------

def _generator_kernel(cont_ref, refr_ref, wc_ref, bc_ref, ws_ref, bs_ref,
                      wgb_ref, bgb_ref, wo_ref, bo_ref, out_ref, feat_ref,
                      *, W, halo):
    HW = feat_ref.shape[0] - 2 * halo
    chid = feat_ref.shape[1]
    cout = wo_ref.shape[2]

    # ---- style encoder on the reference image: single K=32 matmul over the
    #      tap-packed input + relu + global-average-pool, then the fused
    #      gamma/beta MLP (no HBM round trip for gamma/beta).
    s = jnp.dot(refr_ref[...], ws_ref[...], preferred_element_type=jnp.float32)
    s = jnp.maximum(s + bs_ref[...], 0.0)
    pooled = jnp.mean(s, axis=0, keepdims=True)                      # (1, Chid)
    gb = jnp.dot(pooled.astype(jnp.bfloat16), wgb_ref[...],
                 preferred_element_type=jnp.float32) + bgb_ref[...]  # (1, 2*Chid)
    gamma = gb[:, :chid]
    beta = gb[:, chid:]

    # ---- content encoder: single K=32 matmul + instance norm (two-pass) + relu
    c = jnp.dot(cont_ref[...], wc_ref[...], preferred_element_type=jnp.float32)
    c = c + bc_ref[...]
    mu = jnp.mean(c, axis=0, keepdims=True)
    cc = c - mu
    var = jnp.mean(cc * cc, axis=0, keepdims=True)
    c = jnp.maximum(cc * jax.lax.rsqrt(var + EPS), 0.0)

    # ---- AdaIN (instance norm + per-image learned affine) + relu
    mu2 = jnp.mean(c, axis=0, keepdims=True)
    c2 = c - mu2
    var2 = jnp.mean(c2 * c2, axis=0, keepdims=True)
    y = jnp.maximum(gamma * (c2 * jax.lax.rsqrt(var2 + EPS)) + beta, 0.0)

    # ---- stash the AdaIN feature into the bf16 VMEM scratch. Only the halo
    #      rows are zeroed (the interior is fully overwritten each step); the
    #      16-row-aligned halo keeps the big (HW, Chid) store unmasked.
    #      Halos are re-zeroed every step (not under program_id==0) so a
    #      megacore split of the parallel batch axis can never see dirty rows.
    feat_ref[pl.ds(0, halo), :] = jnp.zeros((halo, chid), feat_ref.dtype)
    feat_ref[pl.ds(halo + HW, halo), :] = jnp.zeros((halo, chid), feat_ref.dtype)
    feat_ref[pl.ds(halo, HW), :] = y.astype(feat_ref.dtype)

    # ---- output 3x3 conv over Chid: 9 shifted-slice bf16 matmuls with static,
    #      mostly sublane-aligned offsets; dx=+-1 taps masked at the row edges.
    col = jax.lax.broadcasted_iota(jnp.int32, (HW, 1), 0) % W
    not_left = col != 0
    not_right = col != (W - 1)
    acc = jnp.zeros((HW, cout), jnp.float32)
    for dy in range(3):
        for dx in range(3):
            start = halo + (dy - 1) * W + (dx - 1)      # static python int
            tap = feat_ref[pl.ds(start, HW), :]
            if dx == 0:
                tap = jnp.where(not_left, tap, jnp.zeros_like(tap))
            elif dx == 2:
                tap = jnp.where(not_right, tap, jnp.zeros_like(tap))
            acc = acc + jnp.dot(tap, wo_ref[dy * 3 + dx],
                                preferred_element_type=jnp.float32)
    out_ref[...] = jnp.tanh(acc + bo_ref[...]).astype(out_ref.dtype)


# --------------------------------------------------------------------------
# pallas_call wrapper (grid over batch; whole image per step at these shapes)
# --------------------------------------------------------------------------

def _generator_call(cont_packed, ref_packed, params, H, W):
    B, HW, kp = cont_packed.shape
    wc, bc = params["w_content"], params["b_content"]
    ws, bs = params["w_class"], params["b_class"]
    wgb, bgb = params["w_gb"], params["b_gb"]
    wo, bo = params["w_out"], params["b_out"]
    chid = wc.shape[1]
    cout = wo.shape[2]
    halo = _round_up(W + 1, 16)          # 16-row aligned vertical halo (bf16 scratch)
    kernel = functools.partial(_generator_kernel, W=W, halo=halo)

    cost = pl.CostEstimate(
        flops=2 * B * HW * (2 * kp * chid + 9 * chid * cout)
              + 2 * B * chid * (2 * chid),
        transcendentals=B * HW * cout,
        bytes_accessed=(cont_packed.size + ref_packed.size) * 2
                       + (wc.size + ws.size + wgb.size + wo.size) * 2
                       + (bc.size + bs.size + bgb.size + bo.size) * 4
                       + B * HW * cout * 2,
    )

    full2 = lambda b: (0, 0)
    full3 = lambda b: (0, 0, 0)
    return pl.pallas_call(
        kernel,
        out_shape=jax.ShapeDtypeStruct((B, HW, cout), jnp.bfloat16),
        grid=(B,),
        in_specs=[
            pl.BlockSpec((None, HW, kp), lambda b: (b, 0, 0)),   # content (packed)
            pl.BlockSpec((None, HW, kp), lambda b: (b, 0, 0)),   # reference (packed)
            pl.BlockSpec(wc.shape, full2),
            pl.BlockSpec(bc.shape, full2),
            pl.BlockSpec(ws.shape, full2),
            pl.BlockSpec(bs.shape, full2),
            pl.BlockSpec(wgb.shape, full2),
            pl.BlockSpec(bgb.shape, full2),
            pl.BlockSpec(wo.shape, full3),
            pl.BlockSpec(bo.shape, full2),
        ],
        out_specs=pl.BlockSpec((None, HW, cout), lambda b: (b, 0, 0)),
        scratch_shapes=[pltpu.VMEM((HW + 2 * halo, chid), jnp.bfloat16)],
        compiler_params=pltpu.CompilerParams(
            dimension_semantics=("parallel",),
            vmem_limit_bytes=_vmem_limit_bytes(),
        ),
        cost_estimate=cost,
    )(cont_packed, ref_packed, wc, bc, ws, bs, wgb, bgb, wo, bo)


# --------------------------------------------------------------------------
# JAX glue: parameter init, input tap-packing, evaluate_reference pipeline
# --------------------------------------------------------------------------

def init_params(key, c_in, c_hid, c_out_pad=8):
    """weights_init('gaussian'): N(0, 0.02) weights, zero biases; bf16 MXU weights."""
    std = 0.02
    k_pad = _round_up(9 * c_in, 8)
    ks = jax.random.split(key, 5)
    p = {}
    # content / class encoder 3x3 convs, flattened tap-major (dy, dx, cin) and
    # zero-padded to k_pad rows to match the tap-packed input layout.
    wc = std * jax.random.normal(ks[0], (3, 3, c_in, c_hid), jnp.float32)
    p["w_content"] = jnp.pad(wc.reshape(9 * c_in, c_hid),
                             ((0, k_pad - 9 * c_in), (0, 0))).astype(jnp.bfloat16)
    p["b_content"] = jnp.zeros((1, c_hid), jnp.float32)
    ws = std * jax.random.normal(ks[1], (3, 3, c_in, c_hid), jnp.float32)
    p["w_class"] = jnp.pad(ws.reshape(9 * c_in, c_hid),
                           ((0, k_pad - 9 * c_in), (0, 0))).astype(jnp.bfloat16)
    p["b_class"] = jnp.zeros((1, c_hid), jnp.float32)
    # MLP style -> (gamma | beta), concatenated so the kernel does one matmul
    wg = std * jax.random.normal(ks[2], (c_hid, c_hid), jnp.float32)
    wb = std * jax.random.normal(ks[3], (c_hid, c_hid), jnp.float32)
    p["w_gb"] = jnp.concatenate([wg, wb], axis=1).astype(jnp.bfloat16)
    p["b_gb"] = jnp.zeros((1, 2 * c_hid), jnp.float32)
    # output 3x3 conv: (3,3,Chid,Cin) with output channels padded to c_out_pad
    wo = std * jax.random.normal(ks[4], (3, 3, c_hid, c_in), jnp.float32)
    wo = jnp.pad(wo, ((0, 0), (0, 0), (0, 0), (0, c_out_pad - c_in)))
    p["w_out"] = wo.reshape(9, c_hid, c_out_pad).astype(jnp.bfloat16)
    p["b_out"] = jnp.zeros((1, c_out_pad), jnp.float32)
    return p


def _pack_taps3x3(x_nhwc, k_pad):
    """Pack the 9 zero-padded 3x3 taps of a small-channel image into lanes (bf16)."""
    B, H, W, C = x_nhwc.shape
    x = x_nhwc.astype(jnp.bfloat16)
    xp = jnp.pad(x, ((0, 0), (1, 1), (1, 1), (0, 0)))
    taps = [xp[:, dy:dy + H, dx:dx + W, :] for dy in range(3) for dx in range(3)]
    packed = jnp.concatenate(taps, axis=-1).reshape(B, H * W, 9 * C)
    return jnp.pad(packed, ((0, 0), (0, 0), (0, k_pad - 9 * C)))


def trainer_forward(*inputs):
    # Mirrors Trainer.forward: not implemented in the reference module.
    print("Forward function not implemented.")
    return None


@jax.jit
def evaluate_reference(params, content_nchw, reference_nchw):
    """Equivalent of Trainer.evaluate_reference (eval / no-grad generator pass)."""
    B, Cin, H, W = content_nchw.shape
    k_pad = params["w_content"].shape[0]

    content = jnp.transpose(content_nchw, (0, 2, 3, 1))
    reference = jnp.transpose(reference_nchw, (0, 2, 3, 1))

    cont_packed = _pack_taps3x3(content, k_pad)      # (B, HW, 32) bf16
    ref_packed = _pack_taps3x3(reference, k_pad)     # (B, HW, 32) bf16

    out = _generator_call(cont_packed, ref_packed, params, H, W)  # (B, HW, 8) bf16
    img = out[:, :, :Cin].astype(jnp.float32).reshape(B, H, W, Cin)
    return jnp.transpose(img, (0, 3, 1, 2))          # back to NCHW


if __name__ == "__main__":
    key = jax.random.PRNGKey(0)
    k_c, k_r = jax.random.split(key)
    B, Cin, H, W = 2, 3, 16, 16
    Chid = 128   # lane-dense hidden width (multiple of 128)

    content = jax.random.normal(k_c, (B, Cin, H, W), dtype=jnp.float32)
    reference = jax.random.normal(k_r, (B, Cin, H, W), dtype=jnp.float32)
    params = init_params(jax.random.PRNGKey(42), Cin, Chid)

    generated = evaluate_reference(params, content, reference)
    generated = jax.block_until_ready(generated)

    assert generated.shape == (B, Cin, H, W), generated.shape
    assert bool(jnp.all(jnp.isfinite(generated)))
    print("KERNEL_OK")
</pallas_src>

<mosaic_0001>
module attributes {stable_mosaic.version = 11 : i64} {
  func.func @_generator_kernel(%arg0: i32, %arg1: memref<1x256x32xbf16, #tpu.memory_space<vmem>>, %arg2: memref<1x256x32xbf16, #tpu.memory_space<vmem>>, %arg3: memref<32x128xbf16, #tpu.memory_space<vmem>>, %arg4: memref<1x128xf32, #tpu.memory_space<vmem>>, %arg5: memref<32x128xbf16, #tpu.memory_space<vmem>>, %arg6: memref<1x128xf32, #tpu.memory_space<vmem>>, %arg7: memref<128x256xbf16, #tpu.memory_space<vmem>>, %arg8: memref<1x256xf32, #tpu.memory_space<vmem>>, %arg9: memref<9x128x8xbf16, #tpu.memory_space<vmem>>, %arg10: memref<1x8xf32, #tpu.memory_space<vmem>>, %arg11: memref<1x256x8xbf16, #tpu.memory_space<vmem>>, %arg12: memref<320x128xbf16, #tpu.memory_space<vmem>>) attributes {dimension_semantics = [#tpu.dimension_semantics<parallel>], iteration_bounds = array<i64: 2>, scalar_prefetch = 0 : i64, scratch_operands = 1 : i64, tpu.core_type = #tpu.core_type<tc>, window_params = [{transform_indices = @transform_0, window_bounds = array<i64: 1, 256, 32>}, {transform_indices = @transform_1, window_bounds = array<i64: 1, 256, 32>}, {pipeline_mode = #tpu.pipeline_mode<synchronous>, transform_indices = @transform_2, window_bounds = array<i64: 32, 128>}, {pipeline_mode = #tpu.pipeline_mode<synchronous>, transform_indices = @transform_3, window_bounds = array<i64: 1, 128>}, {pipeline_mode = #tpu.pipeline_mode<synchronous>, transform_indices = @transform_4, window_bounds = array<i64: 32, 128>}, {pipeline_mode = #tpu.pipeline_mode<synchronous>, transform_indices = @transform_5, window_bounds = array<i64: 1, 128>}, {pipeline_mode = #tpu.pipeline_mode<synchronous>, transform_indices = @transform_6, window_bounds = array<i64: 128, 256>}, {pipeline_mode = #tpu.pipeline_mode<synchronous>, transform_indices = @transform_7, window_bounds = array<i64: 1, 256>}, {pipeline_mode = #tpu.pipeline_mode<synchronous>, transform_indices = @transform_8, window_bounds = array<i64: 9, 128, 8>}, {pipeline_mode = #tpu.pipeline_mode<synchronous>, transform_indices = @transform_9, window_bounds = array<i64: 1, 8>}, {transform_indices = @transform_10, window_bounds = array<i64: 1, 256, 8>}]} {
    %c0 = arith.constant 0 : index
    %c0_0 = arith.constant 0 : index
    %c0_1 = arith.constant 0 : index
    %0 = vector.load %arg2[%c0, %c0_0, %c0_1] : memref<1x256x32xbf16, #tpu.memory_space<vmem>>, vector<1x256x32xbf16>
    %1 = vector.shape_cast %0 : vector<1x256x32xbf16> to vector<256x32xbf16>
    %c0_2 = arith.constant 0 : index
    %c0_3 = arith.constant 0 : index
    %2 = vector.load %arg5[%c0_2, %c0_3] : memref<32x128xbf16, #tpu.memory_space<vmem>>, vector<32x128xbf16>
    %cst = arith.constant dense<0.000000e+00> : vector<256x128xf32>
    %3 = tpu.matmul %1, %2, %cst {dimension_numbers = #tpu.dot_dimension_numbers<[1], [0], [0], [1], [0, 0, 1, 1], [], []>} : vector<256x32xbf16>, vector<32x128xbf16>, vector<256x128xf32> -> vector<256x128xf32>
    %c0_4 = arith.constant 0 : index
    %c0_5 = arith.constant 0 : index
    %4 = vector.load %arg6[%c0_4, %c0_5] : memref<1x128xf32, #tpu.memory_space<vmem>>, vector<1x128xf32>
    %5 = vector.broadcast %4 : vector<1x128xf32> to vector<256x128xf32>
    %6 = arith.addf %3, %5 : vector<256x128xf32>
    %cst_6 = arith.constant 0.000000e+00 : f32
    %7 = vector.broadcast %cst_6 : f32 to vector<256x128xf32>
    %8 = arith.maximumf %6, %7 : vector<256x128xf32>
    %cst_7 = arith.constant dense<0.000000e+00> : vector<128xf32>
    %9 = vector.multi_reduction <add>, %8, %cst_7 [0] : vector<256x128xf32> to vector<128xf32>
    %10 = vector.shape_cast %9 : vector<128xf32> to vector<1x128xf32>
    %cst_8 = arith.constant 2.560000e+02 : f32
    %11 = vector.broadcast %cst_8 : f32 to vector<1x128xf32>
    %12 = arith.divf %10, %11 : vector<1x128xf32>
    %13 = arith.truncf %12 : vector<1x128xf32> to vector<1x128xbf16>
    %c0_9 = arith.constant 0 : index
    %c0_10 = arith.constant 0 : index
    %14 = vector.load %arg7[%c0_9, %c0_10] : memref<128x256xbf16, #tpu.memory_space<vmem>>, vector<128x256xbf16>
    %cst_11 = arith.constant dense<0.000000e+00> : vector<1x256xf32>
    %15 = tpu.matmul %13, %14, %cst_11 {dimension_numbers = #tpu.dot_dimension_numbers<[1], [0], [0], [1], [0, 0, 1, 1], [], []>} : vector<1x128xbf16>, vector<128x256xbf16>, vector<1x256xf32> -> vector<1x256xf32>
    %c0_12 = arith.constant 0 : index
    %c0_13 = arith.constant 0 : index
    %16 = vector.load %arg8[%c0_12, %c0_13] : memref<1x256xf32, #tpu.memory_space<vmem>>, vector<1x256xf32>
    %17 = arith.addf %15, %16 : vector<1x256xf32>
    %18 = vector.extract_strided_slice %17 {offsets = [0, 0], sizes = [1, 128], strides = [1, 1]} : vector<1x256xf32> to vector<1x128xf32>
    %19 = vector.extract_strided_slice %17 {offsets = [0, 128], sizes = [1, 128], strides = [1, 1]} : vector<1x256xf32> to vector<1x128xf32>
    %c0_14 = arith.constant 0 : index
    %c0_15 = arith.constant 0 : index
    %c0_16 = arith.constant 0 : index
    %20 = vector.load %arg1[%c0_14, %c0_15, %c0_16] : memref<1x256x32xbf16, #tpu.memory_space<vmem>>, vector<1x256x32xbf16>
    %21 = vector.shape_cast %20 : vector<1x256x32xbf16> to vector<256x32xbf16>
    %c0_17 = arith.constant 0 : index
    %c0_18 = arith.constant 0 : index
    %22 = vector.load %arg3[%c0_17, %c0_18] : memref<32x128xbf16, #tpu.memory_space<vmem>>, vector<32x128xbf16>
    %cst_19 = arith.constant dense<0.000000e+00> : vector<256x128xf32>
    %23 = tpu.matmul %21, %22, %cst_19 {dimension_numbers = #tpu.dot_dimension_numbers<[1], [0], [0], [1], [0, 0, 1, 1], [], []>} : vector<256x32xbf16>, vector<32x128xbf16>, vector<256x128xf32> -> vector<256x128xf32>
    %c0_20 = arith.constant 0 : index
    %c0_21 = arith.constant 0 : index
    %24 = vector.load %arg4[%c0_20, %c0_21] : memref<1x128xf32, #tpu.memory_space<vmem>>, vector<1x128xf32>
    %25 = vector.broadcast %24 : vector<1x128xf32> to vector<256x128xf32>
    %26 = arith.addf %23, %25 : vector<256x128xf32>
    %cst_22 = arith.constant dense<0.000000e+00> : vector<128xf32>
    %27 = vector.multi_reduction <add>, %26, %cst_22 [0] : vector<256x128xf32> to vector<128xf32>
    %28 = vector.shape_cast %27 : vector<128xf32> to vector<1x128xf32>
    %cst_23 = arith.constant 2.560000e+02 : f32
    %29 = vector.broadcast %cst_23 : f32 to vector<1x128xf32>
    %30 = arith.divf %28, %29 : vector<1x128xf32>
    %31 = vector.broadcast %30 : vector<1x128xf32> to vector<256x128xf32>
    %32 = arith.subf %26, %31 : vector<256x128xf32>
    %33 = arith.mulf %32, %32 : vector<256x128xf32>
    %cst_24 = arith.constant dense<0.000000e+00> : vector<128xf32>
    %34 = vector.multi_reduction <add>, %33, %cst_24 [0] : vector<256x128xf32> to vector<128xf32>
    %35 = vector.shape_cast %34 : vector<128xf32> to vector<1x128xf32>
    %cst_25 = arith.constant 2.560000e+02 : f32
    %36 = vector.broadcast %cst_25 : f32 to vector<1x128xf32>
    %37 = arith.divf %35, %36 : vector<1x128xf32>
    %cst_26 = arith.constant 9.99999974E-6 : f32
    %38 = vector.broadcast %cst_26 : f32 to vector<1x128xf32>
    %39 = arith.addf %37, %38 : vector<1x128xf32>
    %40 = math.rsqrt %39 : vector<1x128xf32>
    %41 = vector.broadcast %40 : vector<1x128xf32> to vector<256x128xf32>
    %42 = arith.mulf %32, %41 : vector<256x128xf32>
    %cst_27 = arith.constant 0.000000e+00 : f32
    %43 = vector.broadcast %cst_27 : f32 to vector<256x128xf32>
    %44 = arith.maximumf %42, %43 : vector<256x128xf32>
    %cst_28 = arith.constant dense<0.000000e+00> : vector<128xf32>
    %45 = vector.multi_reduction <add>, %44, %cst_28 [0] : vector<256x128xf32> to vector<128xf32>
    %46 = vector.shape_cast %45 : vector<128xf32> to vector<1x128xf32>
    %cst_29 = arith.constant 2.560000e+02 : f32
    %47 = vector.broadcast %cst_29 : f32 to vector<1x128xf32>
    %48 = arith.divf %46, %47 : vector<1x128xf32>
    %49 = vector.broadcast %48 : vector<1x128xf32> to vector<256x128xf32>
    %50 = arith.subf %44, %49 : vector<256x128xf32>
    %51 = arith.mulf %50, %50 : vector<256x128xf32>
    %cst_30 = arith.constant dense<0.000000e+00> : vector<128xf32>
    %52 = vector.multi_reduction <add>, %51, %cst_30 [0] : vector<256x128xf32> to vector<128xf32>
    %53 = vector.shape_cast %52 : vector<128xf32> to vector<1x128xf32>
    %cst_31 = arith.constant 2.560000e+02 : f32
    %54 = vector.broadcast %cst_31 : f32 to vector<1x128xf32>
    %55 = arith.divf %53, %54 : vector<1x128xf32>
    %cst_32 = arith.constant 9.99999974E-6 : f32
    %56 = vector.broadcast %cst_32 : f32 to vector<1x128xf32>
    %57 = arith.addf %55, %56 : vector<1x128xf32>
    %58 = math.rsqrt %57 : vector<1x128xf32>
    %59 = vector.broadcast %58 : vector<1x128xf32> to vector<256x128xf32>
    %60 = arith.mulf %50, %59 : vector<256x128xf32>
    %61 = vector.broadcast %18 : vector<1x128xf32> to vector<256x128xf32>
    %62 = arith.mulf %61, %60 : vector<256x128xf32>
    %63 = vector.broadcast %19 : vector<1x128xf32> to vector<256x128xf32>
    %64 = arith.addf %62, %63 : vector<256x128xf32>
    %cst_33 = arith.constant 0.000000e+00 : f32
    %65 = vector.broadcast %cst_33 : f32 to vector<256x128xf32>
    %66 = arith.maximumf %64, %65 : vector<256x128xf32>
    %cst_34 = arith.constant 0.000000e+00 : bf16
    %67 = vector.broadcast %cst_34 : bf16 to vector<32x128xbf16>
    %c0_35 = arith.constant 0 : index
    %c0_36 = arith.constant 0 : index
    %68 = vector.load %arg12[%c0_35, %c0_36] : memref<320x128xbf16, #tpu.memory_space<vmem>>, vector<32x128xbf16>
    tpu.vector_store %arg12[%c0_35, %c0_36], %67 {strides = array<i32>} : memref<320x128xbf16, #tpu.memory_space<vmem>>, vector<32x128xbf16>,
    %cst_37 = arith.constant 0.000000e+00 : bf16
    %69 = vector.broadcast %cst_37 : bf16 to vector<32x128xbf16>
    %c288 = arith.constant 288 : index
    %c0_38 = arith.constant 0 : index
    %70 = vector.load %arg12[%c288, %c0_38] : memref<320x128xbf16, #tpu.memory_space<vmem>>, vector<32x128xbf16>
    tpu.vector_store %arg12[%c288, %c0_38], %69 {strides = array<i32>} : memref<320x128xbf16, #tpu.memory_space<vmem>>, vector<32x128xbf16>,
    %71 = arith.truncf %66 : vector<256x128xf32> to vector<256x128xbf16>
    %c32 = arith.constant 32 : index
    %c0_39 = arith.constant 0 : index
    %72 = vector.load %arg12[%c32, %c0_39] : memref<320x128xbf16, #tpu.memory_space<vmem>>, vector<256x128xbf16>
    tpu.vector_store %arg12[%c32, %c0_39], %71 {strides = array<i32>} : memref<320x128xbf16, #tpu.memory_space<vmem>>, vector<256x128xbf16>,
    %73 = tpu.iota {dimensions = array<i32: 0>} : vector<256x1xi32>
    %c16_i32 = arith.constant 16 : i32
    %c0_i32 = arith.constant 0 : i32
    %74 = arith.cmpi eq, %c16_i32, %c0_i32 : i32
    %c1_i32 = arith.constant 1 : i32
    %75 = arith.select %74, %c1_i32, %c16_i32 : i32
    %76 = vector.broadcast %75 : i32 to vector<256x1xi32>
    %77 = arith.remsi %73, %76 : vector<256x1xi32>
    %c0_i32_40 = arith.constant 0 : i32
    %78 = vector.broadcast %c0_i32_40 : i32 to vector<256x1xi32>
    %79 = arith.cmpi ne, %77, %78 : vector<256x1xi32>
    %c0_i32_41 = arith.constant 0 : i32
    %80 = vector.broadcast %c0_i32_41 : i32 to vector<256x1xi32>
    %81 = arith.cmpi slt, %77, %80 : vector<256x1xi32>
    %c0_i32_42 = arith.constant 0 : i32
    %82 = arith.cmpi slt, %75, %c0_i32_42 : i32
    %83 = vector.broadcast %82 : i1 to vector<256x1xi1>
    %84 = vector.broadcast %83 : vector<256x1xi1> to vector<256x1xi1>
    %85 = arith.xori %81, %84 : vector<256x1xi1>
    %86 = arith.andi %85, %79 : vector<256x1xi1>
    %87 = vector.broadcast %75 : i32 to vector<256x1xi32>
    %88 = arith.addi %77, %87 : vector<256x1xi32>
    %89 = arith.select %86, %88, %77 : vector<256x1xi1>, vector<256x1xi32>
    %c0_i32_43 = arith.constant 0 : i32
    %90 = vector.broadcast %c0_i32_43 : i32 to vector<256x1xi32>
    %91 = arith.cmpi ne, %89, %90 : vector<256x1xi32>
    %c15_i32 = arith.constant 15 : i32
    %92 = vector.broadcast %c15_i32 : i32 to vector<256x1xi32>
    %93 = arith.cmpi ne, %89, %92 : vector<256x1xi32>
    %cst_44 = arith.constant 0.000000e+00 : f32
    %94 = vector.broadcast %cst_44 : f32 to vector<256x8xf32>
    %c15 = arith.constant 15 : index
    %c0_45 = arith.constant 0 : index
    %95 = vector.load %arg12[%c15, %c0_45] : memref<320x128xbf16, #tpu.memory_space<vmem>>, vector<256x128xbf16>
    %cst_46 = arith.constant 0.000000e+00 : bf16
    %96 = vector.broadcast %cst_46 : bf16 to vector<256x128xbf16>
    %97 = vector.shape_cast %91 : vector<256x1xi1> to vector<256x1xi1>
    %98 = vector.broadcast %97 : vector<256x1xi1> to vector<256x128xi1>
    %99 = arith.select %98, %95, %96 : vector<256x128xi1>, vector<256x128xbf16>
    %c0_47 = arith.constant 0 : index
    %c0_48 = arith.constant 0 : index
    %c0_49 = arith.constant 0 : index
    %100 = vector.load %arg9[%c0_47, %c0_48, %c0_49] : memref<9x128x8xbf16, #tpu.memory_space<vmem>>, vector<1x128x8xbf16>
    %101 = vector.shape_cast %100 : vector<1x128x8xbf16> to vector<128x8xbf16>
    %cst_50 = arith.constant dense<0.000000e+00> : vector<256x8xf32>
    %102 = tpu.matmul %99, %101, %cst_50 {dimension_numbers = #tpu.dot_dimension_numbers<[1], [0], [0], [1], [0, 0, 1, 1], [], []>} : vector<256x128xbf16>, vector<128x8xbf16>, vector<256x8xf32> -> vector<256x8xf32>
    %103 = arith.addf %94, %102 : vector<256x8xf32>
    %c16 = arith.constant 16 : index
    %c0_51 = arith.constant 0 : index
    %104 = vector.load %arg12[%c16, %c0_51] : memref<320x128xbf16, #tpu.memory_space<vmem>>, vector<256x128xbf16>
    %c1 = arith.constant 1 : index
    %c0_52 = arith.constant 0 : index
    %c0_53 = arith.constant 0 : index
    %105 = vector.load %arg9[%c1, %c0_52, %c0_53] : memref<9x128x8xbf16, #tpu.memory_space<vmem>>, vector<1x128x8xbf16>
    %106 = vector.shape_cast %105 : vector<1x128x8xbf16> to vector<128x8xbf16>
    %cst_54 = arith.constant dense<0.000000e+00> : vector<256x8xf32>
    %107 = tpu.matmul %104, %106, %cst_54 {dimension_numbers = #tpu.dot_dimension_numbers<[1], [0], [0], [1], [0, 0, 1, 1], [], []>} : vector<256x128xbf16>, vector<128x8xbf16>, vector<256x8xf32> -> vector<256x8xf32>
    %108 = arith.addf %103, %107 : vector<256x8xf32>
    %c17 = arith.constant 17 : index
    %c0_55 = arith.constant 0 : index
    %109 = vector.load %arg12[%c17, %c0_55] : memref<320x128xbf16, #tpu.memory_space<vmem>>, vector<256x128xbf16>
    %cst_56 = arith.constant 0.000000e+00 : bf16
    %110 = vector.broadcast %cst_56 : bf16 to vector<256x128xbf16>
    %111 = vector.shape_cast %93 : vector<256x1xi1> to vector<256x1xi1>
    %112 = vector.broadcast %111 : vector<256x1xi1> to vector<256x128xi1>
    %113 = arith.select %112, %109, %110 : vector<256x128xi1>, vector<256x128xbf16>
    %c2 = arith.constant 2 : index
    %c0_57 = arith.constant 0 : index
    %c0_58 = arith.constant 0 : index
    %114 = vector.load %arg9[%c2, %c0_57, %c0_58] : memref<9x128x8xbf16, #tpu.memory_space<vmem>>, vector<1x128x8xbf16>
    %115 = vector.shape_cast %114 : vector<1x128x8xbf16> to vector<128x8xbf16>
    %cst_59 = arith.constant dense<0.000000e+00> : vector<256x8xf32>
    %116 = tpu.matmul %113, %115, %cst_59 {dimension_numbers = #tpu.dot_dimension_numbers<[1], [0], [0], [1], [0, 0, 1, 1], [], []>} : vector<256x128xbf16>, vector<128x8xbf16>, vector<256x8xf32> -> vector<256x8xf32>
    %117 = arith.addf %108, %116 : vector<256x8xf32>
    %c31 = arith.constant 31 : index
    %c0_60 = arith.constant 0 : index
    %118 = vector.load %arg12[%c31, %c0_60] : memref<320x128xbf16, #tpu.memory_space<vmem>>, vector<256x128xbf16>
    %cst_61 = arith.constant 0.000000e+00 : bf16
    %119 = vector.broadcast %cst_61 : bf16 to vector<256x128xbf16>
    %120 = vector.shape_cast %91 : vector<256x1xi1> to vector<256x1xi1>
    %121 = vector.broadcast %120 : vector<256x1xi1> to vector<256x128xi1>
    %122 = arith.select %121, %118, %119 : vector<256x128xi1>, vector<256x128xbf16>
    %c3 = arith.constant 3 : index
    %c0_62 = arith.constant 0 : index
    %c0_63 = arith.constant 0 : index
    %123 = vector.load %arg9[%c3, %c0_62, %c0_63] : memref<9x128x8xbf16, #tpu.memory_space<vmem>>, vector<1x128x8xbf16>
    %124 = vector.shape_cast %123 : vector<1x128x8xbf16> to vector<128x8xbf16>
    %cst_64 = arith.constant dense<0.000000e+00> : vector<256x8xf32>
    %125 = tpu.matmul %122, %124, %cst_64 {dimension_numbers = #tpu.dot_dimension_numbers<[1], [0], [0], [1], [0, 0, 1, 1], [], []>} : vector<256x128xbf16>, vector<128x8xbf16>, vector<256x8xf32> -> vector<256x8xf32>
    %126 = arith.addf %117, %125 : vector<256x8xf32>
    %c32_65 = arith.constant 32 : index
    %c0_66 = arith.constant 0 : index
    %127 = vector.load %arg12[%c32_65, %c0_66] : memref<320x128xbf16, #tpu.memory_space<vmem>>, vector<256x128xbf16>
    %c4 = arith.constant 4 : index
    %c0_67 = arith.constant 0 : index
    %c0_68 = arith.constant 0 : index
    %128 = vector.load %arg9[%c4, %c0_67, %c0_68] : memref<9x128x8xbf16, #tpu.memory_space<vmem>>, vector<1x128x8xbf16>
    %129 = vector.shape_cast %128 : vector<1x128x8xbf16> to vector<128x8xbf16>
    %cst_69 = arith.constant dense<0.000000e+00> : vector<256x8xf32>
    %130 = tpu.matmul %127, %129, %cst_69 {dimension_numbers = #tpu.dot_dimension_numbers<[1], [0], [0], [1], [0, 0, 1, 1], [], []>} : vector<256x128xbf16>, vector<128x8xbf16>, vector<256x8xf32> -> vector<256x8xf32>
    %131 = arith.addf %126, %130 : vector<256x8xf32>
    %c33 = arith.constant 33 : index
    %c0_70 = arith.constant 0 : index
    %132 = vector.load %arg12[%c33, %c0_70] : memref<320x128xbf16, #tpu.memory_space<vmem>>, vector<256x128xbf16>
    %cst_71 = arith.constant 0.000000e+00 : bf16
    %133 = vector.broadcast %cst_71 : bf16 to vector<256x128xbf16>
    %134 = vector.shape_cast %93 : vector<256x1xi1> to vector<256x1xi1>
    %135 = vector.broadcast %134 : vector<256x1xi1> to vector<256x128xi1>
    %136 = arith.select %135, %132, %133 : vector<256x128xi1>, vector<256x128xbf16>
    %c5 = arith.constant 5 : index
    %c0_72 = arith.constant 0 : index
    %c0_73 = arith.constant 0 : index
    %137 = vector.load %arg9[%c5, %c0_72, %c0_73] : memref<9x128x8xbf16, #tpu.memory_space<vmem>>, vector<1x128x8xbf16>
    %138 = vector.shape_cast %137 : vector<1x128x8xbf16> to vector<128x8xbf16>
    %cst_74 = arith.constant dense<0.000000e+00> : vector<256x8xf32>
    %139 = tpu.matmul %136, %138, %cst_74 {dimension_numbers = #tpu.dot_dimension_numbers<[1], [0], [0], [1], [0, 0, 1, 1], [], []>} : vector<256x128xbf16>, vector<128x8xbf16>, vector<256x8xf32> -> vector<256x8xf32>
    %140 = arith.addf %131, %139 : vector<256x8xf32>
    %c47 = arith.constant 47 : index
    %c0_75 = arith.constant 0 : index
    %141 = vector.load %arg12[%c47, %c0_75] : memref<320x128xbf16, #tpu.memory_space<vmem>>, vector<256x128xbf16>
    %cst_76 = arith.constant 0.000000e+00 : bf16
    %142 = vector.broadcast %cst_76 : bf16 to vector<256x128xbf16>
    %143 = vector.shape_cast %91 : vector<256x1xi1> to vector<256x1xi1>
    %144 = vector.broadcast %143 : vector<256x1xi1> to vector<256x128xi1>
    %145 = arith.select %144, %141, %142 : vector<256x128xi1>, vector<256x128xbf16>
    %c6 = arith.constant 6 : index
    %c0_77 = arith.constant 0 : index
    %c0_78 = arith.constant 0 : index
    %146 = vector.load %arg9[%c6, %c0_77, %c0_78] : memref<9x128x8xbf16, #tpu.memory_space<vmem>>, vector<1x128x8xbf16>
    %147 = vector.shape_cast %146 : vector<1x128x8xbf16> to vector<128x8xbf16>
    %cst_79 = arith.constant dense<0.000000e+00> : vector<256x8xf32>
    %148 = tpu.matmul %145, %147, %cst_79 {dimension_numbers = #tpu.dot_dimension_numbers<[1], [0], [0], [1], [0, 0, 1, 1], [], []>} : vector<256x128xbf16>, vector<128x8xbf16>, vector<256x8xf32> -> vector<256x8xf32>
    %149 = arith.addf %140, %148 : vector<256x8xf32>
    %c48 = arith.constant 48 : index
    %c0_80 = arith.constant 0 : index
    %150 = vector.load %arg12[%c48, %c0_80] : memref<320x128xbf16, #tpu.memory_space<vmem>>, vector<256x128xbf16>
    %c7 = arith.constant 7 : index
    %c0_81 = arith.constant 0 : index
    %c0_82 = arith.constant 0 : index
    %151 = vector.load %arg9[%c7, %c0_81, %c0_82] : memref<9x128x8xbf16, #tpu.memory_space<vmem>>, vector<1x128x8xbf16>
    %152 = vector.shape_cast %151 : vector<1x128x8xbf16> to vector<128x8xbf16>
    %cst_83 = arith.constant dense<0.000000e+00> : vector<256x8xf32>
    %153 = tpu.matmul %150, %152, %cst_83 {dimension_numbers = #tpu.dot_dimension_numbers<[1], [0], [0], [1], [0, 0, 1, 1], [], []>} : vector<256x128xbf16>, vector<128x8xbf16>, vector<256x8xf32> -> vector<256x8xf32>
    %154 = arith.addf %149, %153 : vector<256x8xf32>
    %c49 = arith.constant 49 : index
    %c0_84 = arith.constant 0 : index
    %155 = vector.load %arg12[%c49, %c0_84] : memref<320x128xbf16, #tpu.memory_space<vmem>>, vector<256x128xbf16>
    %cst_85 = arith.constant 0.000000e+00 : bf16
    %156 = vector.broadcast %cst_85 : bf16 to vector<256x128xbf16>
    %157 = vector.shape_cast %93 : vector<256x1xi1> to vector<256x1xi1>
    %158 = vector.broadcast %157 : vector<256x1xi1> to vector<256x128xi1>
    %159 = arith.select %158, %155, %156 : vector<256x128xi1>, vector<256x128xbf16>
    %c8 = arith.constant 8 : index
    %c0_86 = arith.constant 0 : index
    %c0_87 = arith.constant 0 : index
    %160 = vector.load %arg9[%c8, %c0_86, %c0_87] : memref<9x128x8xbf16, #tpu.memory_space<vmem>>, vector<1x128x8xbf16>
    %161 = vector.shape_cast %160 : vector<1x128x8xbf16> to vector<128x8xbf16>
    %cst_88 = arith.constant dense<0.000000e+00> : vector<256x8xf32>
    %162 = tpu.matmul %159, %161, %cst_88 {dimension_numbers = #tpu.dot_dimension_numbers<[1], [0], [0], [1], [0, 0, 1, 1], [], []>} : vector<256x128xbf16>, vector<128x8xbf16>, vector<256x8xf32> -> vector<256x8xf32>
    %163 = arith.addf %154, %162 : vector<256x8xf32>
    %c0_89 = arith.constant 0 : index
    %c0_90 = arith.constant 0 : index
    %164 = vector.load %arg10[%c0_89, %c0_90] : memref<1x8xf32, #tpu.memory_space<vmem>>, vector<1x8xf32>
    %165 = vector.broadcast %164 : vector<1x8xf32> to vector<256x8xf32>
    %166 = arith.addf %163, %165 : vector<256x8xf32>
    %167 = math.tanh %166 : vector<256x8xf32>
    %168 = arith.truncf %167 : vector<256x8xf32> to vector<256x8xbf16>
    %c0_91 = arith.constant 0 : index
    %c0_92 = arith.constant 0 : index
    %c0_93 = arith.constant 0 : index
    %169 = vector.load %arg11[%c0_91, %c0_92, %c0_93] : memref<1x256x8xbf16, #tpu.memory_space<vmem>>, vector<1x256x8xbf16>
    %170 = vector.shape_cast %169 : vector<1x256x8xbf16> to vector<256x8xbf16>
    %171 = vector.shape_cast %168 : vector<256x8xbf16> to vector<1x256x8xbf16>
    tpu.vector_store %arg11[%c0_91, %c0_92, %c0_93], %171 {strides = array<i32>} : memref<1x256x8xbf16, #tpu.memory_space<vmem>>, vector<1x256x8xbf16>,
    return
  }
  func.func @transform_0(%arg0: i32) -> (i32, i32, i32) {
    %c0_i32 = arith.constant 0 : i32
    %c0_i32_0 = arith.constant 0 : i32
    %c0_i32_1 = arith.constant 0 : i32
    return %arg0, %c0_i32, %c0_i32_0 : i32, i32, i32
  }
  func.func @transform_1(%arg0: i32) -> (i32, i32, i32) {
    %c0_i32 = arith.constant 0 : i32
    %c0_i32_0 = arith.constant 0 : i32
    %c0_i32_1 = arith.constant 0 : i32
    return %arg0, %c0_i32, %c0_i32_0 : i32, i32, i32
  }
  func.func @transform_2(%arg0: i32) -> (i32, i32) {
    %c0_i32 = arith.constant 0 : i32
    %c0_i32_0 = arith.constant 0 : i32
    %c0_i32_1 = arith.constant 0 : i32
    return %c0_i32, %c0_i32_0 : i32, i32
  }
  func.func @transform_3(%arg0: i32) -> (i32, i32) {
    %c0_i32 = arith.constant 0 : i32
    %c0_i32_0 = arith.constant 0 : i32
    %c0_i32_1 = arith.constant 0 : i32
    return %c0_i32, %c0_i32_0 : i32, i32
  }
  func.func @transform_4(%arg0: i32) -> (i32, i32) {
    %c0_i32 = arith.constant 0 : i32
    %c0_i32_0 = arith.constant 0 : i32
    %c0_i32_1 = arith.constant 0 : i32
    return %c0_i32, %c0_i32_0 : i32, i32
  }
  func.func @transform_5(%arg0: i32) -> (i32, i32) {
    %c0_i32 = arith.constant 0 : i32
    %c0_i32_0 = arith.constant 0 : i32
    %c0_i32_1 = arith.constant 0 : i32
    return %c0_i32, %c0_i32_0 : i32, i32
  }
  func.func @transform_6(%arg0: i32) -> (i32, i32) {
    %c0_i32 = arith.constant 0 : i32
    %c0_i32_0 = arith.constant 0 : i32
    %c0_i32_1 = arith.constant 0 : i32
    return %c0_i32, %c0_i32_0 : i32, i32
  }
  func.func @transform_7(%arg0: i32) -> (i32, i32) {
    %c0_i32 = arith.constant 0 : i32
    %c0_i32_0 = arith.constant 0 : i32
    %c0_i32_1 = arith.constant 0 : i32
    return %c0_i32, %c0_i32_0 : i32, i32
  }
  func.func @transform_8(%arg0: i32) -> (i32, i32, i32) {
    %c0_i32 = arith.constant 0 : i32
    %c0_i32_0 = arith.constant 0 : i32
    %c0_i32_1 = arith.constant 0 : i32
    %c0_i32_2 = arith.constant 0 : i32
    return %c0_i32, %c0_i32_0, %c0_i32_1 : i32, i32, i32
  }
  func.func @transform_9(%arg0: i32) -> (i32, i32) {
    %c0_i32 = arith.constant 0 : i32
    %c0_i32_0 = arith.constant 0 : i32
    %c0_i32_1 = arith.constant 0 : i32
    return %c0_i32, %c0_i32_0 : i32, i32
  }
  func.func @transform_10(%arg0: i32) -> (i32, i32, i32) {
    %c0_i32 = arith.constant 0 : i32
    %c0_i32_0 = arith.constant 0 : i32
    %c0_i32_1 = arith.constant 0 : i32
    return %arg0, %c0_i32, %c0_i32_0 : i32, i32, i32
  }
}

</mosaic_0001>

<llo_original>
// kernel: evaluate_reference.1
$region0: #{evaluate_reference.1}
  #allocation0 [shape = 'u32[]', space=smem, size = 0x4, offset = 0x4, fixed_abs, tag = 'smem constant byte address 0x4 - core index']
  #allocation1 [shape = 'u32[144,128]{1,0:T(1,128)}', space=vmem, size = 0x12000, scoped, tag = 'internal scratch']
  #allocation2 [shape = 'bf16[320,128]{1,0:T(16,128)(2,1)}', space=vmem, size = 0x14000, scoped, tag = 'scratch operand']
  %s0 = inlined_call_operand.vmem [shape: bf16[2,256,32], index: 0, kind: input, shape index: {}]
  %s1 = inlined_call_operand.vmem [shape: bf16[2,256,32], index: 1, kind: input, shape index: {}]
  %s2 = inlined_call_operand.vmem [shape: bf16[32,128], index: 2, kind: input, shape index: {}]
  %s3 = inlined_call_operand.vmem [shape: f32[1,128], index: 3, kind: input, shape index: {}]
  %s4 = inlined_call_operand.vmem [shape: bf16[32,128], index: 4, kind: input, shape index: {}]
  %s5 = inlined_call_operand.vmem [shape: f32[1,128], index: 5, kind: input, shape index: {}]
  %s6 = inlined_call_operand.vmem [shape: bf16[128,256], index: 6, kind: input, shape index: {}]
  %s7 = inlined_call_operand.vmem [shape: f32[1,256], index: 7, kind: input, shape index: {}]
  %s8 = inlined_call_operand.vmem [shape: bf16[9,128,8], index: 8, kind: input, shape index: {}]
  %s9 = inlined_call_operand.vmem [shape: f32[1,8], index: 9, kind: input, shape index: {}]
  %s10 = inlined_call_operand.vmem [shape: bf16[2,256,8], index: 10, kind: output, shape index: {}]
  %s11 = sld [smem:[#allocation0]]
  $region73: #{evaluate_reference.1} parent=0
    _
  %s13 = ssub.s32 1, %s11
  %s14 = scalar_select 0, %s13, %s11
  loop: start=0, step=1, limit=4
  $region2: #{evaluate_reference.1} parent=0 // loop_pre_header
    _
  $region3: #{evaluate_reference.1} parent=0 // loop_header
    %s16 = sphi 0, %s20
    %p17 = scmp.ge.s32.totalorder %s16, 4
    %s26 = sphi 0, %s28
    %s29 = sphi 0, %s26
    %s30 = sphi 0, %s29
    %s46 = sphi 0, %s30
    %s52 = sphi 0, %s54
    %s55 = sphi 0, %s52
    %s56 = sphi 0, %s55
    %s72 = sphi 0, %s56
    %s76 = sphi 0, %s76
    %s78 = sphi 0, %s76
    %s79 = sphi 0, %s78
    %s93 = sphi 0, %s79
    %s97 = sphi 0, %s97
    %s99 = sphi 0, %s97
    %s100 = sphi 0, %s99
    %s114 = sphi 0, %s100
    %s118 = sphi 0, %s118
    %s120 = sphi 0, %s118
    %s121 = sphi 0, %s120
    %s135 = sphi 0, %s121
    %s139 = sphi 0, %s139
    %s141 = sphi 0, %s139
    %s142 = sphi 0, %s141
    %s156 = sphi 0, %s142
    %s160 = sphi 0, %s160
    %s162 = sphi 0, %s160
    %s163 = sphi 0, %s162
    %s177 = sphi 0, %s163
    %s181 = sphi 0, %s181
    %s183 = sphi 0, %s181
    %s184 = sphi 0, %s183
    %s198 = sphi 0, %s184
    %s202 = sphi 0, %s202
    %s204 = sphi 0, %s202
    %s205 = sphi 0, %s204
    %s219 = sphi 0, %s205
    %s223 = sphi 0, %s223
    %s225 = sphi 0, %s223
    %s226 = sphi 0, %s225
    %s240 = sphi 0, %s226
    %s246 = sphi 0, %s248
    %s249 = sphi 0, %s246
    %s250 = sphi 0, %s249
    %s266 = sphi 0, %s250
  $region4: #{evaluate_reference.1} parent=0 // loop_header_branch
    %19 = sbr.rel (%p17) target = $region8
  $region5: #{evaluate_reference.1} parent=0 // loop_body
    %s21 = ssub.s32 %s16, 1
    %s22 = ssub.s32 %s16, 2
    %s23 = sadd.s32 %s16, 1
    %s24 = ssub.s32 %s16, %s23
    %p25 = scmp.eq.s32.totalorder %s24, 0
    %s27 = sadd.s32 %s26, 1
    %s28 = scalar_select %p25, %s26, %s27
    %p31 = pneg %p25
    %p32 = scmp.eq.s32.totalorder %s16, 1
    %p33 = por %p31, %p32
    %p34 = scmp.ne.s32.totalorder %s26, %s29
    %p35 = scmp.eq.s32.totalorder %s16, 0
    %p36 = por %p34, %p35
    %p37 = scmp.ne.s32.totalorder %s26, %s29
    %p38 = scmp.eq.s32.totalorder %s21, 1
    %p39 = por %p37, %p38
    %p40 = scmp.ne.s32.totalorder %s29, %s30
    %p41 = scmp.eq.s32.totalorder %s21, 0
    %p42 = por %p40, %p41
    %p43 = scmp.ne.s32.totalorder %s29, %s30
    %p44 = scmp.eq.s32.totalorder %s22, 1
    %p45 = por %p43, %p44
    %p47 = scmp.ne.s32.totalorder %s30, %s46
    %p48 = scmp.eq.s32.totalorder %s22, 0
    %p49 = por %p47, %p48
    %s50 = ssub.s32 %s16, %s23
    %p51 = scmp.eq.s32.totalorder %s50, 0
    %s53 = sadd.s32 %s52, 1
    %s54 = scalar_select %p51, %s52, %s53
    %p57 = pneg %p51
    %p58 = scmp.eq.s32.totalorder %s16, 1
    %p59 = por %p57, %p58
    %p60 = scmp.ne.s32.totalorder %s52, %s55
    %p61 = scmp.eq.s32.totalorder %s16, 0
    %p62 = por %p60, %p61
    %p63 = scmp.ne.s32.totalorder %s52, %s55
    %p64 = scmp.eq.s32.totalorder %s21, 1
    %p65 = por %p63, %p64
    %p66 = scmp.ne.s32.totalorder %s55, %s56
    %p67 = scmp.eq.s32.totalorder %s21, 0
    %p68 = por %p66, %p67
    %p69 = scmp.ne.s32.totalorder %s55, %s56
    %p70 = scmp.eq.s32.totalorder %s22, 1
    %p71 = por %p69, %p70
    %p73 = scmp.ne.s32.totalorder %s56, %s72
    %p74 = scmp.eq.s32.totalorder %s22, 0
    %p75 = por %p73, %p74
    %s77 = sadd.s32 %s76, 1
    %p80 = scmp.eq.s32.totalorder %s16, 1
    %p81 = scmp.ne.s32.totalorder %s76, %s78
    %p82 = scmp.eq.s32.totalorder %s16, 0
    %p83 = por %p81, %p82
    %p84 = scmp.ne.s32.totalorder %s76, %s78
    %p85 = scmp.eq.s32.totalorder %s21, 1
    %p86 = por %p84, %p85
    %p87 = scmp.ne.s32.totalorder %s78, %s79
    %p88 = scmp.eq.s32.totalorder %s21, 0
    %p89 = por %p87, %p88
    %p90 = scmp.ne.s32.totalorder %s78, %s79
    %p91 = scmp.eq.s32.totalorder %s22, 1
    %p92 = por %p90, %p91
    %p94 = scmp.ne.s32.totalorder %s79, %s93
    %p95 = scmp.eq.s32.totalorder %s22, 0
    %p96 = por %p94, %p95
    %s98 = sadd.s32 %s97, 1
    %p101 = scmp.eq.s32.totalorder %s16, 1
    %p102 = scmp.ne.s32.totalorder %s97, %s99
    %p103 = scmp.eq.s32.totalorder %s16, 0
    %p104 = por %p102, %p103
    %p105 = scmp.ne.s32.totalorder %s97, %s99
    %p106 = scmp.eq.s32.totalorder %s21, 1
    %p107 = por %p105, %p106
    %p108 = scmp.ne.s32.totalorder %s99, %s100
    %p109 = scmp.eq.s32.totalorder %s21, 0
    %p110 = por %p108, %p109
    %p111 = scmp.ne.s32.totalorder %s99, %s100
    %p112 = scmp.eq.s32.totalorder %s22, 1
    %p113 = por %p111, %p112
    %p115 = scmp.ne.s32.totalorder %s100, %s114
    %p116 = scmp.eq.s32.totalorder %s22, 0
    %p117 = por %p115, %p116
    %s119 = sadd.s32 %s118, 1
    %p122 = scmp.eq.s32.totalorder %s16, 1
    %p123 = scmp.ne.s32.totalorder %s118, %s120
    %p124 = scmp.eq.s32.totalorder %s16, 0
    %p125 = por %p123, %p124
    %p126 = scmp.ne.s32.totalorder %s118, %s120
    %p127 = scmp.eq.s32.totalorder %s21, 1
    %p128 = por %p126, %p127
    %p129 = scmp.ne.s32.totalorder %s120, %s121
    %p130 = scmp.eq.s32.totalorder %s21, 0
    %p131 = por %p129, %p130
    %p132 = scmp.ne.s32.totalorder %s120, %s121
    %p133 = scmp.eq.s32.totalorder %s22, 1
    %p134 = por %p132, %p133
    %p136 = scmp.ne.s32.totalorder %s121, %s135
    %p137 = scmp.eq.s32.totalorder %s22, 0
    %p138 = por %p136, %p137
    %s140 = sadd.s32 %s139, 1
    %p143 = scmp.eq.s32.totalorder %s16, 1
    %p144 = scmp.ne.s32.totalorder %s139, %s141
    %p145 = scmp.eq.s32.totalorder %s16, 0
    %p146 = por %p144, %p145
    %p147 = scmp.ne.s32.totalorder %s139, %s141
    %p148 = scmp.eq.s32.totalorder %s21, 1
    %p149 = por %p147, %p148
    %p150 = scmp.ne.s32.totalorder %s141, %s142
    %p151 = scmp.eq.s32.totalorder %s21, 0
    %p152 = por %p150, %p151
    %p153 = scmp.ne.s32.totalorder %s141, %s142
    %p154 = scmp.eq.s32.totalorder %s22, 1
    %p155 = por %p153, %p154
    %p157 = scmp.ne.s32.totalorder %s142, %s156
    %p158 = scmp.eq.s32.totalorder %s22, 0
    %p159 = por %p157, %p158
    %s161 = sadd.s32 %s160, 1
    %p164 = scmp.eq.s32.totalorder %s16, 1
    %p165 = scmp.ne.s32.totalorder %s160, %s162
    %p166 = scmp.eq.s32.totalorder %s16, 0
    %p167 = por %p165, %p166
    %p168 = scmp.ne.s32.totalorder %s160, %s162
    %p169 = scmp.eq.s32.totalorder %s21, 1
    %p170 = por %p168, %p169
    %p171 = scmp.ne.s32.totalorder %s162, %s163
    %p172 = scmp.eq.s32.totalorder %s21, 0
    %p173 = por %p171, %p172
    %p174 = scmp.ne.s32.totalorder %s162, %s163
    %p175 = scmp.eq.s32.totalorder %s22, 1
    %p176 = por %p174, %p175
    %p178 = scmp.ne.s32.totalorder %s163, %s177
    %p179 = scmp.eq.s32.totalorder %s22, 0
    %p180 = por %p178, %p179
    %s182 = sadd.s32 %s181, 1
    %p185 = scmp.eq.s32.totalorder %s16, 1
    %p186 = scmp.ne.s32.totalorder %s181, %s183
    %p187 = scmp.eq.s32.totalorder %s16, 0
    %p188 = por %p186, %p187
    %p189 = scmp.ne.s32.totalorder %s181, %s183
    %p190 = scmp.eq.s32.totalorder %s21, 1
    %p191 = por %p189, %p190
    %p192 = scmp.ne.s32.totalorder %s183, %s184
    %p193 = scmp.eq.s32.totalorder %s21, 0
    %p194 = por %p192, %p193
    %p195 = scmp.ne.s32.totalorder %s183, %s184
    %p196 = scmp.eq.s32.totalorder %s22, 1
    %p197 = por %p195, %p196
    %p199 = scmp.ne.s32.totalorder %s184, %s198
    %p200 = scmp.eq.s32.totalorder %s22, 0
    %p201 = por %p199, %p200
    %s203 = sadd.s32 %s202, 1
    %p206 = scmp.eq.s32.totalorder %s16, 1
    %p207 = scmp.ne.s32.totalorder %s202, %s204
    %p208 = scmp.eq.s32.totalorder %s16, 0
    %p209 = por %p207, %p208
    %p210 = scmp.ne.s32.totalorder %s202, %s204
    %p211 = scmp.eq.s32.totalorder %s21, 1
    %p212 = por %p210, %p211
    %p213 = scmp.ne.s32.totalorder %s204, %s205
    %p214 = scmp.eq.s32.totalorder %s21, 0
    %p215 = por %p213, %p214
    %p216 = scmp.ne.s32.totalorder %s204, %s205
    %p217 = scmp.eq.s32.totalorder %s22, 1
    %p218 = por %p216, %p217
    %p220 = scmp.ne.s32.totalorder %s205, %s219
    %p221 = scmp.eq.s32.totalorder %s22, 0
    %p222 = por %p220, %p221
    %s224 = sadd.s32 %s223, 1
    %p227 = scmp.eq.s32.totalorder %s16, 1
    %p228 = scmp.ne.s32.totalorder %s223, %s225
    %p229 = scmp.eq.s32.totalorder %s16, 0
    %p230 = por %p228, %p229
    %p231 = scmp.ne.s32.totalorder %s223, %s225
    %p232 = scmp.eq.s32.totalorder %s21, 1
    %p233 = por %p231, %p232
    %p234 = scmp.ne.s32.totalorder %s225, %s226
    %p235 = scmp.eq.s32.totalorder %s21, 0
    %p236 = por %p234, %p235
    %p237 = scmp.ne.s32.totalorder %s225, %s226
    %p238 = scmp.eq.s32.totalorder %s22, 1
    %p239 = por %p237, %p238
    %p241 = scmp.ne.s32.totalorder %s226, %s240
    %p242 = scmp.eq.s32.totalorder %s22, 0
    %p243 = por %p241, %p242
    %s244 = ssub.s32 %s16, %s23
    %p245 = scmp.eq.s32.totalorder %s244, 0
    %s247 = sadd.s32 %s246, 1
    %s248 = scalar_select %p245, %s246, %s247
    %p251 = pneg %p245
    %p252 = scmp.eq.s32.totalorder %s16, 1
    %p253 = por %p251, %p252
    %p254 = scmp.ne.s32.totalorder %s246, %s249
    %p255 = scmp.eq.s32.totalorder %s16, 0
    %p256 = por %p254, %p255
    %p257 = scmp.ne.s32.totalorder %s246, %s249
    %p258 = scmp.eq.s32.totalorder %s21, 1
    %p259 = por %p257, %p258
    %p260 = scmp.ne.s32.totalorder %s249, %s250
    %p261 = scmp.eq.s32.totalorder %s21, 0
    %p262 = por %p260, %p261
    %p263 = scmp.ne.s32.totalorder %s249, %s250
    %p264 = scmp.eq.s32.totalorder %s22, 1
    %p265 = por %p263, %p264
    %p267 = scmp.ne.s32.totalorder %s250, %s266
    %p268 = scmp.eq.s32.totalorder %s22, 0
    %p269 = por %p267, %p268
    %p270 = scmp.le.s32.totalorder 1, %s16
    %p271 = scmp.lt.s32.totalorder %s16, 3
    %p272 = pnand %p270, %p271
    %p273 = pneg %p272
    // Predicated region
    $region9: #{evaluate_reference.1} parent=5 // pred_check
      _
    $region10: #{evaluate_reference.1} parent=5 // pred_check_branch
      %275 = sbr.rel (%p272) target = $region12
    $region11: #{evaluate_reference.1} parent=5 // pred_region
      %s276 = ssub.s32 %s16, 1
      // Predicated region
      $region13: #{evaluate_reference.1} parent=11 // pred_check
        %p277 = pneg %p89
      $region14: #{evaluate_reference.1} parent=11 // pred_check_branch
        %279 = sbr.rel (%p277) target = $region16
      $region15: #{evaluate_reference.1} parent=11 // pred_region
        _
      $region16: #{evaluate_reference.1} parent=11 // pred_fallthru
        _
      // Predicated region
      $region17: #{evaluate_reference.1} parent=11 // pred_check
        %p280 = pneg %p110
      $region18: #{evaluate_reference.1} parent=11 // pred_check_branch
        %282 = sbr.rel (%p280) target = $region20
      $region19: #{evaluate_reference.1} parent=11 // pred_region
        _
      $region20: #{evaluate_reference.1} parent=11 // pred_fallthru
        _
      // Predicated region
      $region21: #{evaluate_reference.1} parent=11 // pred_check
        %p283 = pneg %p131
      $region22: #{evaluate_reference.1} parent=11 // pred_check_branch
        %285 = sbr.rel (%p283) target = $region24
      $region23: #{evaluate_reference.1} parent=11 // pred_region
        _
      $region24: #{evaluate_reference.1} parent=11 // pred_fallthru
        _
      // Predicated region
      $region25: #{evaluate_reference.1} parent=11 // pred_check
        %p286 = pneg %p152
      $region26: #{evaluate_reference.1} parent=11 // pred_check_branch
        %288 = sbr.rel (%p286) target = $region28
      $region27: #{evaluate_reference.1} parent=11 // pred_region
        _
      $region28: #{evaluate_reference.1} parent=11 // pred_fallthru
        _
      // Predicated region
      $region29: #{evaluate_reference.1} parent=11 // pred_check
        %p289 = pneg %p173
      $region30: #{evaluate_reference.1} parent=11 // pred_check_branch
        %291 = sbr.rel (%p289) target = $region32
      $region31: #{evaluate_reference.1} parent=11 // pred_region
        _
      $region32: #{evaluate_reference.1} parent=11 // pred_fallthru
        _
      // Predicated region
      $region33: #{evaluate_reference.1} parent=11 // pred_check
        %p292 = pneg %p194
      $region34: #{evaluate_reference.1} parent=11 // pred_check_branch
        %294 = sbr.rel (%p292) target = $region36
      $region35: #{evaluate_reference.1} parent=11 // pred_region
        _
      $region36: #{evaluate_reference.1} parent=11 // pred_fallthru
        _
      // Predicated region
      $region37: #{evaluate_reference.1} parent=11 // pred_check
        %p295 = pneg %p215
      $region38: #{evaluate_reference.1} parent=11 // pred_check_branch
        %297 = sbr.rel (%p295) target = $region40
      $region39: #{evaluate_reference.1} parent=11 // pred_region
        _
      $region40: #{evaluate_reference.1} parent=11 // pred_fallthru
        _
      // Predicated region
      $region41: #{evaluate_reference.1} parent=11 // pred_check
        %p298 = pneg %p236
      $region42: #{evaluate_reference.1} parent=11 // pred_check_branch
        %300 = sbr.rel (%p298) target = $region44
      $region43: #{evaluate_reference.1} parent=11 // pred_region
        _
      $region44: #{evaluate_reference.1} parent=11 // pred_fallthru
        _
    $region12: #{evaluate_reference.1} parent=5 // pred_fallthru
      _
    %p301 = scmp.lt.s32.totalorder %s16, 2
    // Predicated region
    $region45: #{evaluate_reference.1} parent=5 // pred_check
      %p302 = pneg %p301
    $region46: #{evaluate_reference.1} parent=5 // pred_check_branch
      %304 = sbr.rel (%p302) target = $region48
    $region47: #{evaluate_reference.1} parent=5 // pred_region
      // Predicated region
      $region49: #{evaluate_reference.1} parent=47 // pred_check
        %p305 = pneg %p36
      $region50: #{evaluate_reference.1} parent=47 // pred_check_branch
        %307 = sbr.rel (%p305) target = $region52
      $region51: #{evaluate_reference.1} parent=47 // pred_region
        %p308 = scmp.lt.s32.totalorder %s16, 1
        %s309 = scalar_select %p308, %s16, 1
        %s310 = smul.addr %s309, 32
        %s311 = smul.addr %s310, 4
        %s312 = scalar_lea.vmem %s0, %s311
      $region52: #{evaluate_reference.1} parent=47 // pred_fallthru
        _
      // Predicated region
      $region53: #{evaluate_reference.1} parent=47 // pred_check
        %p313 = pneg %p62
      $region54: #{evaluate_reference.1} parent=47 // pred_check_branch
        %315 = sbr.rel (%p313) target = $region56
      $region55: #{evaluate_reference.1} parent=47 // pred_region
        %p316 = scmp.lt.s32.totalorder %s16, 1
        %s317 = scalar_select %p316, %s16, 1
        %s318 = smul.addr %s317, 32
        %s319 = smul.addr %s318, 4
        %s320 = scalar_lea.vmem %s1, %s319
      $region56: #{evaluate_reference.1} parent=47 // pred_fallthru
        _
    $region48: #{evaluate_reference.1} parent=5 // pred_fallthru
      _
    %p321 = scmp.le.s32.totalorder 1, %s16
    %p322 = scmp.lt.s32.totalorder %s16, 3
    %p323 = pnand %p321, %p322
    %p324 = pneg %p323
    // Predicated region
    $region57: #{evaluate_reference.1} parent=5 // pred_check
      _
    $region58: #{evaluate_reference.1} parent=5 // pred_check_branch
      %326 = sbr.rel (%p323) target = $region60
    $region59: #{evaluate_reference.1} parent=5 // pred_region
      %s327 = ssub.s32 %s16, 1
      %p328 = scmp.lt.s32.totalorder %s21, 1
      %s329 = scalar_select %p328, %s21, 1
      %s330 = smul.addr %s329, 32
      %s331 = smul.addr %s330, 4
      %s332 = scalar_lea.vmem %s0, %s331
      %p333 = pneg %p42
      %p334 = pneg %p39
      %p335 = scmp.lt.s32.totalorder %s21, 1
      %s336 = scalar_select %p335, %s21, 1
      %s337 = smul.addr %s336, 32
      %s338 = smul.addr %s337, 4
      %s339 = scalar_lea.vmem %s1, %s338
      %p340 = pneg %p68
      %p341 = pneg %p65
      %p342 = pneg %p89
      %p343 = pneg %p86
      %p344 = pneg %p110
      %p345 = pneg %p107
      %p346 = pneg %p131
      %p347 = pneg %p128
      %p348 = pneg %p152
      %p349 = pneg %p149
      %p350 = pneg %p173
      %p351 = pneg %p170
      %p352 = pneg %p194
      %p353 = pneg %p191
      %p354 = pneg %p215
      %p355 = pneg %p212
      %p356 = pneg %p236
      %p357 = pneg %p233
      %p358 = pneg %p262
      %p359 = pneg %p259
      %p360 = scmp.lt.s32.totalorder %s21, 1
      %s361 = scalar_select %p360, %s21, 1
      %s362 = smul.addr %s361, 32
      %s363 = smul.addr %s362, 4
      %s364 = scalar_lea.vmem %s10, %s363
      %p365 = scmp.lt.s32.totalorder %s21, 1
      %s366 = scalar_select %p365, %s21, 1
      %s367 = smul.addr %s366, 32
      %s368 = smul.addr %s367, 4
      %s369 = scalar_lea.vmem %s0, %s368
      %p370 = scmp.lt.s32.totalorder %s21, 1
      %s371 = scalar_select %p370, %s21, 1
      %s372 = smul.addr %s371, 32
      %s373 = smul.addr %s372, 4
      %s374 = scalar_lea.vmem %s1, %s373
      %p375 = scmp.lt.s32.totalorder %s21, 1
      %s376 = scalar_select %p375, %s21, 1
      %s377 = smul.addr %s376, 32
      %s378 = smul.addr %s377, 4
      %s379 = scalar_lea.vmem %s10, %s378
      %v383 = vld [vmem:[%s374] sm:$0xf]
      %v384 = vld [vmem:[%s374 + $0x4] sm:$0xf]
      %v385 = vld [vmem:[%s374 + $0x8] sm:$0xf]
      %v386 = vld [vmem:[%s374 + $0xc] sm:$0xf]
      %v387 = vld [vmem:[%s374 + $0x10] sm:$0xf]
      %v388 = vld [vmem:[%s374 + $0x14] sm:$0xf]
      %v389 = vld [vmem:[%s374 + $0x18] sm:$0xf]
      %v390 = vld [vmem:[%s374 + $0x1c] sm:$0xf]
      %v391 = vld [vmem:[%s374 + $0x20] sm:$0xf]
      %v392 = vld [vmem:[%s374 + $0x24] sm:$0xf]
      %v393 = vld [vmem:[%s374 + $0x28] sm:$0xf]
      %v394 = vld [vmem:[%s374 + $0x2c] sm:$0xf]
      %v395 = vld [vmem:[%s374 + $0x30] sm:$0xf]
      %v396 = vld [vmem:[%s374 + $0x34] sm:$0xf]
      %v397 = vld [vmem:[%s374 + $0x38] sm:$0xf]
      %v398 = vld [vmem:[%s374 + $0x3c] sm:$0xf]
      %v399 = vld [vmem:[%s374 + $0x40] sm:$0xf]
      %v400 = vld [vmem:[%s374 + $0x44] sm:$0xf]
      %v401 = vld [vmem:[%s374 + $0x48] sm:$0xf]
      %v402 = vld [vmem:[%s374 + $0x4c] sm:$0xf]
      %v403 = vld [vmem:[%s374 + $0x50] sm:$0xf]
      %v404 = vld [vmem:[%s374 + $0x54] sm:$0xf]
      %v405 = vld [vmem:[%s374 + $0x58] sm:$0xf]
      %v406 = vld [vmem:[%s374 + $0x5c] sm:$0xf]
      %v407 = vld [vmem:[%s374 + $0x60] sm:$0xf]
      %v408 = vld [vmem:[%s374 + $0x64] sm:$0xf]
      %v409 = vld [vmem:[%s374 + $0x68] sm:$0xf]
      %v410 = vld [vmem:[%s374 + $0x6c] sm:$0xf]
      %v411 = vld [vmem:[%s374 + $0x70] sm:$0xf]
      %v412 = vld [vmem:[%s374 + $0x74] sm:$0xf]
      %v413 = vld [vmem:[%s374 + $0x78] sm:$0xf]
      %v414 = vld [vmem:[%s374 + $0x7c] sm:$0xf]
      %v415 = vld [vmem:[%s4] sm:$0xf]
      %v416 = vld [vmem:[%s4 + $0x4] sm:$0xf]
      %v417 = vld [vmem:[%s4 + $0x8] sm:$0xf]
      %v418 = vld [vmem:[%s4 + $0xc] sm:$0xf]
      %v419 = vld [vmem:[%s5] sm:$0x1]
      %v421 = vlaneseq
      %v422 = vshrl.u32 %v421, 7
      %v423 = vsub.s32 0, %v422
      %v424 = vrot.slane %v419, %v423
      %v458 = vunpack.c.l.b16 %v383
      %v459 = vunpack.c.l.b16 %v384
      %v460 = vunpack.c.l.b16 %v385
      %v461 = vunpack.c.l.b16 %v386
      %v462 = vunpack.c.l.b16 %v387
      %v463 = vunpack.c.l.b16 %v388
      %v464 = vunpack.c.l.b16 %v389
      %v465 = vunpack.c.l.b16 %v390
      %v466 = vunpack.c.l.b16 %v391
      %v467 = vunpack.c.l.b16 %v392
      %v468 = vunpack.c.l.b16 %v393
      %v469 = vunpack.c.l.b16 %v394
      %v470 = vunpack.c.l.b16 %v395
      %v471 = vunpack.c.l.b16 %v396
      %v472 = vunpack.c.l.b16 %v397
      %v473 = vunpack.c.l.b16 %v398
      %v474 = vunpack.c.l.b16 %v399
      %v475 = vunpack.c.l.b16 %v400
      %v476 = vunpack.c.l.b16 %v401
      %v477 = vunpack.c.l.b16 %v402
      %v478 = vunpack.c.l.b16 %v403
      %v479 = vunpack.c.l.b16 %v404
      %v480 = vunpack.c.l.b16 %v405
      %v481 = vunpack.c.l.b16 %v406
      %v482 = vunpack.c.l.b16 %v407
      %v483 = vunpack.c.l.b16 %v408
      %v484 = vunpack.c.l.b16 %v409
      %v485 = vunpack.c.l.b16 %v410
      %v486 = vunpack.c.l.b16 %v411
      %v487 = vunpack.c.l.b16 %v412
      %v488 = vunpack.c.l.b16 %v413
      %v489 = vunpack.c.l.b16 %v414
      %v490 = vpack.c.b16 %v459, %v458
      %v491 = vpack.c.b16 %v461, %v460
      %v492 = vpack.c.b16 %v463, %v462
      %v493 = vpack.c.b16 %v465, %v464
      %v494 = vpack.c.b16 %v467, %v466
      %v495 = vpack.c.b16 %v469, %v468
      %v496 = vpack.c.b16 %v471, %v470
      %v497 = vpack.c.b16 %v473, %v472
      %v498 = vpack.c.b16 %v475, %v474
      %v499 = vpack.c.b16 %v477, %v476
      %v500 = vpack.c.b16 %v479, %v478
      %v501 = vpack.c.b16 %v481, %v480
      %v502 = vpack.c.b16 %v483, %v482
      %v503 = vpack.c.b16 %v485, %v484
      %v504 = vpack.c.b16 %v487, %v486
      %v505 = vpack.c.b16 %v489, %v488
      %v510 = vunpack.c.l.b16 %v415
      %v511 = vunpack.c.l.b16 %v416
      %v512 = vunpack.c.l.b16 %v417
      %v513 = vunpack.c.l.b16 %v418
      %v514 = vpack.c.b16 %v511, %v510
      %v515 = vpack.c.b16 %v513, %v512
      %vm518 = vcmask 261120
      %v520 = vsel %vm518, %v490, 0
      %v523 = vsel %vm518, %v491, 0
      %v526 = vsel %vm518, %v492, 0
      %v529 = vsel %vm518, %v493, 0
      %v532 = vsel %vm518, %v494, 0
      %v535 = vsel %vm518, %v495, 0
      %v538 = vsel %vm518, %v496, 0
      %v541 = vsel %vm518, %v497, 0
      %v544 = vsel %vm518, %v498, 0
      %v547 = vsel %vm518, %v499, 0
      %v550 = vsel %vm518, %v500, 0
      %v553 = vsel %vm518, %v501, 0
      %v556 = vsel %vm518, %v502, 0
      %v559 = vsel %vm518, %v503, 0
      %v562 = vsel %vm518, %v504, 0
      %v565 = vsel %vm518, %v505, 0
      %567 = vmatprep.subr.bf16.mxu0 0
      %568 = vmatpush1.bf16.msra.mxu0 %v514
      %569 = vmatprep.subr.bf16.mxu0 0
      %570 = vmatpush1.bf16.msra.mxu0 %v515
      %571 = vmatprep.subr.bf16.mxu0 0
      %572 = vmatpush1.bf16.msra.mxu0 0
      %573 = vmatprep.subr.bf16.mxu0 0
      %574 = vmatpush1.bf16.msra.mxu0 0
      %575 = vmatprep.subr.bf16.mxu0 0
      %576 = vmatpush1.bf16.msra.mxu0 0
      %577 = vmatprep.subr.bf16.mxu0 0
      %578 = vmatpush1.bf16.msra.mxu0 0
      %579 = vmatprep.subr.bf16.mxu0 0
      %580 = vmatpush1.bf16.msra.mxu0 0
      %581 = vmatprep.subr.bf16.mxu0 0
      %582 = vmatpush1.bf16.msra.mxu0 0
      %583 = vmatprep.subr.bf16.mxu0 0
      %584 = vmatpush1.bf16.msra.mxu0 0
      %585 = vmatprep.subr.bf16.mxu0 0
      %586 = vmatpush1.bf16.msra.mxu0 0
      %587 = vmatprep.subr.bf16.mxu0 0
      %588 = vmatpush1.bf16.msra.mxu0 0
      %589 = vmatprep.subr.bf16.mxu0 0
      %590 = vmatpush1.bf16.msra.mxu0 0
      %591 = vmatprep.subr.bf16.mxu0 0
      %592 = vmatpush1.bf16.msra.mxu0 0
      %593 = vmatprep.subr.bf16.mxu0 0
      %594 = vmatpush1.bf16.msra.mxu0 0
      %595 = vmatprep.subr.bf16.mxu0 0
      %596 = vmatpush1.bf16.msra.mxu0 0
      %597 = vmatprep.subr.bf16.mxu0 0
      %598 = vmatpush1.bf16.msra.mxu0 0
      %599 = vmatprep.mubr.bf16.mxu0 0
      %600 = vmatmul.mubr.bf16.gmra.mrb[0].mxu0 %v520
      %v601 = vpop.f32.mrb[0].mxu0
      %v602 = vadd.f32 %v424, %v601
      %v603 = vpop.f32.mrb[0].mxu0
      %v604 = vpop.f32.mrb[0].mxu0
      %v605 = vadd.f32 %v424, %v604
      %v606 = vpop.f32.mrb[0].mxu0
      %607 = vmatprep.mubr.bf16.mxu0 0
      %608 = vmatmul.mubr.bf16.gmra.mrb[0].mxu0 %v523
      %v609 = vpop.f32.mrb[0].mxu0
      %v610 = vadd.f32 %v424, %v609
      %v611 = vpop.f32.mrb[0].mxu0
      %v612 = vpop.f32.mrb[0].mxu0
      %v613 = vadd.f32 %v424, %v612
      %v614 = vpop.f32.mrb[0].mxu0
      %615 = vmatprep.mubr.bf16.mxu0 0
      %616 = vmatmul.mubr.bf16.gmra.mrb[0].mxu0 %v526
      %v617 = vpop.f32.mrb[0].mxu0
      %v618 = vadd.f32 %v424, %v617
      %v619 = vpop.f32.mrb[0].mxu0
      %v620 = vpop.f32.mrb[0].mxu0
      %v621 = vadd.f32 %v424, %v620
      %v622 = vpop.f32.mrb[0].mxu0
      %623 = vmatprep.mubr.bf16.mxu0 0
      %624 = vmatmul.mubr.bf16.gmra.mrb[0].mxu0 %v529
      %v625 = vpop.f32.mrb[0].mxu0
      %v626 = vadd.f32 %v424, %v625
      %v627 = vpop.f32.mrb[0].mxu0
      %v628 = vpop.f32.mrb[0].mxu0
      %v629 = vadd.f32 %v424, %v628
      %v630 = vpop.f32.mrb[0].mxu0
      %631 = vmatprep.mubr.bf16.mxu0 0
      %632 = vmatmul.mubr.bf16.gmra.mrb[0].mxu0 %v532
      %v633 = vpop.f32.mrb[0].mxu0
      %v634 = vadd.f32 %v424, %v633
      %v635 = vpop.f32.mrb[0].mxu0
      %v636 = vpop.f32.mrb[0].mxu0
      %v637 = vadd.f32 %v424, %v636
      %v638 = vpop.f32.mrb[0].mxu0
      %639 = vmatprep.mubr.bf16.mxu0 0
      %640 = vmatmul.mubr.bf16.gmra.mrb[0].mxu0 %v535
      %v641 = vpop.f32.mrb[0].mxu0
      %v642 = vadd.f32 %v424, %v641
      %v643 = vpop.f32.mrb[0].mxu0
      %v644 = vpop.f32.mrb[0].mxu0
      %v645 = vadd.f32 %v424, %v644
      %v646 = vpop.f32.mrb[0].mxu0
      %647 = vmatprep.mubr.bf16.mxu0 0
      %648 = vmatmul.mubr.bf16.gmra.mrb[0].mxu0 %v538
      %v649 = vpop.f32.mrb[0].mxu0
      %v650 = vadd.f32 %v424, %v649
      %v651 = vpop.f32.mrb[0].mxu0
      %v652 = vpop.f32.mrb[0].mxu0
      %v653 = vadd.f32 %v424, %v652
      %v654 = vpop.f32.mrb[0].mxu0
      %655 = vmatprep.mubr.bf16.mxu0 0
      %656 = vmatmul.mubr.bf16.gmra.mrb[0].mxu0 %v541
      %v657 = vpop.f32.mrb[0].mxu0
      %v658 = vadd.f32 %v424, %v657
      %v659 = vpop.f32.mrb[0].mxu0
      %v660 = vpop.f32.mrb[0].mxu0
      %v661 = vadd.f32 %v424, %v660
      %v662 = vpop.f32.mrb[0].mxu0
      %663 = vmatprep.mubr.bf16.mxu0 0
      %664 = vmatmul.mubr.bf16.gmra.mrb[0].mxu0 %v544
      %v665 = vpop.f32.mrb[0].mxu0
      %v666 = vadd.f32 %v424, %v665
      %v667 = vpop.f32.mrb[0].mxu0
      %v668 = vpop.f32.mrb[0].mxu0
      %v669 = vadd.f32 %v424, %v668
      %v670 = vpop.f32.mrb[0].mxu0
      %671 = vmatprep.mubr.bf16.mxu0 0
      %672 = vmatmul.mubr.bf16.gmra.mrb[0].mxu0 %v547
      %v673 = vpop.f32.mrb[0].mxu0
      %v674 = vadd.f32 %v424, %v673
      %v675 = vpop.f32.mrb[0].mxu0
      %v676 = vpop.f32.mrb[0].mxu0
      %v677 = vadd.f32 %v424, %v676
      %v678 = vpop.f32.mrb[0].mxu0
      %679 = vmatprep.mubr.bf16.mxu0 0
      %680 = vmatmul.mubr.bf16.gmra.mrb[0].mxu0 %v550
      %v681 = vpop.f32.mrb[0].mxu0
      %v682 = vadd.f32 %v424, %v681
      %v683 = vpop.f32.mrb[0].mxu0
      %v684 = vpop.f32.mrb[0].mxu0
      %v685 = vadd.f32 %v424, %v684
      %v686 = vpop.f32.mrb[0].mxu0
      %687 = vmatprep.mubr.bf16.mxu0 0
      %688 = vmatmul.mubr.bf16.gmra.mrb[0].mxu0 %v553
      %v689 = vpop.f32.mrb[0].mxu0
      %v690 = vadd.f32 %v424, %v689
      %v691 = vpop.f32.mrb[0].mxu0
      %v692 = vpop.f32.mrb[0].mxu0
      %v693 = vadd.f32 %v424, %v692
      %v694 = vpop.f32.mrb[0].mxu0
      %695 = vmatprep.mubr.bf16.mxu0 0
      %696 = vmatmul.mubr.bf16.gmra.mrb[0].mxu0 %v556
      %v697 = vpop.f32.mrb[0].mxu0
      %v698 = vadd.f32 %v424, %v697
      %v699 = vpop.f32.mrb[0].mxu0
      %v700 = vpop.f32.mrb[0].mxu0
      %v701 = vadd.f32 %v424, %v700
      %v702 = vpop.f32.mrb[0].mxu0
      %703 = vmatprep.mubr.bf16.mxu0 0
      %704 = vmatmul.mubr.bf16.gmra.mrb[0].mxu0 %v559
      %v705 = vpop.f32.mrb[0].mxu0
      %v706 = vadd.f32 %v424, %v705
      %v707 = vpop.f32.mrb[0].mxu0
      %v708 = vpop.f32.mrb[0].mxu0
      %v709 = vadd.f32 %v424, %v708
      %v710 = vpop.f32.mrb[0].mxu0
      %711 = vmatprep.mubr.bf16.mxu0 0
      %712 = vmatmul.mubr.bf16.gmra.mrb[0].mxu0 %v562
      %v713 = vpop.f32.mrb[0].mxu0
      %v714 = vadd.f32 %v424, %v713
      %v715 = vpop.f32.mrb[0].mxu0
      %v716 = vpop.f32.mrb[0].mxu0
      %v717 = vadd.f32 %v424, %v716
      %v718 = vpop.f32.mrb[0].mxu0
      %719 = vmatprep.mubr.bf16.mxu0 0
      %720 = vmatmul.mubr.bf16.gmra.mrb[0].mxu0 %v565
      %v721 = vpop.f32.mrb[0].mxu0
      %v722 = vadd.f32 %v424, %v721
      %v723 = vpop.f32.mrb[0].mxu0
      %v724 = vpop.f32.mrb[0].mxu0
      %v725 = vadd.f32 %v424, %v724
      %v726 = vpop.f32.mrb[0].mxu0
      %727 = vdwg.mxu0
      %v728 = vmax.f32 %v602, 0.0
      %v729 = vmax.f32 %v605, 0.0
      %v730 = vmax.f32 %v610, 0.0
      %v731 = vmax.f32 %v613, 0.0
      %v732 = vmax.f32 %v618, 0.0
      %v733 = vmax.f32 %v621, 0.0
      %v734 = vmax.f32 %v626, 0.0
      %v735 = vmax.f32 %v629, 0.0
      %v736 = vmax.f32 %v634, 0.0
      %v737 = vmax.f32 %v637, 0.0
      %v738 = vmax.f32 %v642, 0.0
      %v739 = vmax.f32 %v645, 0.0
      %v740 = vmax.f32 %v650, 0.0
      %v741 = vmax.f32 %v653, 0.0
      %v742 = vmax.f32 %v658, 0.0
      %v743 = vmax.f32 %v661, 0.0
      %v744 = vmax.f32 %v666, 0.0
      %v745 = vmax.f32 %v669, 0.0
      %v746 = vmax.f32 %v674, 0.0
      %v747 = vmax.f32 %v677, 0.0
      %v748 = vmax.f32 %v682, 0.0
      %v749 = vmax.f32 %v685, 0.0
      %v750 = vmax.f32 %v690, 0.0
      %v751 = vmax.f32 %v693, 0.0
      %v752 = vmax.f32 %v698, 0.0
      %v753 = vmax.f32 %v701, 0.0
      %v754 = vmax.f32 %v706, 0.0
      %v755 = vmax.f32 %v709, 0.0
      %v756 = vmax.f32 %v714, 0.0
      %v757 = vmax.f32 %v717, 0.0
      %v758 = vmax.f32 %v722, 0.0
      %v759 = vmax.f32 %v725, 0.0
      %v760 = vadd.f32 %v728, %v729
      %v761 = vadd.f32 %v760, %v730
      %v762 = vadd.f32 %v761, %v731
      %v763 = vadd.f32 %v762, %v732
      %v764 = vadd.f32 %v763, %v733
      %v765 = vadd.f32 %v764, %v734
      %v766 = vadd.f32 %v765, %v735
      %v767 = vadd.f32 %v766, %v736
      %v768 = vadd.f32 %v767, %v737
      %v769 = vadd.f32 %v768, %v738
      %v770 = vadd.f32 %v769, %v739
      %v771 = vadd.f32 %v770, %v740
      %v772 = vadd.f32 %v771, %v741
      %v773 = vadd.f32 %v772, %v742
      %v774 = vadd.f32 %v773, %v743
      %v775 = vadd.f32 %v774, %v744
      %v776 = vadd.f32 %v775, %v745
      %v777 = vadd.f32 %v776, %v746
      %v778 = vadd.f32 %v777, %v747
      %v779 = vadd.f32 %v778, %v748
      %v780 = vadd.f32 %v779, %v749
      %v781 = vadd.f32 %v780, %v750
      %v782 = vadd.f32 %v781, %v751
      %v783 = vadd.f32 %v782, %v752
      %v784 = vadd.f32 %v783, %v753
      %v785 = vadd.f32 %v784, %v754
      %v786 = vadd.f32 %v785, %v755
      %v787 = vadd.f32 %v786, %v756
      %v788 = vadd.f32 %v787, %v757
      %v789 = vadd.f32 %v788, %v758
      %v790 = vadd.f32 %v789, %v759
      %v791 = vrot.slane %v790, 4
      %v792 = vadd.f32 %v790, %v791
      %v793 = vrot.slane %v792, 2
      %v794 = vadd.f32 %v792, %v793
      %v795 = vrot.slane %v794, 1
      %v796 = vadd.f32 %v794, %v795
      %v797 = vrcp.pop 256.0
      %v798 = vmul.f32 %v796, %v797
      %v799 = vpack.c.bf16 %v798, %v798
      %v800 = vld [vmem:[%s6] sm:$0xff]
      %v801 = vld [vmem:[%s6 + $0x8] sm:$0xff]
      %v802 = vld [vmem:[%s6 + $0x10] sm:$0xff]
      %v803 = vld [vmem:[%s6 + $0x18] sm:$0xff]
      %v804 = vld [vmem:[%s6 + $0x20] sm:$0xff]
      %v805 = vld [vmem:[%s6 + $0x28] sm:$0xff]
      %v806 = vld [vmem:[%s6 + $0x30] sm:$0xff]
      %v807 = vld [vmem:[%s6 + $0x38] sm:$0xff]
      %v808 = vld [vmem:[%s6 + $0x40] sm:$0xff]
      %v809 = vld [vmem:[%s6 + $0x48] sm:$0xff]
      %v810 = vld [vmem:[%s6 + $0x50] sm:$0xff]
      %v811 = vld [vmem:[%s6 + $0x58] sm:$0xff]
      %v812 = vld [vmem:[%s6 + $0x60] sm:$0xff]
      %v813 = vld [vmem:[%s6 + $0x68] sm:$0xff]
      %v814 = vld [vmem:[%s6 + $0x70] sm:$0xff]
      %v815 = vld [vmem:[%s6 + $0x78] sm:$0xff]
      %v816 = vld [vmem:[%s7] sm:$0x3]
      %v833 = vunpack.c.l.b16 %v800
      %v834 = vunpack.c.h.b16 %v800
      %v835 = vunpack.c.l.b16 %v801
      %v836 = vunpack.c.h.b16 %v801
      %v837 = vunpack.c.l.b16 %v802
      %v838 = vunpack.c.h.b16 %v802
      %v839 = vunpack.c.l.b16 %v803
      %v840 = vunpack.c.h.b16 %v803
      %v841 = vunpack.c.l.b16 %v804
      %v842 = vunpack.c.h.b16 %v804
      %v843 = vunpack.c.l.b16 %v805
      %v844 = vunpack.c.h.b16 %v805
      %v845 = vunpack.c.l.b16 %v806
      %v846 = vunpack.c.h.b16 %v806
      %v847 = vunpack.c.l.b16 %v807
      %v848 = vunpack.c.h.b16 %v807
      %v849 = vunpack.c.l.b16 %v808
      %v850 = vunpack.c.h.b16 %v808
      %v851 = vunpack.c.l.b16 %v809
      %v852 = vunpack.c.h.b16 %v809
      %v853 = vunpack.c.l.b16 %v810
      %v854 = vunpack.c.h.b16 %v810
      %v855 = vunpack.c.l.b16 %v811
      %v856 = vunpack.c.h.b16 %v811
      %v857 = vunpack.c.l.b16 %v812
      %v858 = vunpack.c.h.b16 %v812
      %v859 = vunpack.c.l.b16 %v813
      %v860 = vunpack.c.h.b16 %v813
      %v861 = vunpack.c.l.b16 %v814
      %v862 = vunpack.c.h.b16 %v814
      %v863 = vunpack.c.l.b16 %v815
      %v864 = vunpack.c.h.b16 %v815
      %v865 = vpack.c.b16 %v835, %v833
      %v866 = vpack.c.b16 %v836, %v834
      %v867 = vpack.c.b16 %v839, %v837
      %v868 = vpack.c.b16 %v840, %v838
      %v869 = vpack.c.b16 %v843, %v841
      %v870 = vpack.c.b16 %v844, %v842
      %v871 = vpack.c.b16 %v847, %v845
      %v872 = vpack.c.b16 %v848, %v846
      %v873 = vpack.c.b16 %v851, %v849
      %v874 = vpack.c.b16 %v852, %v850
      %v875 = vpack.c.b16 %v855, %v853
      %v876 = vpack.c.b16 %v856, %v854
      %v877 = vpack.c.b16 %v859, %v857
      %v878 = vpack.c.b16 %v860, %v858
      %v879 = vpack.c.b16 %v863, %v861
      %v880 = vpack.c.b16 %v864, %v862
      %v898 = vlaneseq
      %v899 = vshrl.u32 %v898, 7
      %v900 = vsub.s32 0, %v899
      %v901 = vrot.slane %v816, %v900
      %v902 = vlaneseq
      %v903 = vshrl.u32 %v902, 7
      %v904 = vsub.s32 1, %v903
      %v905 = vrot.slane %v816, %v904
      %908 = vmatprep.subr.bf16.mxu0 %v866
      %909 = vmatpush1.bf16.msra.mxu0 %v865
      %910 = vmatprep.subr.bf16.mxu0 %v868
      %911 = vmatpush1.bf16.msra.mxu0 %v867
      %912 = vmatprep.subr.bf16.mxu0 %v870
      %913 = vmatpush1.bf16.msra.mxu0 %v869
      %914 = vmatprep.subr.bf16.mxu0 %v872
      %915 = vmatpush1.bf16.msra.mxu0 %v871
      %916 = vmatprep.subr.bf16.mxu0 %v874
      %917 = vmatpush1.bf16.msra.mxu0 %v873
      %918 = vmatprep.subr.bf16.mxu0 %v876
      %919 = vmatpush1.bf16.msra.mxu0 %v875
      %920 = vmatprep.subr.bf16.mxu0 %v878
      %921 = vmatpush1.bf16.msra.mxu0 %v877
      %922 = vmatprep.subr.bf16.mxu0 %v880
      %923 = vmatpush1.bf16.msra.mxu0 %v879
      %924 = vmatprep.subr.bf16.mxu0 0
      %925 = vmatpush1.bf16.msra.mxu0 0
      %926 = vmatprep.subr.bf16.mxu0 0
      %927 = vmatpush1.bf16.msra.mxu0 0
      %928 = vmatprep.subr.bf16.mxu0 0
      %929 = vmatpush1.bf16.msra.mxu0 0
      %930 = vmatprep.subr.bf16.mxu0 0
      %931 = vmatpush1.bf16.msra.mxu0 0
      %932 = vmatprep.subr.bf16.mxu0 0
      %933 = vmatpush1.bf16.msra.mxu0 0
      %934 = vmatprep.subr.bf16.mxu0 0
      %935 = vmatpush1.bf16.msra.mxu0 0
      %936 = vmatprep.subr.bf16.mxu0 0
      %937 = vmatpush1.bf16.msra.mxu0 0
      %938 = vmatprep.subr.bf16.mxu0 0
      %939 = vmatpush1.bf16.msra.mxu0 0
      %940 = vmatprep.mubr.bf16.mxu0 0
      %941 = vmatmul.mubr.bf16.gmra.mrb[0].mxu0 %v799
      %v942 = vpop.f32.mrb[0].mxu0
      %v943 = vadd.f32 %v901, %v942
      %v944 = vpop.f32.mrb[0].mxu0
      %v945 = vadd.f32 %v905, %v944
      %v946 = vpop.f32.mrb[0].mxu0
      %v947 = vpop.f32.mrb[0].mxu0
      %948 = vdwg.mxu0
      %v949 = vld [vmem:[%s369] sm:$0xf]
      %v950 = vld [vmem:[%s369 + $0x4] sm:$0xf]
      %v951 = vld [vmem:[%s369 + $0x8] sm:$0xf]
      %v952 = vld [vmem:[%s369 + $0xc] sm:$0xf]
      %v953 = vld [vmem:[%s369 + $0x10] sm:$0xf]
      %v954 = vld [vmem:[%s369 + $0x14] sm:$0xf]
      %v955 = vld [vmem:[%s369 + $0x18] sm:$0xf]
      %v956 = vld [vmem:[%s369 + $0x1c] sm:$0xf]
      %v957 = vld [vmem:[%s369 + $0x20] sm:$0xf]
      %v958 = vld [vmem:[%s369 + $0x24] sm:$0xf]
      %v959 = vld [vmem:[%s369 + $0x28] sm:$0xf]
      %v960 = vld [vmem:[%s369 + $0x2c] sm:$0xf]
      %v961 = vld [vmem:[%s369 + $0x30] sm:$0xf]
      %v962 = vld [vmem:[%s369 + $0x34] sm:$0xf]
      %v963 = vld [vmem:[%s369 + $0x38] sm:$0xf]
      %v964 = vld [vmem:[%s369 + $0x3c] sm:$0xf]
      %v965 = vld [vmem:[%s369 + $0x40] sm:$0xf]
      %v966 = vld [vmem:[%s369 + $0x44] sm:$0xf]
      %v967 = vld [vmem:[%s369 + $0x48] sm:$0xf]
      %v968 = vld [vmem:[%s369 + $0x4c] sm:$0xf]
      %v969 = vld [vmem:[%s369 + $0x50] sm:$0xf]
      %v970 = vld [vmem:[%s369 + $0x54] sm:$0xf]
      %v971 = vld [vmem:[%s369 + $0x58] sm:$0xf]
      %v972 = vld [vmem:[%s369 + $0x5c] sm:$0xf]
      %v973 = vld [vmem:[%s369 + $0x60] sm:$0xf]
      %v974 = vld [vmem:[%s369 + $0x64] sm:$0xf]
      %v975 = vld [vmem:[%s369 + $0x68] sm:$0xf]
      %v976 = vld [vmem:[%s369 + $0x6c] sm:$0xf]
      %v977 = vld [vmem:[%s369 + $0x70] sm:$0xf]
      %v978 = vld [vmem:[%s369 + $0x74] sm:$0xf]
      %v979 = vld [vmem:[%s369 + $0x78] sm:$0xf]
      %v980 = vld [vmem:[%s369 + $0x7c] sm:$0xf]
      %v981 = vld [vmem:[%s2] sm:$0xf]
      %v982 = vld [vmem:[%s2 + $0x4] sm:$0xf]
      %v983 = vld [vmem:[%s2 + $0x8] sm:$0xf]
      %v984 = vld [vmem:[%s2 + $0xc] sm:$0xf]
      %v985 = vld [vmem:[%s3] sm:$0x1]
      %v987 = vlaneseq
      %v988 = vshrl.u32 %v987, 7
      %v989 = vsub.s32 0, %v988
      %v990 = vrot.slane %v985, %v989
      %v1024 = vunpack.c.l.b16 %v949
      %v1025 = vunpack.c.l.b16 %v950
      %v1026 = vunpack.c.l.b16 %v951
      %v1027 = vunpack.c.l.b16 %v952
      %v1028 = vunpack.c.l.b16 %v953
      %v1029 = vunpack.c.l.b16 %v954
      %v1030 = vunpack.c.l.b16 %v955
      %v1031 = vunpack.c.l.b16 %v956
      %v1032 = vunpack.c.l.b16 %v957
      %v1033 = vunpack.c.l.b16 %v958
      %v1034 = vunpack.c.l.b16 %v959
      %v1035 = vunpack.c.l.b16 %v960
      %v1036 = vunpack.c.l.b16 %v961
      %v1037 = vunpack.c.l.b16 %v962
      %v1038 = vunpack.c.l.b16 %v963
      %v1039 = vunpack.c.l.b16 %v964
      %v1040 = vunpack.c.l.b16 %v965
      %v1041 = vunpack.c.l.b16 %v966
      %v1042 = vunpack.c.l.b16 %v967
      %v1043 = vunpack.c.l.b16 %v968
      %v1044 = vunpack.c.l.b16 %v969
      %v1045 = vunpack.c.l.b16 %v970
      %v1046 = vunpack.c.l.b16 %v971
      %v1047 = vunpack.c.l.b16 %v972
      %v1048 = vunpack.c.l.b16 %v973
      %v1049 = vunpack.c.l.b16 %v974
      %v1050 = vunpack.c.l.b16 %v975
      %v1051 = vunpack.c.l.b16 %v976
      %v1052 = vunpack.c.l.b16 %v977
      %v1053 = vunpack.c.l.b16 %v978
      %v1054 = vunpack.c.l.b16 %v979
      %v1055 = vunpack.c.l.b16 %v980
      %v1056 = vpack.c.b16 %v1025, %v1024
      %v1057 = vpack.c.b16 %v1027, %v1026
      %v1058 = vpack.c.b16 %v1029, %v1028
      %v1059 = vpack.c.b16 %v1031, %v1030
      %v1060 = vpack.c.b16 %v1033, %v1032
      %v1061 = vpack.c.b16 %v1035, %v1034
      %v1062 = vpack.c.b16 %v1037, %v1036
      %v1063 = vpack.c.b16 %v1039, %v1038
      %v1064 = vpack.c.b16 %v1041, %v1040
      %v1065 = vpack.c.b16 %v1043, %v1042
      %v1066 = vpack.c.b16 %v1045, %v1044
      %v1067 = vpack.c.b16 %v1047, %v1046
      %v1068 = vpack.c.b16 %v1049, %v1048
      %v1069 = vpack.c.b16 %v1051, %v1050
      %v1070 = vpack.c.b16 %v1053, %v1052
      %v1071 = vpack.c.b16 %v1055, %v1054
      %v1076 = vunpack.c.l.b16 %v981
      %v1077 = vunpack.c.l.b16 %v982
      %v1078 = vunpack.c.l.b16 %v983
      %v1079 = vunpack.c.l.b16 %v984
      %v1080 = vpack.c.b16 %v1077, %v1076
      %v1081 = vpack.c.b16 %v1079, %v1078
      %v1085 = vsel %vm518, %v1056, 0
      %v1088 = vsel %vm518, %v1057, 0
      %v1091 = vsel %vm518, %v1058, 0
      %v1094 = vsel %vm518, %v1059, 0
      %v1097 = vsel %vm518, %v1060, 0
      %v1100 = vsel %vm518, %v1061, 0
      %v1103 = vsel %vm518, %v1062, 0
      %v1106 = vsel %vm518, %v1063, 0
      %v1109 = vsel %vm518, %v1064, 0
      %v1112 = vsel %vm518, %v1065, 0
      %v1115 = vsel %vm518, %v1066, 0
      %v1118 = vsel %vm518, %v1067, 0
      %v1121 = vsel %vm518, %v1068, 0
      %v1124 = vsel %vm518, %v1069, 0
      %v1127 = vsel %vm518, %v1070, 0
      %v1130 = vsel %vm518, %v1071, 0
      %1132 = vmatprep.subr.bf16.mxu0 0
      %1133 = vmatpush1.bf16.msra.mxu0 %v1080
      %1134 = vmatprep.subr.bf16.mxu0 0
      %1135 = vmatpush1.bf16.msra.mxu0 %v1081
      %1136 = vmatprep.subr.bf16.mxu0 0
      %1137 = vmatpush1.bf16.msra.mxu0 0
      %1138 = vmatprep.subr.bf16.mxu0 0
      %1139 = vmatpush1.bf16.msra.mxu0 0
      %1140 = vmatprep.subr.bf16.mxu0 0
      %1141 = vmatpush1.bf16.msra.mxu0 0
      %1142 = vmatprep.subr.bf16.mxu0 0
      %1143 = vmatpush1.bf16.msra.mxu0 0
      %1144 = vmatprep.subr.bf16.mxu0 0
      %1145 = vmatpush1.bf16.msra.mxu0 0
      %1146 = vmatprep.subr.bf16.mxu0 0
      %1147 = vmatpush1.bf16.msra.mxu0 0
      %1148 = vmatprep.subr.bf16.mxu0 0
      %1149 = vmatpush1.bf16.msra.mxu0 0
      %1150 = vmatprep.subr.bf16.mxu0 0
      %1151 = vmatpush1.bf16.msra.mxu0 0
      %1152 = vmatprep.subr.bf16.mxu0 0
      %1153 = vmatpush1.bf16.msra.mxu0 0
      %1154 = vmatprep.subr.bf16.mxu0 0
      %1155 = vmatpush1.bf16.msra.mxu0 0
      %1156 = vmatprep.subr.bf16.mxu0 0
      %1157 = vmatpush1.bf16.msra.mxu0 0
      %1158 = vmatprep.subr.bf16.mxu0 0
      %1159 = vmatpush1.bf16.msra.mxu0 0
      %1160 = vmatprep.subr.bf16.mxu0 0
      %1161 = vmatpush1.bf16.msra.mxu0 0
      %1162 = vmatprep.subr.bf16.mxu0 0
      %1163 = vmatpush1.bf16.msra.mxu0 0
      %1164 = vmatprep.mubr.bf16.mxu0 0
      %1165 = vmatmul.mubr.bf16.gmra.mrb[0].mxu0 %v1085
      %v1166 = vpop.f32.mrb[0].mxu0
      %v1167 = vadd.f32 %v990, %v1166
      %v1168 = vpop.f32.mrb[0].mxu0
      %v1169 = vpop.f32.mrb[0].mxu0
      %v1170 = vadd.f32 %v990, %v1169
      %v1171 = vpop.f32.mrb[0].mxu0
      %1172 = vmatprep.mubr.bf16.mxu0 0
      %1173 = vmatmul.mubr.bf16.gmra.mrb[0].mxu0 %v1088
      %v1174 = vpop.f32.mrb[0].mxu0
      %v1175 = vadd.f32 %v990, %v1174
      %v1176 = vpop.f32.mrb[0].mxu0
      %v1177 = vpop.f32.mrb[0].mxu0
      %v1178 = vadd.f32 %v990, %v1177
      %v1179 = vpop.f32.mrb[0].mxu0
      %1180 = vmatprep.mubr.bf16.mxu0 0
      %1181 = vmatmul.mubr.bf16.gmra.mrb[0].mxu0 %v1091
      %v1182 = vpop.f32.mrb[0].mxu0
      %v1183 = vadd.f32 %v990, %v1182
      %v1184 = vpop.f32.mrb[0].mxu0
      %v1185 = vpop.f32.mrb[0].mxu0
      %v1186 = vadd.f32 %v990, %v1185
      %v1187 = vpop.f32.mrb[0].mxu0
      %1188 = vmatprep.mubr.bf16.mxu0 0
      %1189 = vmatmul.mubr.bf16.gmra.mrb[0].mxu0 %v1094
      %v1190 = vpop.f32.mrb[0].mxu0
      %v1191 = vadd.f32 %v990, %v1190
      %v1192 = vpop.f32.mrb[0].mxu0
      %v1193 = vpop.f32.mrb[0].mxu0
      %v1194 = vadd.f32 %v990, %v1193
      %v1195 = vpop.f32.mrb[0].mxu0
      %1196 = vmatprep.mubr.bf16.mxu0 0
      %1197 = vmatmul.mubr.bf16.gmra.mrb[0].mxu0 %v1097
      %v1198 = vpop.f32.mrb[0].mxu0
      %v1199 = vadd.f32 %v990, %v1198
      %v1200 = vpop.f32.mrb[0].mxu0
      %v1201 = vpop.f32.mrb[0].mxu0
      %v1202 = vadd.f32 %v990, %v1201
      %v1203 = vpop.f32.mrb[0].mxu0
      %1204 = vmatprep.mubr.bf16.mxu0 0
      %1205 = vmatmul.mubr.bf16.gmra.mrb[0].mxu0 %v1100
      %v1206 = vpop.f32.mrb[0].mxu0
      %v1207 = vadd.f32 %v990, %v1206
      %v1208 = vpop.f32.mrb[0].mxu0
      %v1209 = vpop.f32.mrb[0].mxu0
      %v1210 = vadd.f32 %v990, %v1209
      %v1211 = vpop.f32.mrb[0].mxu0
      %1212 = vmatprep.mubr.bf16.mxu0 0
      %1213 = vmatmul.mubr.bf16.gmra.mrb[0].mxu0 %v1103
      %v1214 = vpop.f32.mrb[0].mxu0
      %v1215 = vadd.f32 %v990, %v1214
      %v1216 = vpop.f32.mrb[0].mxu0
      %v1217 = vpop.f32.mrb[0].mxu0
      %v1218 = vadd.f32 %v990, %v1217
      %v1219 = vpop.f32.mrb[0].mxu0
      %1220 = vmatprep.mubr.bf16.mxu0 0
      %1221 = vmatmul.mubr.bf16.gmra.mrb[0].mxu0 %v1106
      %v1222 = vpop.f32.mrb[0].mxu0
      %v1223 = vadd.f32 %v990, %v1222
      %v1224 = vpop.f32.mrb[0].mxu0
      %v1225 = vpop.f32.mrb[0].mxu0
      %v1226 = vadd.f32 %v990, %v1225
      %v1227 = vpop.f32.mrb[0].mxu0
      %1228 = vmatprep.mubr.bf16.mxu0 0
      %1229 = vmatmul.mubr.bf16.gmra.mrb[0].mxu0 %v1109
      %v1230 = vpop.f32.mrb[0].mxu0
      %v1231 = vadd.f32 %v990, %v1230
      %v1232 = vpop.f32.mrb[0].mxu0
      %v1233 = vpop.f32.mrb[0].mxu0
      %v1234 = vadd.f32 %v990, %v1233
      %v1235 = vpop.f32.mrb[0].mxu0
      %1236 = vmatprep.mubr.bf16.mxu0 0
      %1237 = vmatmul.mubr.bf16.gmra.mrb[0].mxu0 %v1112
      %v1238 = vpop.f32.mrb[0].mxu0
      %v1239 = vadd.f32 %v990, %v1238
      %v1240 = vpop.f32.mrb[0].mxu0
      %v1241 = vpop.f32.mrb[0].mxu0
      %v1242 = vadd.f32 %v990, %v1241
      %v1243 = vpop.f32.mrb[0].mxu0
      %1244 = vmatprep.mubr.bf16.mxu0 0
      %1245 = vmatmul.mubr.bf16.gmra.mrb[0].mxu0 %v1115
      %v1246 = vpop.f32.mrb[0].mxu0
      %v1247 = vadd.f32 %v990, %v1246
      %v1248 = vpop.f32.mrb[0].mxu0
      %v1249 = vpop.f32.mrb[0].mxu0
      %v1250 = vadd.f32 %v990, %v1249
      %v1251 = vpop.f32.mrb[0].mxu0
      %1252 = vmatprep.mubr.bf16.mxu0 0
      %1253 = vmatmul.mubr.bf16.gmra.mrb[0].mxu0 %v1118
      %v1254 = vpop.f32.mrb[0].mxu0
      %v1255 = vadd.f32 %v990, %v1254
      %v1256 = vpop.f32.mrb[0].mxu0
      %v1257 = vpop.f32.mrb[0].mxu0
      %v1258 = vadd.f32 %v990, %v1257
      %v1259 = vpop.f32.mrb[0].mxu0
      %1260 = vmatprep.mubr.bf16.mxu0 0
      %1261 = vmatmul.mubr.bf16.gmra.mrb[0].mxu0 %v1121
      %v1262 = vpop.f32.mrb[0].mxu0
      %v1263 = vadd.f32 %v990, %v1262
      %v1264 = vpop.f32.mrb[0].mxu0
      %v1265 = vpop.f32.mrb[0].mxu0
      %v1266 = vadd.f32 %v990, %v1265
      %v1267 = vpop.f32.mrb[0].mxu0
      %1268 = vmatprep.mubr.bf16.mxu0 0
      %1269 = vmatmul.mubr.bf16.gmra.mrb[0].mxu0 %v1124
      %v1270 = vpop.f32.mrb[0].mxu0
      %v1271 = vadd.f32 %v990, %v1270
      %v1272 = vpop.f32.mrb[0].mxu0
      %v1273 = vpop.f32.mrb[0].mxu0
      %v1274 = vadd.f32 %v990, %v1273
      %v1275 = vpop.f32.mrb[0].mxu0
      %1276 = vmatprep.mubr.bf16.mxu0 0
      %1277 = vmatmul.mubr.bf16.gmra.mrb[0].mxu0 %v1127
      %v1278 = vpop.f32.mrb[0].mxu0
      %v1279 = vadd.f32 %v990, %v1278
      %v1280 = vpop.f32.mrb[0].mxu0
      %v1281 = vpop.f32.mrb[0].mxu0
      %v1282 = vadd.f32 %v990, %v1281
      %v1283 = vpop.f32.mrb[0].mxu0
      %1284 = vmatprep.mubr.bf16.mxu0 0
      %1285 = vmatmul.mubr.bf16.gmra.mrb[0].mxu0 %v1130
      %v1286 = vpop.f32.mrb[0].mxu0
      %v1287 = vadd.f32 %v990, %v1286
      %v1288 = vpop.f32.mrb[0].mxu0
      %v1289 = vpop.f32.mrb[0].mxu0
      %v1290 = vadd.f32 %v990, %v1289
      %v1291 = vpop.f32.mrb[0].mxu0
      %1292 = vdwg.mxu0
      %v1293 = vadd.f32 %v1167, %v1170
      %v1294 = vadd.f32 %v1293, %v1175
      %v1295 = vadd.f32 %v1294, %v1178
      %v1296 = vadd.f32 %v1295, %v1183
      %v1297 = vadd.f32 %v1296, %v1186
      %v1298 = vadd.f32 %v1297, %v1191
      %v1299 = vadd.f32 %v1298, %v1194
      %v1300 = vadd.f32 %v1299, %v1199
      %v1301 = vadd.f32 %v1300, %v1202
      %v1302 = vadd.f32 %v1301, %v1207
      %v1303 = vadd.f32 %v1302, %v1210
      %v1304 = vadd.f32 %v1303, %v1215
      %v1305 = vadd.f32 %v1304, %v1218
      %v1306 = vadd.f32 %v1305, %v1223
      %v1307 = vadd.f32 %v1306, %v1226
      %v1308 = vadd.f32 %v1307, %v1231
      %v1309 = vadd.f32 %v1308, %v1234
      %v1310 = vadd.f32 %v1309, %v1239
      %v1311 = vadd.f32 %v1310, %v1242
      %v1312 = vadd.f32 %v1311, %v1247
      %v1313 = vadd.f32 %v1312, %v1250
      %v1314 = vadd.f32 %v1313, %v1255
      %v1315 = vadd.f32 %v1314, %v1258
      %v1316 = vadd.f32 %v1315, %v1263
      %v1317 = vadd.f32 %v1316, %v1266
      %v1318 = vadd.f32 %v1317, %v1271
      %v1319 = vadd.f32 %v1318, %v1274
      %v1320 = vadd.f32 %v1319, %v1279
      %v1321 = vadd.f32 %v1320, %v1282
      %v1322 = vadd.f32 %v1321, %v1287
      %v1323 = vadd.f32 %v1322, %v1290
      %v1324 = vrot.slane %v1323, 4
      %v1325 = vadd.f32 %v1323, %v1324
      %v1326 = vrot.slane %v1325, 2
      %v1327 = vadd.f32 %v1325, %v1326
      %v1328 = vrot.slane %v1327, 1
      %v1329 = vadd.f32 %v1327, %v1328
      %v1330 = vmul.f32 %v1329, %v797
      %v1331 = vsub.f32 %v1167, %v1330
      %v1332 = vsub.f32 %v1170, %v1330
      %v1333 = vsub.f32 %v1175, %v1330
      %v1334 = vsub.f32 %v1178, %v1330
      %v1335 = vsub.f32 %v1183, %v1330
      %v1336 = vsub.f32 %v1186, %v1330
      %v1337 = vsub.f32 %v1191, %v1330
      %v1338 = vsub.f32 %v1194, %v1330
      %v1339 = vsub.f32 %v1199, %v1330
      %v1340 = vsub.f32 %v1202, %v1330
      %v1341 = vsub.f32 %v1207, %v1330
      %v1342 = vsub.f32 %v1210, %v1330
      %v1343 = vsub.f32 %v1215, %v1330
      %v1344 = vsub.f32 %v1218, %v1330
      %v1345 = vsub.f32 %v1223, %v1330
      %v1346 = vsub.f32 %v1226, %v1330
      %v1347 = vsub.f32 %v1231, %v1330
      %v1348 = vsub.f32 %v1234, %v1330
      %v1349 = vsub.f32 %v1239, %v1330
      %v1350 = vsub.f32 %v1242, %v1330
      %v1351 = vsub.f32 %v1247, %v1330
      %v1352 = vsub.f32 %v1250, %v1330
      %v1353 = vsub.f32 %v1255, %v1330
      %v1354 = vsub.f32 %v1258, %v1330
      %v1355 = vsub.f32 %v1263, %v1330
      %v1356 = vsub.f32 %v1266, %v1330
      %v1357 = vsub.f32 %v1271, %v1330
      %v1358 = vsub.f32 %v1274, %v1330
      %v1359 = vsub.f32 %v1279, %v1330
      %v1360 = vsub.f32 %v1282, %v1330
      %v1361 = vsub.f32 %v1287, %v1330
      %v1362 = vsub.f32 %v1290, %v1330
      %v1363 = vmul.f32 %v1331, %v1331
      %v1364 = vmul.f32 %v1332, %v1332
      %v1365 = vmul.f32 %v1333, %v1333
      %v1366 = vmul.f32 %v1334, %v1334
      %v1367 = vmul.f32 %v1335, %v1335
      %v1368 = vmul.f32 %v1336, %v1336
      %v1369 = vmul.f32 %v1337, %v1337
      %v1370 = vmul.f32 %v1338, %v1338
      %v1371 = vmul.f32 %v1339, %v1339
      %v1372 = vmul.f32 %v1340, %v1340
      %v1373 = vmul.f32 %v1341, %v1341
      %v1374 = vmul.f32 %v1342, %v1342
      %v1375 = vmul.f32 %v1343, %v1343
      %v1376 = vmul.f32 %v1344, %v1344
      %v1377 = vmul.f32 %v1345, %v1345
      %v1378 = vmul.f32 %v1346, %v1346
      %v1379 = vmul.f32 %v1347, %v1347
      %v1380 = vmul.f32 %v1348, %v1348
      %v1381 = vmul.f32 %v1349, %v1349
      %v1382 = vmul.f32 %v1350, %v1350
      %v1383 = vmul.f32 %v1351, %v1351
      %v1384 = vmul.f32 %v1352, %v1352
      %v1385 = vmul.f32 %v1353, %v1353
      %v1386 = vmul.f32 %v1354, %v1354
      %v1387 = vmul.f32 %v1355, %v1355
      %v1388 = vmul.f32 %v1356, %v1356
      %v1389 = vmul.f32 %v1357, %v1357
      %v1390 = vmul.f32 %v1358, %v1358
      %v1391 = vmul.f32 %v1359, %v1359
      %v1392 = vmul.f32 %v1360, %v1360
      %v1393 = vmul.f32 %v1361, %v1361
      %v1394 = vmul.f32 %v1362, %v1362
      %v1395 = vadd.f32 %v1363, %v1364
      %v1396 = vadd.f32 %v1395, %v1365
      %v1397 = vadd.f32 %v1396, %v1366
      %v1398 = vadd.f32 %v1397, %v1367
      %v1399 = vadd.f32 %v1398, %v1368
      %v1400 = vadd.f32 %v1399, %v1369
      %v1401 = vadd.f32 %v1400, %v1370
      %v1402 = vadd.f32 %v1401, %v1371
      %v1403 = vadd.f32 %v1402, %v1372
      %v1404 = vadd.f32 %v1403, %v1373
      %v1405 = vadd.f32 %v1404, %v1374
      %v1406 = vadd.f32 %v1405, %v1375
      %v1407 = vadd.f32 %v1406, %v1376
      %v1408 = vadd.f32 %v1407, %v1377
      %v1409 = vadd.f32 %v1408, %v1378
      %v1410 = vadd.f32 %v1409, %v1379
      %v1411 = vadd.f32 %v1410, %v1380
      %v1412 = vadd.f32 %v1411, %v1381
      %v1413 = vadd.f32 %v1412, %v1382
      %v1414 = vadd.f32 %v1413, %v1383
      %v1415 = vadd.f32 %v1414, %v1384
      %v1416 = vadd.f32 %v1415, %v1385
      %v1417 = vadd.f32 %v1416, %v1386
      %v1418 = vadd.f32 %v1417, %v1387
      %v1419 = vadd.f32 %v1418, %v1388
      %v1420 = vadd.f32 %v1419, %v1389
      %v1421 = vadd.f32 %v1420, %v1390
      %v1422 = vadd.f32 %v1421, %v1391
      %v1423 = vadd.f32 %v1422, %v1392
      %v1424 = vadd.f32 %v1423, %v1393
      %v1425 = vadd.f32 %v1424, %v1394
      %v1426 = vrot.slane %v1425, 4
      %v1427 = vadd.f32 %v1425, %v1426
      %v1428 = vrot.slane %v1427, 2
      %v1429 = vadd.f32 %v1427, %v1428
      %v1430 = vrot.slane %v1429, 1
      %v1431 = vadd.f32 %v1429, %v1430
      %v1432 = vmul.f32 %v1431, %v797
      %v1433 = vadd.f32 %v1432, 1e-05
      %v1434 = vrsqrt.pop %v1433
      %v1435 = vmul.f32 %v1331, %v1434
      %v1436 = vmul.f32 %v1332, %v1434
      %v1437 = vmul.f32 %v1333, %v1434
      %v1438 = vmul.f32 %v1334, %v1434
      %v1439 = vmul.f32 %v1335, %v1434
      %v1440 = vmul.f32 %v1336, %v1434
      %v1441 = vmul.f32 %v1337, %v1434
      %v1442 = vmul.f32 %v1338, %v1434
      %v1443 = vmul.f32 %v1339, %v1434
      %v1444 = vmul.f32 %v1340, %v1434
      %v1445 = vmul.f32 %v1341, %v1434
      %v1446 = vmul.f32 %v1342, %v1434
      %v1447 = vmul.f32 %v1343, %v1434
      %v1448 = vmul.f32 %v1344, %v1434
      %v1449 = vmul.f32 %v1345, %v1434
      %v1450 = vmul.f32 %v1346, %v1434
      %v1451 = vmul.f32 %v1347, %v1434
      %v1452 = vmul.f32 %v1348, %v1434
      %v1453 = vmul.f32 %v1349, %v1434
      %v1454 = vmul.f32 %v1350, %v1434
      %v1455 = vmul.f32 %v1351, %v1434
      %v1456 = vmul.f32 %v1352, %v1434
      %v1457 = vmul.f32 %v1353, %v1434
      %v1458 = vmul.f32 %v1354, %v1434
      %v1459 = vmul.f32 %v1355, %v1434
      %v1460 = vmul.f32 %v1356, %v1434
      %v1461 = vmul.f32 %v1357, %v1434
      %v1462 = vmul.f32 %v1358, %v1434
      %v1463 = vmul.f32 %v1359, %v1434
      %v1464 = vmul.f32 %v1360, %v1434
      %v1465 = vmul.f32 %v1361, %v1434
      %v1466 = vmul.f32 %v1362, %v1434
      %v1467 = vmax.f32 %v1435, 0.0
      %v1468 = vmax.f32 %v1436, 0.0
      %v1469 = vmax.f32 %v1437, 0.0
      %v1470 = vmax.f32 %v1438, 0.0
      %v1471 = vmax.f32 %v1439, 0.0
      %v1472 = vmax.f32 %v1440, 0.0
      %v1473 = vmax.f32 %v1441, 0.0
      %v1474 = vmax.f32 %v1442, 0.0
      %v1475 = vmax.f32 %v1443, 0.0
      %v1476 = vmax.f32 %v1444, 0.0
      %v1477 = vmax.f32 %v1445, 0.0
      %v1478 = vmax.f32 %v1446, 0.0
      %v1479 = vmax.f32 %v1447, 0.0
      %v1480 = vmax.f32 %v1448, 0.0
      %v1481 = vmax.f32 %v1449, 0.0
      %v1482 = vmax.f32 %v1450, 0.0
      %v1483 = vmax.f32 %v1451, 0.0
      %v1484 = vmax.f32 %v1452, 0.0
      %v1485 = vmax.f32 %v1453, 0.0
      %v1486 = vmax.f32 %v1454, 0.0
      %v1487 = vmax.f32 %v1455, 0.0
      %v1488 = vmax.f32 %v1456, 0.0
      %v1489 = vmax.f32 %v1457, 0.0
      %v1490 = vmax.f32 %v1458, 0.0
      %v1491 = vmax.f32 %v1459, 0.0
      %v1492 = vmax.f32 %v1460, 0.0
      %v1493 = vmax.f32 %v1461, 0.0
      %v1494 = vmax.f32 %v1462, 0.0
      %v1495 = vmax.f32 %v1463, 0.0
      %v1496 = vmax.f32 %v1464, 0.0
      %v1497 = vmax.f32 %v1465, 0.0
      %v1498 = vmax.f32 %v1466, 0.0
      %v1499 = vadd.f32 %v1467, %v1468
      %v1500 = vadd.f32 %v1499, %v1469
      %v1501 = vadd.f32 %v1500, %v1470
      %v1502 = vadd.f32 %v1501, %v1471
      %v1503 = vadd.f32 %v1502, %v1472
      %v1504 = vadd.f32 %v1503, %v1473
      %v1505 = vadd.f32 %v1504, %v1474
      %v1506 = vadd.f32 %v1505, %v1475
      %v1507 = vadd.f32 %v1506, %v1476
      %v1508 = vadd.f32 %v1507, %v1477
      %v1509 = vadd.f32 %v1508, %v1478
      %v1510 = vadd.f32 %v1509, %v1479
      %v1511 = vadd.f32 %v1510, %v1480
      %v1512 = vadd.f32 %v1511, %v1481
      %v1513 = vadd.f32 %v1512, %v1482
      %v1514 = vadd.f32 %v1513, %v1483
      %v1515 = vadd.f32 %v1514, %v1484
      %v1516 = vadd.f32 %v1515, %v1485
      %v1517 = vadd.f32 %v1516, %v1486
      %v1518 = vadd.f32 %v1517, %v1487
      %v1519 = vadd.f32 %v1518, %v1488
      %v1520 = vadd.f32 %v1519, %v1489
      %v1521 = vadd.f32 %v1520, %v1490
      %v1522 = vadd.f32 %v1521, %v1491
      %v1523 = vadd.f32 %v1522, %v1492
      %v1524 = vadd.f32 %v1523, %v1493
      %v1525 = vadd.f32 %v1524, %v1494
      %v1526 = vadd.f32 %v1525, %v1495
      %v1527 = vadd.f32 %v1526, %v1496
      %v1528 = vadd.f32 %v1527, %v1497
      %v1529 = vadd.f32 %v1528, %v1498
      %v1530 = vrot.slane %v1529, 4
      %v1531 = vadd.f32 %v1529, %v1530
      %v1532 = vrot.slane %v1531, 2
      %v1533 = vadd.f32 %v1531, %v1532
      %v1534 = vrot.slane %v1533, 1
      %v1535 = vadd.f32 %v1533, %v1534
      %v1536 = vmul.f32 %v1535, %v797
      %v1537 = vsub.f32 %v1467, %v1536
      %v1538 = vsub.f32 %v1468, %v1536
      %v1539 = vsub.f32 %v1469, %v1536
      %v1540 = vsub.f32 %v1470, %v1536
      %v1541 = vsub.f32 %v1471, %v1536
      %v1542 = vsub.f32 %v1472, %v1536
      %v1543 = vsub.f32 %v1473, %v1536
      %v1544 = vsub.f32 %v1474, %v1536
      %v1545 = vsub.f32 %v1475, %v1536
      %v1546 = vsub.f32 %v1476, %v1536
      %v1547 = vsub.f32 %v1477, %v1536
      %v1548 = vsub.f32 %v1478, %v1536
      %v1549 = vsub.f32 %v1479, %v1536
      %v1550 = vsub.f32 %v1480, %v1536
      %v1551 = vsub.f32 %v1481, %v1536
      %v1552 = vsub.f32 %v1482, %v1536
      %v1553 = vsub.f32 %v1483, %v1536
      %v1554 = vsub.f32 %v1484, %v1536
      %v1555 = vsub.f32 %v1485, %v1536
      %v1556 = vsub.f32 %v1486, %v1536
      %v1557 = vsub.f32 %v1487, %v1536
      %v1558 = vsub.f32 %v1488, %v1536
      %v1559 = vsub.f32 %v1489, %v1536
      %v1560 = vsub.f32 %v1490, %v1536
      %v1561 = vsub.f32 %v1491, %v1536
      %v1562 = vsub.f32 %v1492, %v1536
      %v1563 = vsub.f32 %v1493, %v1536
      %v1564 = vsub.f32 %v1494, %v1536
      %v1565 = vsub.f32 %v1495, %v1536
      %v1566 = vsub.f32 %v1496, %v1536
      %v1567 = vsub.f32 %v1497, %v1536
      %v1568 = vsub.f32 %v1498, %v1536
      %v1569 = vmul.f32 %v1537, %v1537
      %v1570 = vmul.f32 %v1538, %v1538
      %v1571 = vmul.f32 %v1539, %v1539
      %v1572 = vmul.f32 %v1540, %v1540
      %v1573 = vmul.f32 %v1541, %v1541
      %v1574 = vmul.f32 %v1542, %v1542
      %v1575 = vmul.f32 %v1543, %v1543
      %v1576 = vmul.f32 %v1544, %v1544
      %v1577 = vmul.f32 %v1545, %v1545
      %v1578 = vmul.f32 %v1546, %v1546
      %v1579 = vmul.f32 %v1547, %v1547
      %v1580 = vmul.f32 %v1548, %v1548
      %v1581 = vmul.f32 %v1549, %v1549
      %v1582 = vmul.f32 %v1550, %v1550
      %v1583 = vmul.f32 %v1551, %v1551
      %v1584 = vmul.f32 %v1552, %v1552
      %v1585 = vmul.f32 %v1553, %v1553
      %v1586 = vmul.f32 %v1554, %v1554
      %v1587 = vmul.f32 %v1555, %v1555
      %v1588 = vmul.f32 %v1556, %v1556
      %v1589 = vmul.f32 %v1557, %v1557
      %v1590 = vmul.f32 %v1558, %v1558
      %v1591 = vmul.f32 %v1559, %v1559
      %v1592 = vmul.f32 %v1560, %v1560
      %v1593 = vmul.f32 %v1561, %v1561
      %v1594 = vmul.f32 %v1562, %v1562
      %v1595 = vmul.f32 %v1563, %v1563
      %v1596 = vmul.f32 %v1564, %v1564
      %v1597 = vmul.f32 %v1565, %v1565
      %v1598 = vmul.f32 %v1566, %v1566
      %v1599 = vmul.f32 %v1567, %v1567
      %v1600 = vmul.f32 %v1568, %v1568
      %v1601 = vadd.f32 %v1569, %v1570
      %v1602 = vadd.f32 %v1601, %v1571
      %v1603 = vadd.f32 %v1602, %v1572
      %v1604 = vadd.f32 %v1603, %v1573
      %v1605 = vadd.f32 %v1604, %v1574
      %v1606 = vadd.f32 %v1605, %v1575
      %v1607 = vadd.f32 %v1606, %v1576
      %v1608 = vadd.f32 %v1607, %v1577
      %v1609 = vadd.f32 %v1608, %v1578
      %v1610 = vadd.f32 %v1609, %v1579
      %v1611 = vadd.f32 %v1610, %v1580
      %v1612 = vadd.f32 %v1611, %v1581
      %v1613 = vadd.f32 %v1612, %v1582
      %v1614 = vadd.f32 %v1613, %v1583
      %v1615 = vadd.f32 %v1614, %v1584
      %v1616 = vadd.f32 %v1615, %v1585
      %v1617 = vadd.f32 %v1616, %v1586
      %v1618 = vadd.f32 %v1617, %v1587
      %v1619 = vadd.f32 %v1618, %v1588
      %v1620 = vadd.f32 %v1619, %v1589
      %v1621 = vadd.f32 %v1620, %v1590
      %v1622 = vadd.f32 %v1621, %v1591
      %v1623 = vadd.f32 %v1622, %v1592
      %v1624 = vadd.f32 %v1623, %v1593
      %v1625 = vadd.f32 %v1624, %v1594
      %v1626 = vadd.f32 %v1625, %v1595
      %v1627 = vadd.f32 %v1626, %v1596
      %v1628 = vadd.f32 %v1627, %v1597
      %v1629 = vadd.f32 %v1628, %v1598
      %v1630 = vadd.f32 %v1629, %v1599
      %v1631 = vadd.f32 %v1630, %v1600
      %v1632 = vrot.slane %v1631, 4
      %v1633 = vadd.f32 %v1631, %v1632
      %v1634 = vrot.slane %v1633, 2
      %v1635 = vadd.f32 %v1633, %v1634
      %v1636 = vrot.slane %v1635, 1
      %v1637 = vadd.f32 %v1635, %v1636
      %v1638 = vmul.f32 %v1637, %v797
      %v1639 = vadd.f32 %v1638, 1e-05
      %v1640 = vrsqrt.pop %v1639
      %v1641 = vmul.f32 %v1537, %v1640
      %v1642 = vmul.f32 %v1538, %v1640
      %v1643 = vmul.f32 %v1539, %v1640
      %v1644 = vmul.f32 %v1540, %v1640
      %v1645 = vmul.f32 %v1541, %v1640
      %v1646 = vmul.f32 %v1542, %v1640
      %v1647 = vmul.f32 %v1543, %v1640
      %v1648 = vmul.f32 %v1544, %v1640
      %v1649 = vmul.f32 %v1545, %v1640
      %v1650 = vmul.f32 %v1546, %v1640
      %v1651 = vmul.f32 %v1547, %v1640
      %v1652 = vmul.f32 %v1548, %v1640
      %v1653 = vmul.f32 %v1549, %v1640
      %v1654 = vmul.f32 %v1550, %v1640
      %v1655 = vmul.f32 %v1551, %v1640
      %v1656 = vmul.f32 %v1552, %v1640
      %v1657 = vmul.f32 %v1553, %v1640
      %v1658 = vmul.f32 %v1554, %v1640
      %v1659 = vmul.f32 %v1555, %v1640
      %v1660 = vmul.f32 %v1556, %v1640
      %v1661 = vmul.f32 %v1557, %v1640
      %v1662 = vmul.f32 %v1558, %v1640
      %v1663 = vmul.f32 %v1559, %v1640
      %v1664 = vmul.f32 %v1560, %v1640
      %v1665 = vmul.f32 %v1561, %v1640
      %v1666 = vmul.f32 %v1562, %v1640
      %v1667 = vmul.f32 %v1563, %v1640
      %v1668 = vmul.f32 %v1564, %v1640
      %v1669 = vmul.f32 %v1565, %v1640
      %v1670 = vmul.f32 %v1566, %v1640
      %v1671 = vmul.f32 %v1567, %v1640
      %v1672 = vmul.f32 %v1568, %v1640
      %v1673 = vlaneseq
      %v1674 = vshrl.u32 %v1673, 7
      %v1675 = vsub.s32 0, %v1674
      %v1676 = vrot.slane %v943, %v1675
      %v1677 = vmul.f32 %v1676, %v1641
      %v1678 = vmul.f32 %v1676, %v1642
      %v1679 = vmul.f32 %v1676, %v1643
      %v1680 = vmul.f32 %v1676, %v1644
      %v1681 = vmul.f32 %v1676, %v1645
      %v1682 = vmul.f32 %v1676, %v1646
      %v1683 = vmul.f32 %v1676, %v1647
      %v1684 = vmul.f32 %v1676, %v1648
      %v1685 = vmul.f32 %v1676, %v1649
      %v1686 = vmul.f32 %v1676, %v1650
      %v1687 = vmul.f32 %v1676, %v1651
      %v1688 = vmul.f32 %v1676, %v1652
      %v1689 = vmul.f32 %v1676, %v1653
      %v1690 = vmul.f32 %v1676, %v1654
      %v1691 = vmul.f32 %v1676, %v1655
      %v1692 = vmul.f32 %v1676, %v1656
      %v1693 = vmul.f32 %v1676, %v1657
      %v1694 = vmul.f32 %v1676, %v1658
      %v1695 = vmul.f32 %v1676, %v1659
      %v1696 = vmul.f32 %v1676, %v1660
      %v1697 = vmul.f32 %v1676, %v1661
      %v1698 = vmul.f32 %v1676, %v1662
      %v1699 = vmul.f32 %v1676, %v1663
      %v1700 = vmul.f32 %v1676, %v1664
      %v1701 = vmul.f32 %v1676, %v1665
      %v1702 = vmul.f32 %v1676, %v1666
      %v1703 = vmul.f32 %v1676, %v1667
      %v1704 = vmul.f32 %v1676, %v1668
      %v1705 = vmul.f32 %v1676, %v1669
      %v1706 = vmul.f32 %v1676, %v1670
      %v1707 = vmul.f32 %v1676, %v1671
      %v1708 = vmul.f32 %v1676, %v1672
      %v1709 = vlaneseq
      %v1710 = vshrl.u32 %v1709, 7
      %v1711 = vsub.s32 0, %v1710
      %v1712 = vrot.slane %v945, %v1711
      %v1713 = vadd.f32 %v1677, %v1712
      %v1714 = vadd.f32 %v1678, %v1712
      %v1715 = vadd.f32 %v1679, %v1712
      %v1716 = vadd.f32 %v1680, %v1712
      %v1717 = vadd.f32 %v1681, %v1712
      %v1718 = vadd.f32 %v1682, %v1712
      %v1719 = vadd.f32 %v1683, %v1712
      %v1720 = vadd.f32 %v1684, %v1712
      %v1721 = vadd.f32 %v1685, %v1712
      %v1722 = vadd.f32 %v1686, %v1712
      %v1723 = vadd.f32 %v1687, %v1712
      %v1724 = vadd.f32 %v1688, %v1712
      %v1725 = vadd.f32 %v1689, %v1712
      %v1726 = vadd.f32 %v1690, %v1712
      %v1727 = vadd.f32 %v1691, %v1712
      %v1728 = vadd.f32 %v1692, %v1712
      %v1729 = vadd.f32 %v1693, %v1712
      %v1730 = vadd.f32 %v1694, %v1712
      %v1731 = vadd.f32 %v1695, %v1712
      %v1732 = vadd.f32 %v1696, %v1712
      %v1733 = vadd.f32 %v1697, %v1712
      %v1734 = vadd.f32 %v1698, %v1712
      %v1735 = vadd.f32 %v1699, %v1712
      %v1736 = vadd.f32 %v1700, %v1712
      %v1737 = vadd.f32 %v1701, %v1712
      %v1738 = vadd.f32 %v1702, %v1712
      %v1739 = vadd.f32 %v1703, %v1712
      %v1740 = vadd.f32 %v1704, %v1712
      %v1741 = vadd.f32 %v1705, %v1712
      %v1742 = vadd.f32 %v1706, %v1712
      %v1743 = vadd.f32 %v1707, %v1712
      %v1744 = vadd.f32 %v1708, %v1712
      %v1745 = vmax.f32 %v1713, 0.0
      %v1746 = vmax.f32 %v1714, 0.0
      %v1747 = vmax.f32 %v1715, 0.0
      %v1748 = vmax.f32 %v1716, 0.0
      %v1749 = vmax.f32 %v1717, 0.0
      %v1750 = vmax.f32 %v1718, 0.0
      %v1751 = vmax.f32 %v1719, 0.0
      %v1752 = vmax.f32 %v1720, 0.0
      %v1753 = vmax.f32 %v1721, 0.0
      %v1754 = vmax.f32 %v1722, 0.0
      %v1755 = vmax.f32 %v1723, 0.0
      %v1756 = vmax.f32 %v1724, 0.0
      %v1757 = vmax.f32 %v1725, 0.0
      %v1758 = vmax.f32 %v1726, 0.0
      %v1759 = vmax.f32 %v1727, 0.0
      %v1760 = vmax.f32 %v1728, 0.0
      %v1761 = vmax.f32 %v1729, 0.0
      %v1762 = vmax.f32 %v1730, 0.0
      %v1763 = vmax.f32 %v1731, 0.0
      %v1764 = vmax.f32 %v1732, 0.0
      %v1765 = vmax.f32 %v1733, 0.0
      %v1766 = vmax.f32 %v1734, 0.0
      %v1767 = vmax.f32 %v1735, 0.0
      %v1768 = vmax.f32 %v1736, 0.0
      %v1769 = vmax.f32 %v1737, 0.0
      %v1770 = vmax.f32 %v1738, 0.0
      %v1771 = vmax.f32 %v1739, 0.0
      %v1772 = vmax.f32 %v1740, 0.0
      %v1773 = vmax.f32 %v1741, 0.0
      %v1774 = vmax.f32 %v1742, 0.0
      %v1775 = vmax.f32 %v1743, 0.0
      %v1776 = vmax.f32 %v1744, 0.0
      %1777 = vst [vmem:[#allocation2] sm:$0xff] 0
      %1778 = vst [vmem:[#allocation2 + $0x8] sm:$0xff] 0
      %1779 = vst [vmem:[#allocation2 + $0x90] sm:$0xff] 0
      %1780 = vst [vmem:[#allocation2 + $0x98] sm:$0xff] 0
      %v1781 = vpack.c.bf16 %v1746, %v1745
      %v1782 = vpack.c.bf16 %v1748, %v1747
      %v1783 = vpack.c.bf16 %v1750, %v1749
      %v1784 = vpack.c.bf16 %v1752, %v1751
      %v1785 = vpack.c.bf16 %v1754, %v1753
      %v1786 = vpack.c.bf16 %v1756, %v1755
      %v1787 = vpack.c.bf16 %v1758, %v1757
      %v1788 = vpack.c.bf16 %v1760, %v1759
      %v1789 = vpack.c.bf16 %v1762, %v1761
      %v1790 = vpack.c.bf16 %v1764, %v1763
      %v1791 = vpack.c.bf16 %v1766, %v1765
      %v1792 = vpack.c.bf16 %v1768, %v1767
      %v1793 = vpack.c.bf16 %v1770, %v1769
      %v1794 = vpack.c.bf16 %v1772, %v1771
      %v1795 = vpack.c.bf16 %v1774, %v1773
      %v1796 = vpack.c.bf16 %v1776, %v1775
      %1797 = vst [vmem:[#allocation2 + $0x10] sm:$0xff] %v1781
      %1798 = vst [vmem:[#allocation2 + $0x18] sm:$0xff] %v1782
      %1799 = vst [vmem:[#allocation2 + $0x20] sm:$0xff] %v1783
      %1800 = vst [vmem:[#allocation2 + $0x28] sm:$0xff] %v1784
      %1801 = vst [vmem:[#allocation2 + $0x30] sm:$0xff] %v1785
      %1802 = vst [vmem:[#allocation2 + $0x38] sm:$0xff] %v1786
      %1803 = vst [vmem:[#allocation2 + $0x40] sm:$0xff] %v1787
      %1804 = vst [vmem:[#allocation2 + $0x48] sm:$0xff] %v1788
      %1805 = vst [vmem:[#allocation2 + $0x50] sm:$0xff] %v1789
      %1806 = vst [vmem:[#allocation2 + $0x58] sm:$0xff] %v1790
      %1807 = vst [vmem:[#allocation2 + $0x60] sm:$0xff] %v1791
      %1808 = vst [vmem:[#allocation2 + $0x68] sm:$0xff] %v1792
      %1809 = vst [vmem:[#allocation2 + $0x70] sm:$0xff] %v1793
      %1810 = vst [vmem:[#allocation2 + $0x78] sm:$0xff] %v1794
      %1811 = vst [vmem:[#allocation2 + $0x80] sm:$0xff] %v1795
      %1812 = vst [vmem:[#allocation2 + $0x88] sm:$0xff] %v1796
      %v1813 = vlaneseq
      %v1814 = vshrl.u32 %v1813, 7
      %v1815 = vadd.s32 %v1814, 8
      %v1816 = vadd.s32 %v1814, 16
      %v1817 = vadd.s32 %v1814, 24
      %v1818 = vadd.s32 %v1814, 32
      %v1819 = vadd.s32 %v1814, 40
      %v1820 = vadd.s32 %v1814, 48
      %v1821 = vadd.s32 %v1814, 56
      %v1822 = vadd.s32 %v1814, 64
      %v1823 = vadd.s32 %v1814, 72
      %v1824 = vadd.s32 %v1814, 80
      %v1825 = vadd.s32 %v1814, 88
      %v1826 = vadd.s32 %v1814, 96
      %v1827 = vadd.s32 %v1814, 104
      %v1828 = vadd.s32 %v1814, 112
      %v1829 = vadd.s32 %v1814, 120
      %v1830 = vadd.s32 %v1814, 128
      %v1831 = vadd.s32 %v1814, 136
      %v1832 = vadd.s32 %v1814, 144
      %v1833 = vadd.s32 %v1814, 152
      %v1834 = vadd.s32 %v1814, 160
      %v1835 = vadd.s32 %v1814, 168
      %v1836 = vadd.s32 %v1814, 176
      %v1837 = vadd.s32 %v1814, 184
      %v1838 = vadd.s32 %v1814, 192
      %v1839 = vadd.s32 %v1814, 200
      %v1840 = vadd.s32 %v1814, 208
      %v1841 = vadd.s32 %v1814, 216
      %v1842 = vadd.s32 %v1814, 224
      %v1843 = vadd.s32 %v1814, 232
      %v1844 = vadd.s32 %v1814, 240
      %v1845 = vadd.s32 %v1814, 248
      %vm1846 = vcmp.lt.s32.totalorder %v1814, 0
      %v1847 = vsub.s32 0, %v1814
      %v1848 = vsel %vm1846, %v1847, %v1814
      %v1849 = vshrl.u32 %v1848, 4
      %v1850 = vand.u32 %v1848, 15
      %v1851 = vsub.s32 0, %v1850
      %v1852 = vsel %vm1846, %v1851, %v1850
      %vm1853 = vcmp.lt.s32.totalorder %v1815, 0
      %v1854 = vsub.s32 0, %v1815
      %v1855 = vsel %vm1853, %v1854, %v1815
      %v1856 = vshrl.u32 %v1855, 4
      %v1857 = vand.u32 %v1855, 15
      %v1858 = vsub.s32 0, %v1857
      %v1859 = vsel %vm1853, %v1858, %v1857
      %vm1860 = vcmp.lt.s32.totalorder %v1816, 0
      %v1861 = vsub.s32 0, %v1816
      %v1862 = vsel %vm1860, %v1861, %v1816
      %v1863 = vshrl.u32 %v1862, 4
      %v1864 = vand.u32 %v1862, 15
      %v1865 = vsub.s32 0, %v1864
      %v1866 = vsel %vm1860, %v1865, %v1864
      %vm1867 = vcmp.lt.s32.totalorder %v1817, 0
      %v1868 = vsub.s32 0, %v1817
      %v1869 = vsel %vm1867, %v1868, %v1817
      %v1870 = vshrl.u32 %v1869, 4
      %v1871 = vand.u32 %v1869, 15
      %v1872 = vsub.s32 0, %v1871
      %v1873 = vsel %vm1867, %v1872, %v1871
      %vm1874 = vcmp.lt.s32.totalorder %v1818, 0
      %v1875 = vsub.s32 0, %v1818
      %v1876 = vsel %vm1874, %v1875, %v1818
      %v1877 = vshrl.u32 %v1876, 4
      %v1878 = vand.u32 %v1876, 15
      %v1879 = vsub.s32 0, %v1878
      %v1880 = vsel %vm1874, %v1879, %v1878
      %vm1881 = vcmp.lt.s32.totalorder %v1819, 0
      %v1882 = vsub.s32 0, %v1819
      %v1883 = vsel %vm1881, %v1882, %v1819
      %v1884 = vshrl.u32 %v1883, 4
      %v1885 = vand.u32 %v1883, 15
      %v1886 = vsub.s32 0, %v1885
      %v1887 = vsel %vm1881, %v1886, %v1885
      %vm1888 = vcmp.lt.s32.totalorder %v1820, 0
      %v1889 = vsub.s32 0, %v1820
      %v1890 = vsel %vm1888, %v1889, %v1820
      %v1891 = vshrl.u32 %v1890, 4
      %v1892 = vand.u32 %v1890, 15
      %v1893 = vsub.s32 0, %v1892
      %v1894 = vsel %vm1888, %v1893, %v1892
      %vm1895 = vcmp.lt.s32.totalorder %v1821, 0
      %v1896 = vsub.s32 0, %v1821
      %v1897 = vsel %vm1895, %v1896, %v1821
      %v1898 = vshrl.u32 %v1897, 4
      %v1899 = vand.u32 %v1897, 15
      %v1900 = vsub.s32 0, %v1899
      %v1901 = vsel %vm1895, %v1900, %v1899
      %vm1902 = vcmp.lt.s32.totalorder %v1822, 0
      %v1903 = vsub.s32 0, %v1822
      %v1904 = vsel %vm1902, %v1903, %v1822
      %v1905 = vshrl.u32 %v1904, 4
      %v1906 = vand.u32 %v1904, 15
      %v1907 = vsub.s32 0, %v1906
      %v1908 = vsel %vm1902, %v1907, %v1906
      %vm1909 = vcmp.lt.s32.totalorder %v1823, 0
      %v1910 = vsub.s32 0, %v1823
      %v1911 = vsel %vm1909, %v1910, %v1823
      %v1912 = vshrl.u32 %v1911, 4
      %v1913 = vand.u32 %v1911, 15
      %v1914 = vsub.s32 0, %v1913
      %v1915 = vsel %vm1909, %v1914, %v1913
      %vm1916 = vcmp.lt.s32.totalorder %v1824, 0
      %v1917 = vsub.s32 0, %v1824
      %v1918 = vsel %vm1916, %v1917, %v1824
      %v1919 = vshrl.u32 %v1918, 4
      %v1920 = vand.u32 %v1918, 15
      %v1921 = vsub.s32 0, %v1920
      %v1922 = vsel %vm1916, %v1921, %v1920
      %vm1923 = vcmp.lt.s32.totalorder %v1825, 0
      %v1924 = vsub.s32 0, %v1825
      %v1925 = vsel %vm1923, %v1924, %v1825
      %v1926 = vshrl.u32 %v1925, 4
      %v1927 = vand.u32 %v1925, 15
      %v1928 = vsub.s32 0, %v1927
      %v1929 = vsel %vm1923, %v1928, %v1927
      %vm1930 = vcmp.lt.s32.totalorder %v1826, 0
      %v1931 = vsub.s32 0, %v1826
      %v1932 = vsel %vm1930, %v1931, %v1826
      %v1933 = vshrl.u32 %v1932, 4
      %v1934 = vand.u32 %v1932, 15
      %v1935 = vsub.s32 0, %v1934
      %v1936 = vsel %vm1930, %v1935, %v1934
      %vm1937 = vcmp.lt.s32.totalorder %v1827, 0
      %v1938 = vsub.s32 0, %v1827
      %v1939 = vsel %vm1937, %v1938, %v1827
      %v1940 = vshrl.u32 %v1939, 4
      %v1941 = vand.u32 %v1939, 15
      %v1942 = vsub.s32 0, %v1941
      %v1943 = vsel %vm1937, %v1942, %v1941
      %vm1944 = vcmp.lt.s32.totalorder %v1828, 0
      %v1945 = vsub.s32 0, %v1828
      %v1946 = vsel %vm1944, %v1945, %v1828
      %v1947 = vshrl.u32 %v1946, 4
      %v1948 = vand.u32 %v1946, 15
      %v1949 = vsub.s32 0, %v1948
      %v1950 = vsel %vm1944, %v1949, %v1948
      %vm1951 = vcmp.lt.s32.totalorder %v1829, 0
      %v1952 = vsub.s32 0, %v1829
      %v1953 = vsel %vm1951, %v1952, %v1829
      %v1954 = vshrl.u32 %v1953, 4
      %v1955 = vand.u32 %v1953, 15
      %v1956 = vsub.s32 0, %v1955
      %v1957 = vsel %vm1951, %v1956, %v1955
      %vm1958 = vcmp.lt.s32.totalorder %v1830, 0
      %v1959 = vsub.s32 0, %v1830
      %v1960 = vsel %vm1958, %v1959, %v1830
      %v1961 = vshrl.u32 %v1960, 4
      %v1962 = vand.u32 %v1960, 15
      %v1963 = vsub.s32 0, %v1962
      %v1964 = vsel %vm1958, %v1963, %v1962
      %vm1965 = vcmp.lt.s32.totalorder %v1831, 0
      %v1966 = vsub.s32 0, %v1831
      %v1967 = vsel %vm1965, %v1966, %v1831
      %v1968 = vshrl.u32 %v1967, 4
      %v1969 = vand.u32 %v1967, 15
      %v1970 = vsub.s32 0, %v1969
      %v1971 = vsel %vm1965, %v1970, %v1969
      %vm1972 = vcmp.lt.s32.totalorder %v1832, 0
      %v1973 = vsub.s32 0, %v1832
      %v1974 = vsel %vm1972, %v1973, %v1832
      %v1975 = vshrl.u32 %v1974, 4
      %v1976 = vand.u32 %v1974, 15
      %v1977 = vsub.s32 0, %v1976
      %v1978 = vsel %vm1972, %v1977, %v1976
      %vm1979 = vcmp.lt.s32.totalorder %v1833, 0
      %v1980 = vsub.s32 0, %v1833
      %v1981 = vsel %vm1979, %v1980, %v1833
      %v1982 = vshrl.u32 %v1981, 4
      %v1983 = vand.u32 %v1981, 15
      %v1984 = vsub.s32 0, %v1983
      %v1985 = vsel %vm1979, %v1984, %v1983
      %vm1986 = vcmp.lt.s32.totalorder %v1834, 0
      %v1987 = vsub.s32 0, %v1834
      %v1988 = vsel %vm1986, %v1987, %v1834
      %v1989 = vshrl.u32 %v1988, 4
      %v1990 = vand.u32 %v1988, 15
      %v1991 = vsub.s32 0, %v1990
      %v1992 = vsel %vm1986, %v1991, %v1990
      %vm1993 = vcmp.lt.s32.totalorder %v1835, 0
      %v1994 = vsub.s32 0, %v1835
      %v1995 = vsel %vm1993, %v1994, %v1835
      %v1996 = vshrl.u32 %v1995, 4
      %v1997 = vand.u32 %v1995, 15
      %v1998 = vsub.s32 0, %v1997
      %v1999 = vsel %vm1993, %v1998, %v1997
      %vm2000 = vcmp.lt.s32.totalorder %v1836, 0
      %v2001 = vsub.s32 0, %v1836
      %v2002 = vsel %vm2000, %v2001, %v1836
      %v2003 = vshrl.u32 %v2002, 4
      %v2004 = vand.u32 %v2002, 15
      %v2005 = vsub.s32 0, %v2004
      %v2006 = vsel %vm2000, %v2005, %v2004
      %vm2007 = vcmp.lt.s32.totalorder %v1837, 0
      %v2008 = vsub.s32 0, %v1837
      %v2009 = vsel %vm2007, %v2008, %v1837
      %v2010 = vshrl.u32 %v2009, 4
      %v2011 = vand.u32 %v2009, 15
      %v2012 = vsub.s32 0, %v2011
      %v2013 = vsel %vm2007, %v2012, %v2011
      %vm2014 = vcmp.lt.s32.totalorder %v1838, 0
      %v2015 = vsub.s32 0, %v1838
      %v2016 = vsel %vm2014, %v2015, %v1838
      %v2017 = vshrl.u32 %v2016, 4
      %v2018 = vand.u32 %v2016, 15
      %v2019 = vsub.s32 0, %v2018
      %v2020 = vsel %vm2014, %v2019, %v2018
      %vm2021 = vcmp.lt.s32.totalorder %v1839, 0
      %v2022 = vsub.s32 0, %v1839
      %v2023 = vsel %vm2021, %v2022, %v1839
      %v2024 = vshrl.u32 %v2023, 4
      %v2025 = vand.u32 %v2023, 15
      %v2026 = vsub.s32 0, %v2025
      %v2027 = vsel %vm2021, %v2026, %v2025
      %vm2028 = vcmp.lt.s32.totalorder %v1840, 0
      %v2029 = vsub.s32 0, %v1840
      %v2030 = vsel %vm2028, %v2029, %v1840
      %v2031 = vshrl.u32 %v2030, 4
      %v2032 = vand.u32 %v2030, 15
      %v2033 = vsub.s32 0, %v2032
      %v2034 = vsel %vm2028, %v2033, %v2032
      %vm2035 = vcmp.lt.s32.totalorder %v1841, 0
      %v2036 = vsub.s32 0, %v1841
      %v2037 = vsel %vm2035, %v2036, %v1841
      %v2038 = vshrl.u32 %v2037, 4
      %v2039 = vand.u32 %v2037, 15
      %v2040 = vsub.s32 0, %v2039
      %v2041 = vsel %vm2035, %v2040, %v2039
      %vm2042 = vcmp.lt.s32.totalorder %v1842, 0
      %v2043 = vsub.s32 0, %v1842
      %v2044 = vsel %vm2042, %v2043, %v1842
      %v2045 = vshrl.u32 %v2044, 4
      %v2046 = vand.u32 %v2044, 15
      %v2047 = vsub.s32 0, %v2046
      %v2048 = vsel %vm2042, %v2047, %v2046
      %vm2049 = vcmp.lt.s32.totalorder %v1843, 0
      %v2050 = vsub.s32 0, %v1843
      %v2051 = vsel %vm2049, %v2050, %v1843
      %v2052 = vshrl.u32 %v2051, 4
      %v2053 = vand.u32 %v2051, 15
      %v2054 = vsub.s32 0, %v2053
      %v2055 = vsel %vm2049, %v2054, %v2053
      %vm2056 = vcmp.lt.s32.totalorder %v1844, 0
      %v2057 = vsub.s32 0, %v1844
      %v2058 = vsel %vm2056, %v2057, %v1844
      %v2059 = vshrl.u32 %v2058, 4
      %v2060 = vand.u32 %v2058, 15
      %v2061 = vsub.s32 0, %v2060
      %v2062 = vsel %vm2056, %v2061, %v2060
      %vm2063 = vcmp.lt.s32.totalorder %v1845, 0
      %v2064 = vsub.s32 0, %v1845
      %v2065 = vsel %vm2063, %v2064, %v1845
      %v2066 = vshrl.u32 %v2065, 4
      %v2067 = vand.u32 %v2065, 15
      %v2068 = vsub.s32 0, %v2067
      %v2069 = vsel %vm2063, %v2068, %v2067
      %vm2070 = vcmp.ne.s32.totalorder %v1852, 0
      %vm2071 = vcmp.ne.s32.totalorder %v1859, 0
      %vm2072 = vcmp.ne.s32.totalorder %v1866, 0
      %vm2073 = vcmp.ne.s32.totalorder %v1873, 0
      %vm2074 = vcmp.ne.s32.totalorder %v1880, 0
      %vm2075 = vcmp.ne.s32.totalorder %v1887, 0
      %vm2076 = vcmp.ne.s32.totalorder %v1894, 0
      %vm2077 = vcmp.ne.s32.totalorder %v1901, 0
      %vm2078 = vcmp.ne.s32.totalorder %v1908, 0
      %vm2079 = vcmp.ne.s32.totalorder %v1915, 0
      %vm2080 = vcmp.ne.s32.totalorder %v1922, 0
      %vm2081 = vcmp.ne.s32.totalorder %v1929, 0
      %vm2082 = vcmp.ne.s32.totalorder %v1936, 0
      %vm2083 = vcmp.ne.s32.totalorder %v1943, 0
      %vm2084 = vcmp.ne.s32.totalorder %v1950, 0
      %vm2085 = vcmp.ne.s32.totalorder %v1957, 0
      %vm2086 = vcmp.ne.s32.totalorder %v1964, 0
      %vm2087 = vcmp.ne.s32.totalorder %v1971, 0
      %vm2088 = vcmp.ne.s32.totalorder %v1978, 0
      %vm2089 = vcmp.ne.s32.totalorder %v1985, 0
      %vm2090 = vcmp.ne.s32.totalorder %v1992, 0
      %vm2091 = vcmp.ne.s32.totalorder %v1999, 0
      %vm2092 = vcmp.ne.s32.totalorder %v2006, 0
      %vm2093 = vcmp.ne.s32.totalorder %v2013, 0
      %vm2094 = vcmp.ne.s32.totalorder %v2020, 0
      %vm2095 = vcmp.ne.s32.totalorder %v2027, 0
      %vm2096 = vcmp.ne.s32.totalorder %v2034, 0
      %vm2097 = vcmp.ne.s32.totalorder %v2041, 0
      %vm2098 = vcmp.ne.s32.totalorder %v2048, 0
      %vm2099 = vcmp.ne.s32.totalorder %v2055, 0
      %vm2100 = vcmp.ne.s32.totalorder %v2062, 0
      %vm2101 = vcmp.ne.s32.totalorder %v2069, 0
      %vm2102 = vcmp.lt.s32.totalorder %v1852, 0
      %vm2103 = vcmp.lt.s32.totalorder %v1859, 0
      %vm2104 = vcmp.lt.s32.totalorder %v1866, 0
      %vm2105 = vcmp.lt.s32.totalorder %v1873, 0
      %vm2106 = vcmp.lt.s32.totalorder %v1880, 0
      %vm2107 = vcmp.lt.s32.totalorder %v1887, 0
      %vm2108 = vcmp.lt.s32.totalorder %v1894, 0
      %vm2109 = vcmp.lt.s32.totalorder %v1901, 0
      %vm2110 = vcmp.lt.s32.totalorder %v1908, 0
      %vm2111 = vcmp.lt.s32.totalorder %v1915, 0
      %vm2112 = vcmp.lt.s32.totalorder %v1922, 0
      %vm2113 = vcmp.lt.s32.totalorder %v1929, 0
      %vm2114 = vcmp.lt.s32.totalorder %v1936, 0
      %vm2115 = vcmp.lt.s32.totalorder %v1943, 0
      %vm2116 = vcmp.lt.s32.totalorder %v1950, 0
      %vm2117 = vcmp.lt.s32.totalorder %v1957, 0
      %vm2118 = vcmp.lt.s32.totalorder %v1964, 0
      %vm2119 = vcmp.lt.s32.totalorder %v1971, 0
      %vm2120 = vcmp.lt.s32.totalorder %v1978, 0
      %vm2121 = vcmp.lt.s32.totalorder %v1985, 0
      %vm2122 = vcmp.lt.s32.totalorder %v1992, 0
      %vm2123 = vcmp.lt.s32.totalorder %v1999, 0
      %vm2124 = vcmp.lt.s32.totalorder %v2006, 0
      %vm2125 = vcmp.lt.s32.totalorder %v2013, 0
      %vm2126 = vcmp.lt.s32.totalorder %v2020, 0
      %vm2127 = vcmp.lt.s32.totalorder %v2027, 0
      %vm2128 = vcmp.lt.s32.totalorder %v2034, 0
      %vm2129 = vcmp.lt.s32.totalorder %v2041, 0
      %vm2130 = vcmp.lt.s32.totalorder %v2048, 0
      %vm2131 = vcmp.lt.s32.totalorder %v2055, 0
      %vm2132 = vcmp.lt.s32.totalorder %v2062, 0
      %vm2133 = vcmp.lt.s32.totalorder %v2069, 0
      %vm2134 = vmand %vm2102, %vm2070
      %vm2135 = vmand %vm2103, %vm2071
      %vm2136 = vmand %vm2104, %vm2072
      %vm2137 = vmand %vm2105, %vm2073
      %vm2138 = vmand %vm2106, %vm2074
      %vm2139 = vmand %vm2107, %vm2075
      %vm2140 = vmand %vm2108, %vm2076
      %vm2141 = vmand %vm2109, %vm2077
      %vm2142 = vmand %vm2110, %vm2078
      %vm2143 = vmand %vm2111, %vm2079
      %vm2144 = vmand %vm2112, %vm2080
      %vm2145 = vmand %vm2113, %vm2081
      %vm2146 = vmand %vm2114, %vm2082
      %vm2147 = vmand %vm2115, %vm2083
      %vm2148 = vmand %vm2116, %vm2084
      %vm2149 = vmand %vm2117, %vm2085
      %vm2150 = vmand %vm2118, %vm2086
      %vm2151 = vmand %vm2119, %vm2087
      %vm2152 = vmand %vm2120, %vm2088
      %vm2153 = vmand %vm2121, %vm2089
      %vm2154 = vmand %vm2122, %vm2090
      %vm2155 = vmand %vm2123, %vm2091
      %vm2156 = vmand %vm2124, %vm2092
      %vm2157 = vmand %vm2125, %vm2093
      %vm2158 = vmand %vm2126, %vm2094
      %vm2159 = vmand %vm2127, %vm2095
      %vm2160 = vmand %vm2128, %vm2096
      %vm2161 = vmand %vm2129, %vm2097
      %vm2162 = vmand %vm2130, %vm2098
      %vm2163 = vmand %vm2131, %vm2099
      %vm2164 = vmand %vm2132, %vm2100
      %vm2165 = vmand %vm2133, %vm2101
      %v2166 = vadd.s32 %v1852, 16
      %v2167 = vadd.s32 %v1859, 16
      %v2168 = vadd.s32 %v1866, 16
      %v2169 = vadd.s32 %v1873, 16
      %v2170 = vadd.s32 %v1880, 16
      %v2171 = vadd.s32 %v1887, 16
      %v2172 = vadd.s32 %v1894, 16
      %v2173 = vadd.s32 %v1901, 16
      %v2174 = vadd.s32 %v1908, 16
      %v2175 = vadd.s32 %v1915, 16
      %v2176 = vadd.s32 %v1922, 16
      %v2177 = vadd.s32 %v1929, 16
      %v2178 = vadd.s32 %v1936, 16
      %v2179 = vadd.s32 %v1943, 16
      %v2180 = vadd.s32 %v1950, 16
      %v2181 = vadd.s32 %v1957, 16
      %v2182 = vadd.s32 %v1964, 16
      %v2183 = vadd.s32 %v1971, 16
      %v2184 = vadd.s32 %v1978, 16
      %v2185 = vadd.s32 %v1985, 16
      %v2186 = vadd.s32 %v1992, 16
      %v2187 = vadd.s32 %v1999, 16
      %v2188 = vadd.s32 %v2006, 16
      %v2189 = vadd.s32 %v2013, 16
      %v2190 = vadd.s32 %v2020, 16
      %v2191 = vadd.s32 %v2027, 16
      %v2192 = vadd.s32 %v2034, 16
      %v2193 = vadd.s32 %v2041, 16
      %v2194 = vadd.s32 %v2048, 16
      %v2195 = vadd.s32 %v2055, 16
      %v2196 = vadd.s32 %v2062, 16
      %v2197 = vadd.s32 %v2069, 16
      %v2198 = vsel %vm2134, %v2166, %v1852
      %v2199 = vsel %vm2135, %v2167, %v1859
      %v2200 = vsel %vm2136, %v2168, %v1866
      %v2201 = vsel %vm2137, %v2169, %v1873
      %v2202 = vsel %vm2138, %v2170, %v1880
      %v2203 = vsel %vm2139, %v2171, %v1887
      %v2204 = vsel %vm2140, %v2172, %v1894
      %v2205 = vsel %vm2141, %v2173, %v1901
      %v2206 = vsel %vm2142, %v2174, %v1908
      %v2207 = vsel %vm2143, %v2175, %v1915
      %v2208 = vsel %vm2144, %v2176, %v1922
      %v2209 = vsel %vm2145, %v2177, %v1929
      %v2210 = vsel %vm2146, %v2178, %v1936
      %v2211 = vsel %vm2147, %v2179, %v1943
      %v2212 = vsel %vm2148, %v2180, %v1950
      %v2213 = vsel %vm2149, %v2181, %v1957
      %v2214 = vsel %vm2150, %v2182, %v1964
      %v2215 = vsel %vm2151, %v2183, %v1971
      %v2216 = vsel %vm2152, %v2184, %v1978
      %v2217 = vsel %vm2153, %v2185, %v1985
      %v2218 = vsel %vm2154, %v2186, %v1992
      %v2219 = vsel %vm2155, %v2187, %v1999
      %v2220 = vsel %vm2156, %v2188, %v2006
      %v2221 = vsel %vm2157, %v2189, %v2013
      %v2222 = vsel %vm2158, %v2190, %v2020
      %v2223 = vsel %vm2159, %v2191, %v2027
      %v2224 = vsel %vm2160, %v2192, %v2034
      %v2225 = vsel %vm2161, %v2193, %v2041
      %v2226 = vsel %vm2162, %v2194, %v2048
      %v2227 = vsel %vm2163, %v2195, %v2055
      %v2228 = vsel %vm2164, %v2196, %v2062
      %v2229 = vsel %vm2165, %v2197, %v2069
      %vm2230 = vcmp.ne.s32.totalorder %v2198, 0
      %vm2231 = vcmp.ne.s32.totalorder %v2199, 0
      %vm2232 = vcmp.ne.s32.totalorder %v2200, 0
      %vm2233 = vcmp.ne.s32.totalorder %v2201, 0
      %vm2234 = vcmp.ne.s32.totalorder %v2202, 0
      %vm2235 = vcmp.ne.s32.totalorder %v2203, 0
      %vm2236 = vcmp.ne.s32.totalorder %v2204, 0
      %vm2237 = vcmp.ne.s32.totalorder %v2205, 0
      %vm2238 = vcmp.ne.s32.totalorder %v2206, 0
      %vm2239 = vcmp.ne.s32.totalorder %v2207, 0
      %vm2240 = vcmp.ne.s32.totalorder %v2208, 0
      %vm2241 = vcmp.ne.s32.totalorder %v2209, 0
      %vm2242 = vcmp.ne.s32.totalorder %v2210, 0
      %vm2243 = vcmp.ne.s32.totalorder %v2211, 0
      %vm2244 = vcmp.ne.s32.totalorder %v2212, 0
      %vm2245 = vcmp.ne.s32.totalorder %v2213, 0
      %vm2246 = vcmp.ne.s32.totalorder %v2214, 0
      %vm2247 = vcmp.ne.s32.totalorder %v2215, 0
      %vm2248 = vcmp.ne.s32.totalorder %v2216, 0
      %vm2249 = vcmp.ne.s32.totalorder %v2217, 0
      %vm2250 = vcmp.ne.s32.totalorder %v2218, 0
      %vm2251 = vcmp.ne.s32.totalorder %v2219, 0
      %vm2252 = vcmp.ne.s32.totalorder %v2220, 0
      %vm2253 = vcmp.ne.s32.totalorder %v2221, 0
      %vm2254 = vcmp.ne.s32.totalorder %v2222, 0
      %vm2255 = vcmp.ne.s32.totalorder %v2223, 0
      %vm2256 = vcmp.ne.s32.totalorder %v2224, 0
      %vm2257 = vcmp.ne.s32.totalorder %v2225, 0
      %vm2258 = vcmp.ne.s32.totalorder %v2226, 0
      %vm2259 = vcmp.ne.s32.totalorder %v2227, 0
      %vm2260 = vcmp.ne.s32.totalorder %v2228, 0
      %vm2261 = vcmp.ne.s32.totalorder %v2229, 0
      %vm2262 = vcmp.ne.s32.totalorder %v2198, 15
      %vm2263 = vcmp.ne.s32.totalorder %v2199, 15
      %vm2264 = vcmp.ne.s32.totalorder %v2200, 15
      %vm2265 = vcmp.ne.s32.totalorder %v2201, 15
      %vm2266 = vcmp.ne.s32.totalorder %v2202, 15
      %vm2267 = vcmp.ne.s32.totalorder %v2203, 15
      %vm2268 = vcmp.ne.s32.totalorder %v2204, 15
      %vm2269 = vcmp.ne.s32.totalorder %v2205, 15
      %vm2270 = vcmp.ne.s32.totalorder %v2206, 15
      %vm2271 = vcmp.ne.s32.totalorder %v2207, 15
      %vm2272 = vcmp.ne.s32.totalorder %v2208, 15
      %vm2273 = vcmp.ne.s32.totalorder %v2209, 15
      %vm2274 = vcmp.ne.s32.totalorder %v2210, 15
      %vm2275 = vcmp.ne.s32.totalorder %v2211, 15
      %vm2276 = vcmp.ne.s32.totalorder %v2212, 15
      %vm2277 = vcmp.ne.s32.totalorder %v2213, 15
      %vm2278 = vcmp.ne.s32.totalorder %v2214, 15
      %vm2279 = vcmp.ne.s32.totalorder %v2215, 15
      %vm2280 = vcmp.ne.s32.totalorder %v2216, 15
      %vm2281 = vcmp.ne.s32.totalorder %v2217, 15
      %vm2282 = vcmp.ne.s32.totalorder %v2218, 15
      %vm2283 = vcmp.ne.s32.totalorder %v2219, 15
      %vm2284 = vcmp.ne.s32.totalorder %v2220, 15
      %vm2285 = vcmp.ne.s32.totalorder %v2221, 15
      %vm2286 = vcmp.ne.s32.totalorder %v2222, 15
      %vm2287 = vcmp.ne.s32.totalorder %v2223, 15
      %vm2288 = vcmp.ne.s32.totalorder %v2224, 15
      %vm2289 = vcmp.ne.s32.totalorder %v2225, 15
      %vm2290 = vcmp.ne.s32.totalorder %v2226, 15
      %vm2291 = vcmp.ne.s32.totalorder %v2227, 15
      %vm2292 = vcmp.ne.s32.totalorder %v2228, 15
      %vm2293 = vcmp.ne.s32.totalorder %v2229, 15
      %v2294 = vld [vmem:[#allocation2] sm:$0x80]
      %v2295 = vld [vmem:[#allocation2 + $0x8] sm:$0xff]
      %v2296 = vld [vmem:[#allocation2 + $0x10] sm:$0xff]
      %v2297 = vld [vmem:[#allocation2 + $0x18] sm:$0xff]
      %v2298 = vld [vmem:[#allocation2 + $0x20] sm:$0xff]
      %v2299 = vld [vmem:[#allocation2 + $0x28] sm:$0xff]
      %v2300 = vld [vmem:[#allocation2 + $0x30] sm:$0xff]
      %v2301 = vld [vmem:[#allocation2 + $0x38] sm:$0xff]
      %v2302 = vld [vmem:[#allocation2 + $0x40] sm:$0xff]
      %v2303 = vld [vmem:[#allocation2 + $0x48] sm:$0xff]
      %v2304 = vld [vmem:[#allocation2 + $0x50] sm:$0xff]
      %v2305 = vld [vmem:[#allocation2 + $0x58] sm:$0xff]
      %v2306 = vld [vmem:[#allocation2 + $0x60] sm:$0xff]
      %v2307 = vld [vmem:[#allocation2 + $0x68] sm:$0xff]
      %v2308 = vld [vmem:[#allocation2 + $0x70] sm:$0xff]
      %v2309 = vld [vmem:[#allocation2 + $0x78] sm:$0xff]
      %v2310 = vld [vmem:[#allocation2 + $0x80] sm:$0xff]
      %v2311 = vsel %vm2230, 1, 0
      %v2312 = vsel %vm2231, 1, 0
      %v2313 = vsel %vm2232, 1, 0
      %v2314 = vsel %vm2233, 1, 0
      %v2315 = vsel %vm2234, 1, 0
      %v2316 = vsel %vm2235, 1, 0
      %v2317 = vsel %vm2236, 1, 0
      %v2318 = vsel %vm2237, 1, 0
      %v2319 = vsel %vm2238, 1, 0
      %v2320 = vsel %vm2239, 1, 0
      %v2321 = vsel %vm2240, 1, 0
      %v2322 = vsel %vm2241, 1, 0
      %v2323 = vsel %vm2242, 1, 0
      %v2324 = vsel %vm2243, 1, 0
      %v2325 = vsel %vm2244, 1, 0
      %v2326 = vsel %vm2245, 1, 0
      %v2327 = vsel %vm2246, 1, 0
      %v2328 = vsel %vm2247, 1, 0
      %v2329 = vsel %vm2248, 1, 0
      %v2330 = vsel %vm2249, 1, 0
      %v2331 = vsel %vm2250, 1, 0
      %v2332 = vsel %vm2251, 1, 0
      %v2333 = vsel %vm2252, 1, 0
      %v2334 = vsel %vm2253, 1, 0
      %v2335 = vsel %vm2254, 1, 0
      %v2336 = vsel %vm2255, 1, 0
      %v2337 = vsel %vm2256, 1, 0
      %v2338 = vsel %vm2257, 1, 0
      %v2339 = vsel %vm2258, 1, 0
      %v2340 = vsel %vm2259, 1, 0
      %v2341 = vsel %vm2260, 1, 0
      %v2342 = vsel %vm2261, 1, 0
      %vm2343 = vcmp.eq.s32.totalorder %v2311, 1
      %vm2344 = vcmp.eq.s32.totalorder %v2312, 1
      %vm2345 = vcmp.eq.s32.totalorder %v2313, 1
      %vm2346 = vcmp.eq.s32.totalorder %v2314, 1
      %vm2347 = vcmp.eq.s32.totalorder %v2315, 1
      %vm2348 = vcmp.eq.s32.totalorder %v2316, 1
      %vm2349 = vcmp.eq.s32.totalorder %v2317, 1
      %vm2350 = vcmp.eq.s32.totalorder %v2318, 1
      %vm2351 = vcmp.eq.s32.totalorder %v2319, 1
      %vm2352 = vcmp.eq.s32.totalorder %v2320, 1
      %vm2353 = vcmp.eq.s32.totalorder %v2321, 1
      %vm2354 = vcmp.eq.s32.totalorder %v2322, 1
      %vm2355 = vcmp.eq.s32.totalorder %v2323, 1
      %vm2356 = vcmp.eq.s32.totalorder %v2324, 1
      %vm2357 = vcmp.eq.s32.totalorder %v2325, 1
      %vm2358 = vcmp.eq.s32.totalorder %v2326, 1
      %vm2359 = vcmp.eq.s32.totalorder %v2327, 1
      %vm2360 = vcmp.eq.s32.totalorder %v2328, 1
      %vm2361 = vcmp.eq.s32.totalorder %v2329, 1
      %vm2362 = vcmp.eq.s32.totalorder %v2330, 1
      %vm2363 = vcmp.eq.s32.totalorder %v2331, 1
      %vm2364 = vcmp.eq.s32.totalorder %v2332, 1
      %vm2365 = vcmp.eq.s32.totalorder %v2333, 1
      %vm2366 = vcmp.eq.s32.totalorder %v2334, 1
      %vm2367 = vcmp.eq.s32.totalorder %v2335, 1
      %vm2368 = vcmp.eq.s32.totalorder %v2336, 1
      %vm2369 = vcmp.eq.s32.totalorder %v2337, 1
      %vm2370 = vcmp.eq.s32.totalorder %v2338, 1
      %vm2371 = vcmp.eq.s32.totalorder %v2339, 1
      %vm2372 = vcmp.eq.s32.totalorder %v2340, 1
      %vm2373 = vcmp.eq.s32.totalorder %v2341, 1
      %vm2374 = vcmp.eq.s32.totalorder %v2342, 1
      %vm2375 = vmpackc.low %vm2343, %vm2343
      %vm2376 = vmpackc.low %vm2344, %vm2344
      %vm2377 = vmpackc.low %vm2345, %vm2345
      %vm2378 = vmpackc.low %vm2346, %vm2346
      %vm2379 = vmpackc.low %vm2347, %vm2347
      %vm2380 = vmpackc.low %vm2348, %vm2348
      %vm2381 = vmpackc.low %vm2349, %vm2349
      %vm2382 = vmpackc.low %vm2350, %vm2350
      %vm2383 = vmpackc.low %vm2351, %vm2351
      %vm2384 = vmpackc.low %vm2352, %vm2352
      %vm2385 = vmpackc.low %vm2353, %vm2353
      %vm2386 = vmpackc.low %vm2354, %vm2354
      %vm2387 = vmpackc.low %vm2355, %vm2355
      %vm2388 = vmpackc.low %vm2356, %vm2356
      %vm2389 = vmpackc.low %vm2357, %vm2357
      %vm2390 = vmpackc.low %vm2358, %vm2358
      %vm2391 = vmpackc.low %vm2359, %vm2359
      %vm2392 = vmpackc.low %vm2360, %vm2360
      %vm2393 = vmpackc.low %vm2361, %vm2361
      %vm2394 = vmpackc.low %vm2362, %vm2362
      %vm2395 = vmpackc.low %vm2363, %vm2363
      %vm2396 = vmpackc.low %vm2364, %vm2364
      %vm2397 = vmpackc.low %vm2365, %vm2365
      %vm2398 = vmpackc.low %vm2366, %vm2366
      %vm2399 = vmpackc.low %vm2367, %vm2367
      %vm2400 = vmpackc.low %vm2368, %vm2368
      %vm2401 = vmpackc.low %vm2369, %vm2369
      %vm2402 = vmpackc.low %vm2370, %vm2370
      %vm2403 = vmpackc.low %vm2371, %vm2371
      %vm2404 = vmpackc.low %vm2372, %vm2372
      %vm2405 = vmpackc.low %vm2373, %vm2373
      %vm2406 = vmpackc.low %vm2374, %vm2374
      %v2407 = vsel %vm2375, 65537, 0
      %v2408 = vsel %vm2376, 65537, 0
      %v2409 = vsel %vm2377, 65537, 0
      %v2410 = vsel %vm2378, 65537, 0
      %v2411 = vsel %vm2379, 65537, 0
      %v2412 = vsel %vm2380, 65537, 0
      %v2413 = vsel %vm2381, 65537, 0
      %v2414 = vsel %vm2382, 65537, 0
      %v2415 = vsel %vm2383, 65537, 0
      %v2416 = vsel %vm2384, 65537, 0
      %v2417 = vsel %vm2385, 65537, 0
      %v2418 = vsel %vm2386, 65537, 0
      %v2419 = vsel %vm2387, 65537, 0
      %v2420 = vsel %vm2388, 65537, 0
      %v2421 = vsel %vm2389, 65537, 0
      %v2422 = vsel %vm2390, 65537, 0
      %v2423 = vsel %vm2391, 65537, 0
      %v2424 = vsel %vm2392, 65537, 0
      %v2425 = vsel %vm2393, 65537, 0
      %v2426 = vsel %vm2394, 65537, 0
      %v2427 = vsel %vm2395, 65537, 0
      %v2428 = vsel %vm2396, 65537, 0
      %v2429 = vsel %vm2397, 65537, 0
      %v2430 = vsel %vm2398, 65537, 0
      %v2431 = vsel %vm2399, 65537, 0
      %v2432 = vsel %vm2400, 65537, 0
      %v2433 = vsel %vm2401, 65537, 0
      %v2434 = vsel %vm2402, 65537, 0
      %v2435 = vsel %vm2403, 65537, 0
      %v2436 = vsel %vm2404, 65537, 0
      %v2437 = vsel %vm2405, 65537, 0
      %v2438 = vsel %vm2406, 65537, 0
      %v2439 = vunpack.c.l.b16 %v2407
      %v2440 = vunpack.c.l.b16 %v2408
      %v2441 = vunpack.c.l.b16 %v2409
      %v2442 = vunpack.c.l.b16 %v2410
      %v2443 = vunpack.c.l.b16 %v2411
      %v2444 = vunpack.c.l.b16 %v2412
      %v2445 = vunpack.c.l.b16 %v2413
      %v2446 = vunpack.c.l.b16 %v2414
      %v2447 = vunpack.c.l.b16 %v2415
      %v2448 = vunpack.c.l.b16 %v2416
      %v2449 = vunpack.c.l.b16 %v2417
      %v2450 = vunpack.c.l.b16 %v2418
      %v2451 = vunpack.c.l.b16 %v2419
      %v2452 = vunpack.c.l.b16 %v2420
      %v2453 = vunpack.c.l.b16 %v2421
      %v2454 = vunpack.c.l.b16 %v2422
      %v2455 = vunpack.c.l.b16 %v2423
      %v2456 = vunpack.c.l.b16 %v2424
      %v2457 = vunpack.c.l.b16 %v2425
      %v2458 = vunpack.c.l.b16 %v2426
      %v2459 = vunpack.c.l.b16 %v2427
      %v2460 = vunpack.c.l.b16 %v2428
      %v2461 = vunpack.c.l.b16 %v2429
      %v2462 = vunpack.c.l.b16 %v2430
      %v2463 = vunpack.c.l.b16 %v2431
      %v2464 = vunpack.c.l.b16 %v2432
      %v2465 = vunpack.c.l.b16 %v2433
      %v2466 = vunpack.c.l.b16 %v2434
      %v2467 = vunpack.c.l.b16 %v2435
      %v2468 = vunpack.c.l.b16 %v2436
      %v2469 = vunpack.c.l.b16 %v2437
      %v2470 = vunpack.c.l.b16 %v2438
      %v2471 = vpack.c.b16 %v2440, %v2439
      %v2472 = vpack.c.b16 %v2442, %v2441
      %v2473 = vpack.c.b16 %v2444, %v2443
      %v2474 = vpack.c.b16 %v2446, %v2445
      %v2475 = vpack.c.b16 %v2448, %v2447
      %v2476 = vpack.c.b16 %v2450, %v2449
      %v2477 = vpack.c.b16 %v2452, %v2451
      %v2478 = vpack.c.b16 %v2454, %v2453
      %v2479 = vpack.c.b16 %v2456, %v2455
      %v2480 = vpack.c.b16 %v2458, %v2457
      %v2481 = vpack.c.b16 %v2460, %v2459
      %v2482 = vpack.c.b16 %v2462, %v2461
      %v2483 = vpack.c.b16 %v2464, %v2463
      %v2484 = vpack.c.b16 %v2466, %v2465
      %v2485 = vpack.c.b16 %v2468, %v2467
      %v2486 = vpack.c.b16 %v2470, %v2469
      %vm2487 = vsmask.f32 7424
      %v2489 = vshll.u32 %v2471, 16
      %v2491 = vrot.slane %v2489, 1
      %v2492 = vshrl.u32 %v2471, 16
      %v2494 = vor.u32 %v2492, %v2491
      %v2496 = vshll.u32 %v2472, 16
      %v2498 = vrot.slane %v2496, 1
      %v2499 = vsel %vm2487, %v2494, %v2498
      %v2500 = vshrl.u32 %v2472, 16
      %v2502 = vor.u32 %v2500, %v2498
      %v2504 = vshll.u32 %v2473, 16
      %v2506 = vrot.slane %v2504, 1
      %v2507 = vsel %vm2487, %v2502, %v2506
      %v2508 = vshrl.u32 %v2473, 16
      %v2510 = vor.u32 %v2508, %v2506
      %v2512 = vshll.u32 %v2474, 16
      %v2514 = vrot.slane %v2512, 1
      %v2515 = vsel %vm2487, %v2510, %v2514
      %v2516 = vshrl.u32 %v2474, 16
      %v2518 = vor.u32 %v2516, %v2514
      %v2520 = vshll.u32 %v2475, 16
      %v2522 = vrot.slane %v2520, 1
      %v2523 = vsel %vm2487, %v2518, %v2522
      %v2524 = vshrl.u32 %v2475, 16
      %v2526 = vor.u32 %v2524, %v2522
      %v2528 = vshll.u32 %v2476, 16
      %v2530 = vrot.slane %v2528, 1
      %v2531 = vsel %vm2487, %v2526, %v2530
      %v2532 = vshrl.u32 %v2476, 16
      %v2534 = vor.u32 %v2532, %v2530
      %v2536 = vshll.u32 %v2477, 16
      %v2538 = vrot.slane %v2536, 1
      %v2539 = vsel %vm2487, %v2534, %v2538
      %v2540 = vshrl.u32 %v2477, 16
      %v2542 = vor.u32 %v2540, %v2538
      %v2544 = vshll.u32 %v2478, 16
      %v2546 = vrot.slane %v2544, 1
      %v2547 = vsel %vm2487, %v2542, %v2546
      %v2548 = vshrl.u32 %v2478, 16
      %v2550 = vor.u32 %v2548, %v2546
      %v2552 = vshll.u32 %v2479, 16
      %v2554 = vrot.slane %v2552, 1
      %v2555 = vsel %vm2487, %v2550, %v2554
      %v2556 = vshrl.u32 %v2479, 16
      %v2558 = vor.u32 %v2556, %v2554
      %v2560 = vshll.u32 %v2480, 16
      %v2562 = vrot.slane %v2560, 1
      %v2563 = vsel %vm2487, %v2558, %v2562
      %v2564 = vshrl.u32 %v2480, 16
      %v2566 = vor.u32 %v2564, %v2562
      %v2568 = vshll.u32 %v2481, 16
      %v2570 = vrot.slane %v2568, 1
      %v2571 = vsel %vm2487, %v2566, %v2570
      %v2572 = vshrl.u32 %v2481, 16
      %v2574 = vor.u32 %v2572, %v2570
      %v2576 = vshll.u32 %v2482, 16
      %v2578 = vrot.slane %v2576, 1
      %v2579 = vsel %vm2487, %v2574, %v2578
      %v2580 = vshrl.u32 %v2482, 16
      %v2582 = vor.u32 %v2580, %v2578
      %v2584 = vshll.u32 %v2483, 16
      %v2586 = vrot.slane %v2584, 1
      %v2587 = vsel %vm2487, %v2582, %v2586
      %v2588 = vshrl.u32 %v2483, 16
      %v2590 = vor.u32 %v2588, %v2586
      %v2592 = vshll.u32 %v2484, 16
      %v2594 = vrot.slane %v2592, 1
      %v2595 = vsel %vm2487, %v2590, %v2594
      %v2596 = vshrl.u32 %v2484, 16
      %v2598 = vor.u32 %v2596, %v2594
      %v2600 = vshll.u32 %v2485, 16
      %v2602 = vrot.slane %v2600, 1
      %v2603 = vsel %vm2487, %v2598, %v2602
      %v2604 = vshrl.u32 %v2485, 16
      %v2606 = vor.u32 %v2604, %v2602
      %v2608 = vshll.u32 %v2486, 16
      %v2610 = vrot.slane %v2608, 1
      %v2611 = vsel %vm2487, %v2606, %v2610
      %v2612 = vshrl.u32 %v2486, 16
      %v2614 = vor.u32 %v2612, %v2610
      %vm2615 = vcmp.ne.s16.totalorder %v2491, 0
      %vm2616 = vcmp.ne.s16.totalorder %v2499, 0
      %vm2617 = vcmp.ne.s16.totalorder %v2507, 0
      %vm2618 = vcmp.ne.s16.totalorder %v2515, 0
      %vm2619 = vcmp.ne.s16.totalorder %v2523, 0
      %vm2620 = vcmp.ne.s16.totalorder %v2531, 0
      %vm2621 = vcmp.ne.s16.totalorder %v2539, 0
      %vm2622 = vcmp.ne.s16.totalorder %v2547, 0
      %vm2623 = vcmp.ne.s16.totalorder %v2555, 0
      %vm2624 = vcmp.ne.s16.totalorder %v2563, 0
      %vm2625 = vcmp.ne.s16.totalorder %v2571, 0
      %vm2626 = vcmp.ne.s16.totalorder %v2579, 0
      %vm2627 = vcmp.ne.s16.totalorder %v2587, 0
      %vm2628 = vcmp.ne.s16.totalorder %v2595, 0
      %vm2629 = vcmp.ne.s16.totalorder %v2603, 0
      %vm2630 = vcmp.ne.s16.totalorder %v2611, 0
      %vm2631 = vcmp.ne.s16.totalorder %v2614, 0
      %v2632 = vsel %vm2615, %v2294, 0
      %v2633 = vsel %vm2616, %v2295, 0
      %v2634 = vsel %vm2617, %v2296, 0
      %v2635 = vsel %vm2618, %v2297, 0
      %v2636 = vsel %vm2619, %v2298, 0
      %v2637 = vsel %vm2620, %v2299, 0
      %v2638 = vsel %vm2621, %v2300, 0
      %v2639 = vsel %vm2622, %v2301, 0
      %v2640 = vsel %vm2623, %v2302, 0
      %v2641 = vsel %vm2624, %v2303, 0
      %v2642 = vsel %vm2625, %v2304, 0
      %v2643 = vsel %vm2626, %v2305, 0
      %v2644 = vsel %vm2627, %v2306, 0
      %v2645 = vsel %vm2628, %v2307, 0
      %v2646 = vsel %vm2629, %v2308, 0
      %v2647 = vsel %vm2630, %v2309, 0
      %v2648 = vsel %vm2631, %v2310, 0
      %v2649 = vld [vmem:[%s8] sm:$0xf]
      %v2650 = vld [vmem:[%s8 + $0x4] sm:$0xf]
      %v2651 = vld [vmem:[%s8 + $0x8] sm:$0xf]
      %v2652 = vld [vmem:[%s8 + $0xc] sm:$0xf]
      %v2653 = vld [vmem:[%s8 + $0x10] sm:$0xf]
      %v2654 = vld [vmem:[%s8 + $0x14] sm:$0xf]
      %v2655 = vld [vmem:[%s8 + $0x18] sm:$0xf]
      %v2656 = vld [vmem:[%s8 + $0x1c] sm:$0xf]
      %v2657 = vld [vmem:[%s8 + $0x20] sm:$0xf]
      %v2658 = vld [vmem:[%s8 + $0x24] sm:$0xf]
      %v2659 = vld [vmem:[%s8 + $0x28] sm:$0xf]
      %v2660 = vld [vmem:[%s8 + $0x2c] sm:$0xf]
      %v2661 = vld [vmem:[%s8 + $0x30] sm:$0xf]
      %v2662 = vld [vmem:[%s8 + $0x34] sm:$0xf]
      %v2663 = vld [vmem:[%s8 + $0x38] sm:$0xf]
      %v2664 = vld [vmem:[%s8 + $0x3c] sm:$0xf]
      %s2665 = scalar_lea.vmem %s8, 64
      %v2666 = vld [vmem:[%s2665] sm:$0xf]
      %v2667 = vld [vmem:[%s2665 + $0x4] sm:$0xf]
      %v2668 = vld [vmem:[%s2665 + $0x8] sm:$0xf]
      %v2669 = vld [vmem:[%s2665 + $0xc] sm:$0xf]
      %v2670 = vld [vmem:[%s2665 + $0x10] sm:$0xf]
      %v2671 = vld [vmem:[%s2665 + $0x14] sm:$0xf]
      %v2672 = vld [vmem:[%s2665 + $0x18] sm:$0xf]
      %v2673 = vld [vmem:[%s2665 + $0x1c] sm:$0xf]
      %v2674 = vld [vmem:[%s2665 + $0x20] sm:$0xf]
      %v2675 = vld [vmem:[%s2665 + $0x24] sm:$0xf]
      %v2676 = vld [vmem:[%s2665 + $0x28] sm:$0xf]
      %v2677 = vld [vmem:[%s2665 + $0x2c] sm:$0xf]
      %v2678 = vld [vmem:[%s2665 + $0x30] sm:$0xf]
      %v2679 = vld [vmem:[%s2665 + $0x34] sm:$0xf]
      %v2680 = vld [vmem:[%s2665 + $0x38] sm:$0xf]
      %v2681 = vld [vmem:[%s2665 + $0x3c] sm:$0xf]
      %v2698 = vunpack.c.l.b16 %v2666
      %v2699 = vunpack.c.l.b16 %v2667
      %v2700 = vunpack.c.l.b16 %v2668
      %v2701 = vunpack.c.l.b16 %v2669
      %v2702 = vunpack.c.l.b16 %v2670
      %v2703 = vunpack.c.l.b16 %v2671
      %v2704 = vunpack.c.l.b16 %v2672
      %v2705 = vunpack.c.l.b16 %v2673
      %v2706 = vunpack.c.l.b16 %v2674
      %v2707 = vunpack.c.l.b16 %v2675
      %v2708 = vunpack.c.l.b16 %v2676
      %v2709 = vunpack.c.l.b16 %v2677
      %v2710 = vunpack.c.l.b16 %v2678
      %v2711 = vunpack.c.l.b16 %v2679
      %v2712 = vunpack.c.l.b16 %v2680
      %v2713 = vunpack.c.l.b16 %v2681
      %v2714 = vpack.c.b16 %v2699, %v2698
      %v2715 = vpack.c.b16 %v2701, %v2700
      %v2716 = vpack.c.b16 %v2703, %v2702
      %v2717 = vpack.c.b16 %v2705, %v2704
      %v2718 = vpack.c.b16 %v2707, %v2706
      %v2719 = vpack.c.b16 %v2709, %v2708
      %v2720 = vpack.c.b16 %v2711, %v2710
      %v2721 = vpack.c.b16 %v2713, %v2712
      %2730 = vmatprep.subr.bf16.mxu0 0
      %2731 = vmatpush1.bf16.msra.mxu0 %v2714
      %2732 = vmatprep.subr.bf16.mxu0 0
      %2733 = vmatpush1.bf16.msra.mxu0 %v2715
      %2734 = vmatprep.subr.bf16.mxu0 0
      %2735 = vmatpush1.bf16.msra.mxu0 %v2716
      %2736 = vmatprep.subr.bf16.mxu0 0
      %2737 = vmatpush1.bf16.msra.mxu0 %v2717
      %2738 = vmatprep.subr.bf16.mxu0 0
      %2739 = vmatpush1.bf16.msra.mxu0 %v2718
      %2740 = vmatprep.subr.bf16.mxu0 0
      %2741 = vmatpush1.bf16.msra.mxu0 %v2719
      %2742 = vmatprep.subr.bf16.mxu0 0
      %2743 = vmatpush1.bf16.msra.mxu0 %v2720
      %2744 = vmatprep.subr.bf16.mxu0 0
      %2745 = vmatpush1.bf16.msra.mxu0 %v2721
      %2746 = vmatprep.subr.bf16.mxu0 0
      %2747 = vmatpush1.bf16.msra.mxu0 0
      %2748 = vmatprep.subr.bf16.mxu0 0
      %2749 = vmatpush1.bf16.msra.mxu0 0
      %2750 = vmatprep.subr.bf16.mxu0 0
      %2751 = vmatpush1.bf16.msra.mxu0 0
      %2752 = vmatprep.subr.bf16.mxu0 0
      %2753 = vmatpush1.bf16.msra.mxu0 0
      %2754 = vmatprep.subr.bf16.mxu0 0
      %2755 = vmatpush1.bf16.msra.mxu0 0
      %2756 = vmatprep.subr.bf16.mxu0 0
      %2757 = vmatpush1.bf16.msra.mxu0 0
      %2758 = vmatprep.subr.bf16.mxu0 0
      %2759 = vmatpush1.bf16.msra.mxu0 0
      %2760 = vmatprep.subr.bf16.mxu0 0
      %2761 = vmatpush1.bf16.msra.mxu0 0
      %2762 = vmatprep.mubr.bf16.mxu0 0
      %2763 = vmatmul.mubr.bf16.gmra.mrb[0].mxu0 %v2295
      %v2764 = vpop.f32.mrb[0].mxu0
      %v2765 = vadd.f32 0.0, %v2764
      %v2766 = vpop.f32.mrb[0].mxu0
      %v2767 = vpop.f32.mrb[0].mxu0
      %v2768 = vadd.f32 0.0, %v2767
      %v2769 = vpop.f32.mrb[0].mxu0
      %2770 = vmatprep.mubr.bf16.mxu0 0
      %2771 = vmatmul.mubr.bf16.gmra.mrb[0].mxu0 %v2296
      %v2772 = vpop.f32.mrb[0].mxu0
      %v2773 = vadd.f32 0.0, %v2772
      %v2774 = vpop.f32.mrb[0].mxu0
      %v2775 = vpop.f32.mrb[0].mxu0
      %v2776 = vadd.f32 0.0, %v2775
      %v2777 = vpop.f32.mrb[0].mxu0
      %2778 = vmatprep.mubr.bf16.mxu0 0
      %2779 = vmatmul.mubr.bf16.gmra.mrb[0].mxu0 %v2297
      %v2780 = vpop.f32.mrb[0].mxu0
      %v2781 = vadd.f32 0.0, %v2780
      %v2782 = vpop.f32.mrb[0].mxu0
      %v2783 = vpop.f32.mrb[0].mxu0
      %v2784 = vadd.f32 0.0, %v2783
      %v2785 = vpop.f32.mrb[0].mxu0
      %2786 = vmatprep.mubr.bf16.mxu0 0
      %2787 = vmatmul.mubr.bf16.gmra.mrb[0].mxu0 %v2298
      %v2788 = vpop.f32.mrb[0].mxu0
      %v2789 = vadd.f32 0.0, %v2788
      %v2790 = vpop.f32.mrb[0].mxu0
      %v2791 = vpop.f32.mrb[0].mxu0
      %v2792 = vadd.f32 0.0, %v2791
      %v2793 = vpop.f32.mrb[0].mxu0
      %2794 = vmatprep.mubr.bf16.mxu0 0
      %2795 = vmatmul.mubr.bf16.gmra.mrb[0].mxu0 %v2299
      %v2796 = vpop.f32.mrb[0].mxu0
      %v2797 = vadd.f32 0.0, %v2796
      %v2798 = vpop.f32.mrb[0].mxu0
      %v2799 = vpop.f32.mrb[0].mxu0
      %v2800 = vadd.f32 0.0, %v2799
      %v2801 = vpop.f32.mrb[0].mxu0
      %2802 = vmatprep.mubr.bf16.mxu0 0
      %2803 = vmatmul.mubr.bf16.gmra.mrb[0].mxu0 %v2300
      %v2804 = vpop.f32.mrb[0].mxu0
      %v2805 = vadd.f32 0.0, %v2804
      %v2806 = vpop.f32.mrb[0].mxu0
      %v2807 = vpop.f32.mrb[0].mxu0
      %v2808 = vadd.f32 0.0, %v2807
      %v2809 = vpop.f32.mrb[0].mxu0
      %2810 = vmatprep.mubr.bf16.mxu0 0
      %2811 = vmatmul.mubr.bf16.gmra.mrb[0].mxu0 %v2301
      %v2812 = vpop.f32.mrb[0].mxu0
      %v2813 = vadd.f32 0.0, %v2812
      %v2814 = vpop.f32.mrb[0].mxu0
      %v2815 = vpop.f32.mrb[0].mxu0
      %v2816 = vadd.f32 0.0, %v2815
      %v2817 = vpop.f32.mrb[0].mxu0
      %2818 = vmatprep.mubr.bf16.mxu0 0
      %2819 = vmatmul.mubr.bf16.gmra.mrb[0].mxu0 %v2302
      %v2820 = vpop.f32.mrb[0].mxu0
      %v2821 = vadd.f32 0.0, %v2820
      %v2822 = vpop.f32.mrb[0].mxu0
      %v2823 = vpop.f32.mrb[0].mxu0
      %v2824 = vadd.f32 0.0, %v2823
      %v2825 = vpop.f32.mrb[0].mxu0
      %2826 = vmatprep.mubr.bf16.mxu0 0
      %2827 = vmatmul.mubr.bf16.gmra.mrb[0].mxu0 %v2303
      %v2828 = vpop.f32.mrb[0].mxu0
      %v2829 = vadd.f32 0.0, %v2828
      %v2830 = vpop.f32.mrb[0].mxu0
      %v2831 = vpop.f32.mrb[0].mxu0
      %v2832 = vadd.f32 0.0, %v2831
      %v2833 = vpop.f32.mrb[0].mxu0
      %2834 = vmatprep.mubr.bf16.mxu0 0
      %2835 = vmatmul.mubr.bf16.gmra.mrb[0].mxu0 %v2304
      %v2836 = vpop.f32.mrb[0].mxu0
      %v2837 = vadd.f32 0.0, %v2836
      %v2838 = vpop.f32.mrb[0].mxu0
      %v2839 = vpop.f32.mrb[0].mxu0
      %v2840 = vadd.f32 0.0, %v2839
      %v2841 = vpop.f32.mrb[0].mxu0
      %2842 = vmatprep.mubr.bf16.mxu0 0
      %2843 = vmatmul.mubr.bf16.gmra.mrb[0].mxu0 %v2305
      %v2844 = vpop.f32.mrb[0].mxu0
      %v2845 = vadd.f32 0.0, %v2844
      %v2846 = vpop.f32.mrb[0].mxu0
      %v2847 = vpop.f32.mrb[0].mxu0
      %v2848 = vadd.f32 0.0, %v2847
      %v2849 = vpop.f32.mrb[0].mxu0
      %2850 = vmatprep.mubr.bf16.mxu0 0
      %2851 = vmatmul.mubr.bf16.gmra.mrb[0].mxu0 %v2306
      %v2852 = vpop.f32.mrb[0].mxu0
      %v2853 = vadd.f32 0.0, %v2852
      %v2854 = vpop.f32.mrb[0].mxu0
      %v2855 = vpop.f32.mrb[0].mxu0
      %v2856 = vadd.f32 0.0, %v2855
      %v2857 = vpop.f32.mrb[0].mxu0
      %2858 = vmatprep.mubr.bf16.mxu0 0
      %2859 = vmatmul.mubr.bf16.gmra.mrb[0].mxu0 %v2307
      %v2860 = vpop.f32.mrb[0].mxu0
      %v2861 = vadd.f32 0.0, %v2860
      %v2862 = vpop.f32.mrb[0].mxu0
      %v2863 = vpop.f32.mrb[0].mxu0
      %v2864 = vadd.f32 0.0, %v2863
      %v2865 = vpop.f32.mrb[0].mxu0
      %2866 = vmatprep.mubr.bf16.mxu0 0
      %2867 = vmatmul.mubr.bf16.gmra.mrb[0].mxu0 %v2308
      %v2868 = vpop.f32.mrb[0].mxu0
      %v2869 = vadd.f32 0.0, %v2868
      %v2870 = vpop.f32.mrb[0].mxu0
      %v2871 = vpop.f32.mrb[0].mxu0
      %v2872 = vadd.f32 0.0, %v2871
      %v2873 = vpop.f32.mrb[0].mxu0
      %2874 = vmatprep.mubr.bf16.mxu0 0
      %2875 = vmatmul.mubr.bf16.gmra.mrb[0].mxu0 %v2309
      %v2876 = vpop.f32.mrb[0].mxu0
      %v2877 = vadd.f32 0.0, %v2876
      %v2878 = vpop.f32.mrb[0].mxu0
      %v2879 = vpop.f32.mrb[0].mxu0
      %v2880 = vadd.f32 0.0, %v2879
      %v2881 = vpop.f32.mrb[0].mxu0
      %2882 = vmatprep.mubr.bf16.mxu0 0
      %2883 = vmatmul.mubr.bf16.gmra.mrb[0].mxu0 %v2310
      %v2884 = vpop.f32.mrb[0].mxu0
      %v2885 = vadd.f32 0.0, %v2884
      %v2886 = vpop.f32.mrb[0].mxu0
      %v2887 = vpop.f32.mrb[0].mxu0
      %v2888 = vadd.f32 0.0, %v2887
      %v2889 = vpop.f32.mrb[0].mxu0
      %2890 = vdwg.mxu0
      %vm2891 = vsmask.f32 256
      %v2893 = vshrl.u32 %v2632, 16
      %v2895 = vrot.slane %v2893, 7
      %v2897 = vshrl.u32 %v2633, 16
      %v2899 = vrot.slane %v2897, 7
      %v2900 = vshll.u32 %v2633, 16
      %v2902 = vor.u32 %v2899, %v2900
      %v2903 = vsel %vm2891, %v2895, %v2902
      %v2905 = vshrl.u32 %v2634, 16
      %v2907 = vrot.slane %v2905, 7
      %v2908 = vshll.u32 %v2634, 16
      %v2910 = vor.u32 %v2907, %v2908
      %v2911 = vsel %vm2891, %v2899, %v2910
      %v2913 = vshrl.u32 %v2635, 16
      %v2915 = vrot.slane %v2913, 7
      %v2916 = vshll.u32 %v2635, 16
      %v2918 = vor.u32 %v2915, %v2916
      %v2919 = vsel %vm2891, %v2907, %v2918
      %v2921 = vshrl.u32 %v2636, 16
      %v2923 = vrot.slane %v2921, 7
      %v2924 = vshll.u32 %v2636, 16
      %v2926 = vor.u32 %v2923, %v2924
      %v2927 = vsel %vm2891, %v2915, %v2926
      %v2929 = vshrl.u32 %v2637, 16
      %v2931 = vrot.slane %v2929, 7
      %v2932 = vshll.u32 %v2637, 16
      %v2934 = vor.u32 %v2931, %v2932
      %v2935 = vsel %vm2891, %v2923, %v2934
      %v2937 = vshrl.u32 %v2638, 16
      %v2939 = vrot.slane %v2937, 7
      %v2940 = vshll.u32 %v2638, 16
      %v2942 = vor.u32 %v2939, %v2940
      %v2943 = vsel %vm2891, %v2931, %v2942
      %v2945 = vshrl.u32 %v2639, 16
      %v2947 = vrot.slane %v2945, 7
      %v2948 = vshll.u32 %v2639, 16
      %v2950 = vor.u32 %v2947, %v2948
      %v2951 = vsel %vm2891, %v2939, %v2950
      %v2953 = vshrl.u32 %v2640, 16
      %v2955 = vrot.slane %v2953, 7
      %v2956 = vshll.u32 %v2640, 16
      %v2958 = vor.u32 %v2955, %v2956
      %v2959 = vsel %vm2891, %v2947, %v2958
      %v2961 = vshrl.u32 %v2641, 16
      %v2963 = vrot.slane %v2961, 7
      %v2964 = vshll.u32 %v2641, 16
      %v2966 = vor.u32 %v2963, %v2964
      %v2967 = vsel %vm2891, %v2955, %v2966
      %v2969 = vshrl.u32 %v2642, 16
      %v2971 = vrot.slane %v2969, 7
      %v2972 = vshll.u32 %v2642, 16
      %v2974 = vor.u32 %v2971, %v2972
      %v2975 = vsel %vm2891, %v2963, %v2974
      %v2977 = vshrl.u32 %v2643, 16
      %v2979 = vrot.slane %v2977, 7
      %v2980 = vshll.u32 %v2643, 16
      %v2982 = vor.u32 %v2979, %v2980
      %v2983 = vsel %vm2891, %v2971, %v2982
      %v2985 = vshrl.u32 %v2644, 16
      %v2987 = vrot.slane %v2985, 7
      %v2988 = vshll.u32 %v2644, 16
      %v2990 = vor.u32 %v2987, %v2988
      %v2991 = vsel %vm2891, %v2979, %v2990
      %v2993 = vshrl.u32 %v2645, 16
      %v2995 = vrot.slane %v2993, 7
      %v2996 = vshll.u32 %v2645, 16
      %v2998 = vor.u32 %v2995, %v2996
      %v2999 = vsel %vm2891, %v2987, %v2998
      %v3001 = vshrl.u32 %v2646, 16
      %v3003 = vrot.slane %v3001, 7
      %v3004 = vshll.u32 %v2646, 16
      %v3006 = vor.u32 %v3003, %v3004
      %v3007 = vsel %vm2891, %v2995, %v3006
      %v3009 = vshrl.u32 %v2647, 16
      %v3011 = vrot.slane %v3009, 7
      %v3012 = vshll.u32 %v2647, 16
      %v3014 = vor.u32 %v3011, %v3012
      %v3015 = vsel %vm2891, %v3003, %v3014
      %v3017 = vshrl.u32 %v2648, 16
      %v3019 = vrot.slane %v3017, 7
      %v3020 = vshll.u32 %v2648, 16
      %v3022 = vor.u32 %v3019, %v3020
      %v3023 = vsel %vm2891, %v3011, %v3022
      %v3056 = vunpack.c.l.b16 %v2649
      %v3057 = vunpack.c.l.b16 %v2650
      %v3058 = vunpack.c.l.b16 %v2651
      %v3059 = vunpack.c.l.b16 %v2652
      %v3060 = vunpack.c.l.b16 %v2653
      %v3061 = vunpack.c.l.b16 %v2654
      %v3062 = vunpack.c.l.b16 %v2655
      %v3063 = vunpack.c.l.b16 %v2656
      %v3064 = vunpack.c.l.b16 %v2657
      %v3065 = vunpack.c.l.b16 %v2658
      %v3066 = vunpack.c.l.b16 %v2659
      %v3067 = vunpack.c.l.b16 %v2660
      %v3068 = vunpack.c.l.b16 %v2661
      %v3069 = vunpack.c.l.b16 %v2662
      %v3070 = vunpack.c.l.b16 %v2663
      %v3071 = vunpack.c.l.b16 %v2664
      %v3072 = vpack.c.b16 %v3057, %v3056
      %v3073 = vpack.c.b16 %v3059, %v3058
      %v3074 = vpack.c.b16 %v3061, %v3060
      %v3075 = vpack.c.b16 %v3063, %v3062
      %v3076 = vpack.c.b16 %v3065, %v3064
      %v3077 = vpack.c.b16 %v3067, %v3066
      %v3078 = vpack.c.b16 %v3069, %v3068
      %v3079 = vpack.c.b16 %v3071, %v3070
      %3088 = vmatprep.subr.bf16.mxu0 0
      %3089 = vmatpush1.bf16.msra.mxu0 %v3072
      %3090 = vmatprep.subr.bf16.mxu0 0
      %3091 = vmatpush1.bf16.msra.mxu0 %v3073
      %3092 = vmatprep.subr.bf16.mxu0 0
      %3093 = vmatpush1.bf16.msra.mxu0 %v3074
      %3094 = vmatprep.subr.bf16.mxu0 0
      %3095 = vmatpush1.bf16.msra.mxu0 %v3075
      %3096 = vmatprep.subr.bf16.mxu0 0
      %3097 = vmatpush1.bf16.msra.mxu0 %v3076
      %3098 = vmatprep.subr.bf16.mxu0 0
      %3099 = vmatpush1.bf16.msra.mxu0 %v3077
      %3100 = vmatprep.subr.bf16.mxu0 0
      %3101 = vmatpush1.bf16.msra.mxu0 %v3078
      %3102 = vmatprep.subr.bf16.mxu0 0
      %3103 = vmatpush1.bf16.msra.mxu0 %v3079
      %3104 = vmatprep.subr.bf16.mxu0 0
      %3105 = vmatpush1.bf16.msra.mxu0 0
      %3106 = vmatprep.subr.bf16.mxu0 0
      %3107 = vmatpush1.bf16.msra.mxu0 0
      %3108 = vmatprep.subr.bf16.mxu0 0
      %3109 = vmatpush1.bf16.msra.mxu0 0
      %3110 = vmatprep.subr.bf16.mxu0 0
      %3111 = vmatpush1.bf16.msra.mxu0 0
      %3112 = vmatprep.subr.bf16.mxu0 0
      %3113 = vmatpush1.bf16.msra.mxu0 0
      %3114 = vmatprep.subr.bf16.mxu0 0
      %3115 = vmatpush1.bf16.msra.mxu0 0
      %3116 = vmatprep.subr.bf16.mxu0 0
      %3117 = vmatpush1.bf16.msra.mxu0 0
      %3118 = vmatprep.subr.bf16.mxu0 0
      %3119 = vmatpush1.bf16.msra.mxu0 0
      %3120 = vmatprep.mubr.bf16.mxu0 0
      %3121 = vmatmul.mubr.bf16.gmra.mrb[0].mxu0 %v2903
      %v3122 = vpop.f32.mrb[0].mxu0
      %v3123 = vadd.f32 %v2765, %v3122
      %v3124 = vpop.f32.mrb[0].mxu0
      %v3125 = vpop.f32.mrb[0].mxu0
      %v3126 = vadd.f32 %v2768, %v3125
      %v3127 = vpop.f32.mrb[0].mxu0
      %3128 = vmatprep.mubr.bf16.mxu0 0
      %3129 = vmatmul.mubr.bf16.gmra.mrb[0].mxu0 %v2911
      %v3130 = vpop.f32.mrb[0].mxu0
      %v3131 = vadd.f32 %v2773, %v3130
      %v3132 = vpop.f32.mrb[0].mxu0
      %v3133 = vpop.f32.mrb[0].mxu0
      %v3134 = vadd.f32 %v2776, %v3133
      %v3135 = vpop.f32.mrb[0].mxu0
      %3136 = vmatprep.mubr.bf16.mxu0 0
      %3137 = vmatmul.mubr.bf16.gmra.mrb[0].mxu0 %v2919
      %v3138 = vpop.f32.mrb[0].mxu0
      %v3139 = vadd.f32 %v2781, %v3138
      %v3140 = vpop.f32.mrb[0].mxu0
      %v3141 = vpop.f32.mrb[0].mxu0
      %v3142 = vadd.f32 %v2784, %v3141
      %v3143 = vpop.f32.mrb[0].mxu0
      %3144 = vmatprep.mubr.bf16.mxu0 0
      %3145 = vmatmul.mubr.bf16.gmra.mrb[0].mxu0 %v2927
      %v3146 = vpop.f32.mrb[0].mxu0
      %v3147 = vadd.f32 %v2789, %v3146
      %v3148 = vpop.f32.mrb[0].mxu0
      %v3149 = vpop.f32.mrb[0].mxu0
      %v3150 = vadd.f32 %v2792, %v3149
      %v3151 = vpop.f32.mrb[0].mxu0
      %3152 = vmatprep.mubr.bf16.mxu0 0
      %3153 = vmatmul.mubr.bf16.gmra.mrb[0].mxu0 %v2935
      %v3154 = vpop.f32.mrb[0].mxu0
      %v3155 = vadd.f32 %v2797, %v3154
      %v3156 = vpop.f32.mrb[0].mxu0
      %v3157 = vpop.f32.mrb[0].mxu0
      %v3158 = vadd.f32 %v2800, %v3157
      %v3159 = vpop.f32.mrb[0].mxu0
      %3160 = vmatprep.mubr.bf16.mxu0 0
      %3161 = vmatmul.mubr.bf16.gmra.mrb[0].mxu0 %v2943
      %v3162 = vpop.f32.mrb[0].mxu0
      %v3163 = vadd.f32 %v2805, %v3162
      %v3164 = vpop.f32.mrb[0].mxu0
      %v3165 = vpop.f32.mrb[0].mxu0
      %v3166 = vadd.f32 %v2808, %v3165
      %v3167 = vpop.f32.mrb[0].mxu0
      %3168 = vmatprep.mubr.bf16.mxu0 0
      %3169 = vmatmul.mubr.bf16.gmra.mrb[0].mxu0 %v2951
      %v3170 = vpop.f32.mrb[0].mxu0
      %v3171 = vadd.f32 %v2813, %v3170
      %v3172 = vpop.f32.mrb[0].mxu0
      %v3173 = vpop.f32.mrb[0].mxu0
      %v3174 = vadd.f32 %v2816, %v3173
      %v3175 = vpop.f32.mrb[0].mxu0
      %3176 = vmatprep.mubr.bf16.mxu0 0
      %3177 = vmatmul.mubr.bf16.gmra.mrb[0].mxu0 %v2959
      %v3178 = vpop.f32.mrb[0].mxu0
      %v3179 = vadd.f32 %v2821, %v3178
      %v3180 = vpop.f32.mrb[0].mxu0
      %v3181 = vpop.f32.mrb[0].mxu0
      %v3182 = vadd.f32 %v2824, %v3181
      %v3183 = vpop.f32.mrb[0].mxu0
      %3184 = vmatprep.mubr.bf16.mxu0 0
      %3185 = vmatmul.mubr.bf16.gmra.mrb[0].mxu0 %v2967
      %v3186 = vpop.f32.mrb[0].mxu0
      %v3187 = vadd.f32 %v2829, %v3186
      %v3188 = vpop.f32.mrb[0].mxu0
      %v3189 = vpop.f32.mrb[0].mxu0
      %v3190 = vadd.f32 %v2832, %v3189
      %v3191 = vpop.f32.mrb[0].mxu0
      %3192 = vmatprep.mubr.bf16.mxu0 0
      %3193 = vmatmul.mubr.bf16.gmra.mrb[0].mxu0 %v2975
      %v3194 = vpop.f32.mrb[0].mxu0
      %v3195 = vadd.f32 %v2837, %v3194
      %v3196 = vpop.f32.mrb[0].mxu0
      %v3197 = vpop.f32.mrb[0].mxu0
      %v3198 = vadd.f32 %v2840, %v3197
      %v3199 = vpop.f32.mrb[0].mxu0
      %3200 = vmatprep.mubr.bf16.mxu0 0
      %3201 = vmatmul.mubr.bf16.gmra.mrb[0].mxu0 %v2983
      %v3202 = vpop.f32.mrb[0].mxu0
      %v3203 = vadd.f32 %v2845, %v3202
      %v3204 = vpop.f32.mrb[0].mxu0
      %v3205 = vpop.f32.mrb[0].mxu0
      %v3206 = vadd.f32 %v2848, %v3205
      %v3207 = vpop.f32.mrb[0].mxu0
      %3208 = vmatprep.mubr.bf16.mxu0 0
      %3209 = vmatmul.mubr.bf16.gmra.mrb[0].mxu0 %v2991
      %v3210 = vpop.f32.mrb[0].mxu0
      %v3211 = vadd.f32 %v2853, %v3210
      %v3212 = vpop.f32.mrb[0].mxu0
      %v3213 = vpop.f32.mrb[0].mxu0
      %v3214 = vadd.f32 %v2856, %v3213
      %v3215 = vpop.f32.mrb[0].mxu0
      %3216 = vmatprep.mubr.bf16.mxu0 0
      %3217 = vmatmul.mubr.bf16.gmra.mrb[0].mxu0 %v2999
      %v3218 = vpop.f32.mrb[0].mxu0
      %v3219 = vadd.f32 %v2861, %v3218
      %v3220 = vpop.f32.mrb[0].mxu0
      %v3221 = vpop.f32.mrb[0].mxu0
      %v3222 = vadd.f32 %v2864, %v3221
      %v3223 = vpop.f32.mrb[0].mxu0
      %3224 = vmatprep.mubr.bf16.mxu0 0
      %3225 = vmatmul.mubr.bf16.gmra.mrb[0].mxu0 %v3007
      %v3226 = vpop.f32.mrb[0].mxu0
      %v3227 = vadd.f32 %v2869, %v3226
      %v3228 = vpop.f32.mrb[0].mxu0
      %v3229 = vpop.f32.mrb[0].mxu0
      %v3230 = vadd.f32 %v2872, %v3229
      %v3231 = vpop.f32.mrb[0].mxu0
      %3232 = vmatprep.mubr.bf16.mxu0 0
      %3233 = vmatmul.mubr.bf16.gmra.mrb[0].mxu0 %v3015
      %v3234 = vpop.f32.mrb[0].mxu0
      %v3235 = vadd.f32 %v2877, %v3234
      %v3236 = vpop.f32.mrb[0].mxu0
      %v3237 = vpop.f32.mrb[0].mxu0
      %v3238 = vadd.f32 %v2880, %v3237
      %v3239 = vpop.f32.mrb[0].mxu0
      %3240 = vmatprep.mubr.bf16.mxu0 0
      %3241 = vmatmul.mubr.bf16.gmra.mrb[0].mxu0 %v3023
      %v3242 = vpop.f32.mrb[0].mxu0
      %v3243 = vadd.f32 %v2885, %v3242
      %v3244 = vpop.f32.mrb[0].mxu0
      %v3245 = vpop.f32.mrb[0].mxu0
      %v3246 = vadd.f32 %v2888, %v3245
      %v3247 = vpop.f32.mrb[0].mxu0
      %3248 = vdwg.mxu0
      %v3249 = vld [vmem:[#allocation2 + $0x8] sm:$0xff]
      %v3250 = vld [vmem:[#allocation2 + $0x10] sm:$0xff]
      %v3251 = vld [vmem:[#allocation2 + $0x18] sm:$0xff]
      %v3252 = vld [vmem:[#allocation2 + $0x20] sm:$0xff]
      %v3253 = vld [vmem:[#allocation2 + $0x28] sm:$0xff]
      %v3254 = vld [vmem:[#allocation2 + $0x30] sm:$0xff]
      %v3255 = vld [vmem:[#allocation2 + $0x38] sm:$0xff]
      %v3256 = vld [vmem:[#allocation2 + $0x40] sm:$0xff]
      %v3257 = vld [vmem:[#allocation2 + $0x48] sm:$0xff]
      %v3258 = vld [vmem:[#allocation2 + $0x50] sm:$0xff]
      %v3259 = vld [vmem:[#allocation2 + $0x58] sm:$0xff]
      %v3260 = vld [vmem:[#allocation2 + $0x60] sm:$0xff]
      %v3261 = vld [vmem:[#allocation2 + $0x68] sm:$0xff]
      %v3262 = vld [vmem:[#allocation2 + $0x70] sm:$0xff]
      %v3263 = vld [vmem:[#allocation2 + $0x78] sm:$0xff]
      %v3264 = vld [vmem:[#allocation2 + $0x80] sm:$0xff]
      %v3265 = vld [vmem:[#allocation2 + $0x88] sm:$0x1]
      %v3266 = vsel %vm2262, 1, 0
      %v3267 = vsel %vm2263, 1, 0
      %v3268 = vsel %vm2264, 1, 0
      %v3269 = vsel %vm2265, 1, 0
      %v3270 = vsel %vm2266, 1, 0
      %v3271 = vsel %vm2267, 1, 0
      %v3272 = vsel %vm2268, 1, 0
      %v3273 = vsel %vm2269, 1, 0
      %v3274 = vsel %vm2270, 1, 0
      %v3275 = vsel %vm2271, 1, 0
      %v3276 = vsel %vm2272, 1, 0
      %v3277 = vsel %vm2273, 1, 0
      %v3278 = vsel %vm2274, 1, 0
      %v3279 = vsel %vm2275, 1, 0
      %v3280 = vsel %vm2276, 1, 0
      %v3281 = vsel %vm2277, 1, 0
      %v3282 = vsel %vm2278, 1, 0
      %v3283 = vsel %vm2279, 1, 0
      %v3284 = vsel %vm2280, 1, 0
      %v3285 = vsel %vm2281, 1, 0
      %v3286 = vsel %vm2282, 1, 0
      %v3287 = vsel %vm2283, 1, 0
      %v3288 = vsel %vm2284, 1, 0
      %v3289 = vsel %vm2285, 1, 0
      %v3290 = vsel %vm2286, 1, 0
      %v3291 = vsel %vm2287, 1, 0
      %v3292 = vsel %vm2288, 1, 0
      %v3293 = vsel %vm2289, 1, 0
      %v3294 = vsel %vm2290, 1, 0
      %v3295 = vsel %vm2291, 1, 0
      %v3296 = vsel %vm2292, 1, 0
      %v3297 = vsel %vm2293, 1, 0
      %vm3298 = vcmp.eq.s32.totalorder %v3266, 1
      %vm3299 = vcmp.eq.s32.totalorder %v3267, 1
      %vm3300 = vcmp.eq.s32.totalorder %v3268, 1
      %vm3301 = vcmp.eq.s32.totalorder %v3269, 1
      %vm3302 = vcmp.eq.s32.totalorder %v3270, 1
      %vm3303 = vcmp.eq.s32.totalorder %v3271, 1
      %vm3304 = vcmp.eq.s32.totalorder %v3272, 1
      %vm3305 = vcmp.eq.s32.totalorder %v3273, 1
      %vm3306 = vcmp.eq.s32.totalorder %v3274, 1
      %vm3307 = vcmp.eq.s32.totalorder %v3275, 1
      %vm3308 = vcmp.eq.s32.totalorder %v3276, 1
      %vm3309 = vcmp.eq.s32.totalorder %v3277, 1
      %vm3310 = vcmp.eq.s32.totalorder %v3278, 1
      %vm3311 = vcmp.eq.s32.totalorder %v3279, 1
      %vm3312 = vcmp.eq.s32.totalorder %v3280, 1
      %vm3313 = vcmp.eq.s32.totalorder %v3281, 1
      %vm3314 = vcmp.eq.s32.totalorder %v3282, 1
      %vm3315 = vcmp.eq.s32.totalorder %v3283, 1
      %vm3316 = vcmp.eq.s32.totalorder %v3284, 1
      %vm3317 = vcmp.eq.s32.totalorder %v3285, 1
      %vm3318 = vcmp.eq.s32.totalorder %v3286, 1
      %vm3319 = vcmp.eq.s32.totalorder %v3287, 1
      %vm3320 = vcmp.eq.s32.totalorder %v3288, 1
      %vm3321 = vcmp.eq.s32.totalorder %v3289, 1
      %vm3322 = vcmp.eq.s32.totalorder %v3290, 1
      %vm3323 = vcmp.eq.s32.totalorder %v3291, 1
      %vm3324 = vcmp.eq.s32.totalorder %v3292, 1
      %vm3325 = vcmp.eq.s32.totalorder %v3293, 1
      %vm3326 = vcmp.eq.s32.totalorder %v3294, 1
      %vm3327 = vcmp.eq.s32.totalorder %v3295, 1
      %vm3328 = vcmp.eq.s32.totalorder %v3296, 1
      %vm3329 = vcmp.eq.s32.totalorder %v3297, 1
      %vm3330 = vmpackc.low %vm3298, %vm3298
      %vm3331 = vmpackc.low %vm3299, %vm3299
      %vm3332 = vmpackc.low %vm3300, %vm3300
      %vm3333 = vmpackc.low %vm3301, %vm3301
      %vm3334 = vmpackc.low %vm3302, %vm3302
      %vm3335 = vmpackc.low %vm3303, %vm3303
      %vm3336 = vmpackc.low %vm3304, %vm3304
      %vm3337 = vmpackc.low %vm3305, %vm3305
      %vm3338 = vmpackc.low %vm3306, %vm3306
      %vm3339 = vmpackc.low %vm3307, %vm3307
      %vm3340 = vmpackc.low %vm3308, %vm3308
      %vm3341 = vmpackc.low %vm3309, %vm3309
      %vm3342 = vmpackc.low %vm3310, %vm3310
      %vm3343 = vmpackc.low %vm3311, %vm3311
      %vm3344 = vmpackc.low %vm3312, %vm3312
      %vm3345 = vmpackc.low %vm3313, %vm3313
      %vm3346 = vmpackc.low %vm3314, %vm3314
      %vm3347 = vmpackc.low %vm3315, %vm3315
      %vm3348 = vmpackc.low %vm3316, %vm3316
      %vm3349 = vmpackc.low %vm3317, %vm3317
      %vm3350 = vmpackc.low %vm3318, %vm3318
      %vm3351 = vmpackc.low %vm3319, %vm3319
      %vm3352 = vmpackc.low %vm3320, %vm3320
      %vm3353 = vmpackc.low %vm3321, %vm3321
      %vm3354 = vmpackc.low %vm3322, %vm3322
      %vm3355 = vmpackc.low %vm3323, %vm3323
      %vm3356 = vmpackc.low %vm3324, %vm3324
      %vm3357 = vmpackc.low %vm3325, %vm3325
      %vm3358 = vmpackc.low %vm3326, %vm3326
      %vm3359 = vmpackc.low %vm3327, %vm3327
      %vm3360 = vmpackc.low %vm3328, %vm3328
      %vm3361 = vmpackc.low %vm3329, %vm3329
      %v3362 = vsel %vm3330, 65537, 0
      %v3363 = vsel %vm3331, 65537, 0
      %v3364 = vsel %vm3332, 65537, 0
      %v3365 = vsel %vm3333, 65537, 0
      %v3366 = vsel %vm3334, 65537, 0
      %v3367 = vsel %vm3335, 65537, 0
      %v3368 = vsel %vm3336, 65537, 0
      %v3369 = vsel %vm3337, 65537, 0
      %v3370 = vsel %vm3338, 65537, 0
      %v3371 = vsel %vm3339, 65537, 0
      %v3372 = vsel %vm3340, 65537, 0
      %v3373 = vsel %vm3341, 65537, 0
      %v3374 = vsel %vm3342, 65537, 0
      %v3375 = vsel %vm3343, 65537, 0
      %v3376 = vsel %vm3344, 65537, 0
      %v3377 = vsel %vm3345, 65537, 0
      %v3378 = vsel %vm3346, 65537, 0
      %v3379 = vsel %vm3347, 65537, 0
      %v3380 = vsel %vm3348, 65537, 0
      %v3381 = vsel %vm3349, 65537, 0
      %v3382 = vsel %vm3350, 65537, 0
      %v3383 = vsel %vm3351, 65537, 0
      %v3384 = vsel %vm3352, 65537, 0
      %v3385 = vsel %vm3353, 65537, 0
      %v3386 = vsel %vm3354, 65537, 0
      %v3387 = vsel %vm3355, 65537, 0
      %v3388 = vsel %vm3356, 65537, 0
      %v3389 = vsel %vm3357, 65537, 0
      %v3390 = vsel %vm3358, 65537, 0
      %v3391 = vsel %vm3359, 65537, 0
      %v3392 = vsel %vm3360, 65537, 0
      %v3393 = vsel %vm3361, 65537, 0
      %v3394 = vunpack.c.l.b16 %v3362
      %v3395 = vunpack.c.l.b16 %v3363
      %v3396 = vunpack.c.l.b16 %v3364
      %v3397 = vunpack.c.l.b16 %v3365
      %v3398 = vunpack.c.l.b16 %v3366
      %v3399 = vunpack.c.l.b16 %v3367
      %v3400 = vunpack.c.l.b16 %v3368
      %v3401 = vunpack.c.l.b16 %v3369
      %v3402 = vunpack.c.l.b16 %v3370
      %v3403 = vunpack.c.l.b16 %v3371
      %v3404 = vunpack.c.l.b16 %v3372
      %v3405 = vunpack.c.l.b16 %v3373
      %v3406 = vunpack.c.l.b16 %v3374
      %v3407 = vunpack.c.l.b16 %v3375
      %v3408 = vunpack.c.l.b16 %v3376
      %v3409 = vunpack.c.l.b16 %v3377
      %v3410 = vunpack.c.l.b16 %v3378
      %v3411 = vunpack.c.l.b16 %v3379
      %v3412 = vunpack.c.l.b16 %v3380
      %v3413 = vunpack.c.l.b16 %v3381
      %v3414 = vunpack.c.l.b16 %v3382
      %v3415 = vunpack.c.l.b16 %v3383
      %v3416 = vunpack.c.l.b16 %v3384
      %v3417 = vunpack.c.l.b16 %v3385
      %v3418 = vunpack.c.l.b16 %v3386
      %v3419 = vunpack.c.l.b16 %v3387
      %v3420 = vunpack.c.l.b16 %v3388
      %v3421 = vunpack.c.l.b16 %v3389
      %v3422 = vunpack.c.l.b16 %v3390
      %v3423 = vunpack.c.l.b16 %v3391
      %v3424 = vunpack.c.l.b16 %v3392
      %v3425 = vunpack.c.l.b16 %v3393
      %v3426 = vpack.c.b16 %v3395, %v3394
      %v3427 = vpack.c.b16 %v3397, %v3396
      %v3428 = vpack.c.b16 %v3399, %v3398
      %v3429 = vpack.c.b16 %v3401, %v3400
      %v3430 = vpack.c.b16 %v3403, %v3402
      %v3431 = vpack.c.b16 %v3405, %v3404
      %v3432 = vpack.c.b16 %v3407, %v3406
      %v3433 = vpack.c.b16 %v3409, %v3408
      %v3434 = vpack.c.b16 %v3411, %v3410
      %v3435 = vpack.c.b16 %v3413, %v3412
      %v3436 = vpack.c.b16 %v3415, %v3414
      %v3437 = vpack.c.b16 %v3417, %v3416
      %v3438 = vpack.c.b16 %v3419, %v3418
      %v3439 = vpack.c.b16 %v3421, %v3420
      %v3440 = vpack.c.b16 %v3423, %v3422
      %v3441 = vpack.c.b16 %v3425, %v3424
      %v3443 = vshrl.u32 %v3426, 16
      %v3445 = vrot.slane %v3443, 7
      %v3446 = vshll.u32 %v3426, 16
      %v3448 = vor.u32 %v3445, %v3446
      %v3450 = vshrl.u32 %v3427, 16
      %v3452 = vrot.slane %v3450, 7
      %v3453 = vshll.u32 %v3427, 16
      %v3455 = vor.u32 %v3452, %v3453
      %v3456 = vsel %vm2891, %v3445, %v3455
      %v3458 = vshrl.u32 %v3428, 16
      %v3460 = vrot.slane %v3458, 7
      %v3461 = vshll.u32 %v3428, 16
      %v3463 = vor.u32 %v3460, %v3461
      %v3464 = vsel %vm2891, %v3452, %v3463
      %v3466 = vshrl.u32 %v3429, 16
      %v3468 = vrot.slane %v3466, 7
      %v3469 = vshll.u32 %v3429, 16
      %v3471 = vor.u32 %v3468, %v3469
      %v3472 = vsel %vm2891, %v3460, %v3471
      %v3474 = vshrl.u32 %v3430, 16
      %v3476 = vrot.slane %v3474, 7
      %v3477 = vshll.u32 %v3430, 16
      %v3479 = vor.u32 %v3476, %v3477
      %v3480 = vsel %vm2891, %v3468, %v3479
      %v3482 = vshrl.u32 %v3431, 16
      %v3484 = vrot.slane %v3482, 7
      %v3485 = vshll.u32 %v3431, 16
      %v3487 = vor.u32 %v3484, %v3485
      %v3488 = vsel %vm2891, %v3476, %v3487
      %v3490 = vshrl.u32 %v3432, 16
      %v3492 = vrot.slane %v3490, 7
      %v3493 = vshll.u32 %v3432, 16
      %v3495 = vor.u32 %v3492, %v3493
      %v3496 = vsel %vm2891, %v3484, %v3495
      %v3498 = vshrl.u32 %v3433, 16
      %v3500 = vrot.slane %v3498, 7
      %v3501 = vshll.u32 %v3433, 16
      %v3503 = vor.u32 %v3500, %v3501
      %v3504 = vsel %vm2891, %v3492, %v3503
      %v3506 = vshrl.u32 %v3434, 16
      %v3508 = vrot.slane %v3506, 7
      %v3509 = vshll.u32 %v3434, 16
      %v3511 = vor.u32 %v3508, %v3509
      %v3512 = vsel %vm2891, %v3500, %v3511
      %v3514 = vshrl.u32 %v3435, 16
      %v3516 = vrot.slane %v3514, 7
      %v3517 = vshll.u32 %v3435, 16
      %v3519 = vor.u32 %v3516, %v3517
      %v3520 = vsel %vm2891, %v3508, %v3519
      %v3522 = vshrl.u32 %v3436, 16
      %v3524 = vrot.slane %v3522, 7
      %v3525 = vshll.u32 %v3436, 16
      %v3527 = vor.u32 %v3524, %v3525
      %v3528 = vsel %vm2891, %v3516, %v3527
      %v3530 = vshrl.u32 %v3437, 16
      %v3532 = vrot.slane %v3530, 7
      %v3533 = vshll.u32 %v3437, 16
      %v3535 = vor.u32 %v3532, %v3533
      %v3536 = vsel %vm2891, %v3524, %v3535
      %v3538 = vshrl.u32 %v3438, 16
      %v3540 = vrot.slane %v3538, 7
      %v3541 = vshll.u32 %v3438, 16
      %v3543 = vor.u32 %v3540, %v3541
      %v3544 = vsel %vm2891, %v3532, %v3543
      %v3546 = vshrl.u32 %v3439, 16
      %v3548 = vrot.slane %v3546, 7
      %v3549 = vshll.u32 %v3439, 16
      %v3551 = vor.u32 %v3548, %v3549
      %v3552 = vsel %vm2891, %v3540, %v3551
      %v3554 = vshrl.u32 %v3440, 16
      %v3556 = vrot.slane %v3554, 7
      %v3557 = vshll.u32 %v3440, 16
      %v3559 = vor.u32 %v3556, %v3557
      %v3560 = vsel %vm2891, %v3548, %v3559
      %v3562 = vshrl.u32 %v3441, 16
      %v3564 = vrot.slane %v3562, 7
      %v3565 = vshll.u32 %v3441, 16
      %v3567 = vor.u32 %v3564, %v3565
      %v3568 = vsel %vm2891, %v3556, %v3567
      %vm3569 = vcmp.ne.s16.totalorder %v3448, 0
      %vm3570 = vcmp.ne.s16.totalorder %v3456, 0
      %vm3571 = vcmp.ne.s16.totalorder %v3464, 0
      %vm3572 = vcmp.ne.s16.totalorder %v3472, 0
      %vm3573 = vcmp.ne.s16.totalorder %v3480, 0
      %vm3574 = vcmp.ne.s16.totalorder %v3488, 0
      %vm3575 = vcmp.ne.s16.totalorder %v3496, 0
      %vm3576 = vcmp.ne.s16.totalorder %v3504, 0
      %vm3577 = vcmp.ne.s16.totalorder %v3512, 0
      %vm3578 = vcmp.ne.s16.totalorder %v3520, 0
      %vm3579 = vcmp.ne.s16.totalorder %v3528, 0
      %vm3580 = vcmp.ne.s16.totalorder %v3536, 0
      %vm3581 = vcmp.ne.s16.totalorder %v3544, 0
      %vm3582 = vcmp.ne.s16.totalorder %v3552, 0
      %vm3583 = vcmp.ne.s16.totalorder %v3560, 0
      %vm3584 = vcmp.ne.s16.totalorder %v3568, 0
      %vm3585 = vcmp.ne.s16.totalorder %v3564, 0
      %v3586 = vsel %vm3569, %v3249, 0
      %v3587 = vsel %vm3570, %v3250, 0
      %v3588 = vsel %vm3571, %v3251, 0
      %v3589 = vsel %vm3572, %v3252, 0
      %v3590 = vsel %vm3573, %v3253, 0
      %v3591 = vsel %vm3574, %v3254, 0
      %v3592 = vsel %vm3575, %v3255, 0
      %v3593 = vsel %vm3576, %v3256, 0
      %v3594 = vsel %vm3577, %v3257, 0
      %v3595 = vsel %vm3578, %v3258, 0
      %v3596 = vsel %vm3579, %v3259, 0
      %v3597 = vsel %vm3580, %v3260, 0
      %v3598 = vsel %vm3581, %v3261, 0
      %v3599 = vsel %vm3582, %v3262, 0
      %v3600 = vsel %vm3583, %v3263, 0
      %v3601 = vsel %vm3584, %v3264, 0
      %v3602 = vsel %vm3585, %v3265, 0
      %s3603 = scalar_lea.vmem %s8, 128
      %v3604 = vld [vmem:[%s3603] sm:$0xf]
      %v3605 = vld [vmem:[%s3603 + $0x4] sm:$0xf]
      %v3606 = vld [vmem:[%s3603 + $0x8] sm:$0xf]
      %v3607 = vld [vmem:[%s3603 + $0xc] sm:$0xf]
      %v3608 = vld [vmem:[%s3603 + $0x10] sm:$0xf]
      %v3609 = vld [vmem:[%s3603 + $0x14] sm:$0xf]
      %v3610 = vld [vmem:[%s3603 + $0x18] sm:$0xf]
      %v3611 = vld [vmem:[%s3603 + $0x1c] sm:$0xf]
      %v3612 = vld [vmem:[%s3603 + $0x20] sm:$0xf]
      %v3613 = vld [vmem:[%s3603 + $0x24] sm:$0xf]
      %v3614 = vld [vmem:[%s3603 + $0x28] sm:$0xf]
      %v3615 = vld [vmem:[%s3603 + $0x2c] sm:$0xf]
      %v3616 = vld [vmem:[%s3603 + $0x30] sm:$0xf]
      %v3617 = vld [vmem:[%s3603 + $0x34] sm:$0xf]
      %v3618 = vld [vmem:[%s3603 + $0x38] sm:$0xf]
      %v3619 = vld [vmem:[%s3603 + $0x3c] sm:$0xf]
      %v3621 = vshrl.u32 %v3586, 16
      %v3623 = vshll.u32 %v3586, 16
      %v3625 = vrot.slane %v3623, 1
      %v3626 = vor.u32 %v3621, %v3625
      %v3628 = vshll.u32 %v3587, 16
      %v3630 = vrot.slane %v3628, 1
      %v3631 = vsel %vm2487, %v3626, %v3630
      %v3632 = vshrl.u32 %v3587, 16
      %v3634 = vor.u32 %v3632, %v3630
      %v3636 = vshll.u32 %v3588, 16
      %v3638 = vrot.slane %v3636, 1
      %v3639 = vsel %vm2487, %v3634, %v3638
      %v3640 = vshrl.u32 %v3588, 16
      %v3642 = vor.u32 %v3640, %v3638
      %v3644 = vshll.u32 %v3589, 16
      %v3646 = vrot.slane %v3644, 1
      %v3647 = vsel %vm2487, %v3642, %v3646
      %v3648 = vshrl.u32 %v3589, 16
      %v3650 = vor.u32 %v3648, %v3646
      %v3652 = vshll.u32 %v3590, 16
      %v3654 = vrot.slane %v3652, 1
      %v3655 = vsel %vm2487, %v3650, %v3654
      %v3656 = vshrl.u32 %v3590, 16
      %v3658 = vor.u32 %v3656, %v3654
      %v3660 = vshll.u32 %v3591, 16
      %v3662 = vrot.slane %v3660, 1
      %v3663 = vsel %vm2487, %v3658, %v3662
      %v3664 = vshrl.u32 %v3591, 16
      %v3666 = vor.u32 %v3664, %v3662
      %v3668 = vshll.u32 %v3592, 16
      %v3670 = vrot.slane %v3668, 1
      %v3671 = vsel %vm2487, %v3666, %v3670
      %v3672 = vshrl.u32 %v3592, 16
      %v3674 = vor.u32 %v3672, %v3670
      %v3676 = vshll.u32 %v3593, 16
      %v3678 = vrot.slane %v3676, 1
      %v3679 = vsel %vm2487, %v3674, %v3678
      %v3680 = vshrl.u32 %v3593, 16
      %v3682 = vor.u32 %v3680, %v3678
      %v3684 = vshll.u32 %v3594, 16
      %v3686 = vrot.slane %v3684, 1
      %v3687 = vsel %vm2487, %v3682, %v3686
      %v3688 = vshrl.u32 %v3594, 16
      %v3690 = vor.u32 %v3688, %v3686
      %v3692 = vshll.u32 %v3595, 16
      %v3694 = vrot.slane %v3692, 1
      %v3695 = vsel %vm2487, %v3690, %v3694
      %v3696 = vshrl.u32 %v3595, 16
      %v3698 = vor.u32 %v3696, %v3694
      %v3700 = vshll.u32 %v3596, 16
      %v3702 = vrot.slane %v3700, 1
      %v3703 = vsel %vm2487, %v3698, %v3702
      %v3704 = vshrl.u32 %v3596, 16
      %v3706 = vor.u32 %v3704, %v3702
      %v3708 = vshll.u32 %v3597, 16
      %v3710 = vrot.slane %v3708, 1
      %v3711 = vsel %vm2487, %v3706, %v3710
      %v3712 = vshrl.u32 %v3597, 16
      %v3714 = vor.u32 %v3712, %v3710
      %v3716 = vshll.u32 %v3598, 16
      %v3718 = vrot.slane %v3716, 1
      %v3719 = vsel %vm2487, %v3714, %v3718
      %v3720 = vshrl.u32 %v3598, 16
      %v3722 = vor.u32 %v3720, %v3718
      %v3724 = vshll.u32 %v3599, 16
      %v3726 = vrot.slane %v3724, 1
      %v3727 = vsel %vm2487, %v3722, %v3726
      %v3728 = vshrl.u32 %v3599, 16
      %v3730 = vor.u32 %v3728, %v3726
      %v3732 = vshll.u32 %v3600, 16
      %v3734 = vrot.slane %v3732, 1
      %v3735 = vsel %vm2487, %v3730, %v3734
      %v3736 = vshrl.u32 %v3600, 16
      %v3738 = vor.u32 %v3736, %v3734
      %v3740 = vshll.u32 %v3601, 16
      %v3742 = vrot.slane %v3740, 1
      %v3743 = vsel %vm2487, %v3738, %v3742
      %v3744 = vshrl.u32 %v3601, 16
      %v3746 = vor.u32 %v3744, %v3742
      %v3748 = vshll.u32 %v3602, 16
      %v3750 = vrot.slane %v3748, 1
      %v3751 = vsel %vm2487, %v3746, %v3750
      %v3784 = vunpack.c.l.b16 %v3604
      %v3785 = vunpack.c.l.b16 %v3605
      %v3786 = vunpack.c.l.b16 %v3606
      %v3787 = vunpack.c.l.b16 %v3607
      %v3788 = vunpack.c.l.b16 %v3608
      %v3789 = vunpack.c.l.b16 %v3609
      %v3790 = vunpack.c.l.b16 %v3610
      %v3791 = vunpack.c.l.b16 %v3611
      %v3792 = vunpack.c.l.b16 %v3612
      %v3793 = vunpack.c.l.b16 %v3613
      %v3794 = vunpack.c.l.b16 %v3614
      %v3795 = vunpack.c.l.b16 %v3615
      %v3796 = vunpack.c.l.b16 %v3616
      %v3797 = vunpack.c.l.b16 %v3617
      %v3798 = vunpack.c.l.b16 %v3618
      %v3799 = vunpack.c.l.b16 %v3619
      %v3800 = vpack.c.b16 %v3785, %v3784
      %v3801 = vpack.c.b16 %v3787, %v3786
      %v3802 = vpack.c.b16 %v3789, %v3788
      %v3803 = vpack.c.b16 %v3791, %v3790
      %v3804 = vpack.c.b16 %v3793, %v3792
      %v3805 = vpack.c.b16 %v3795, %v3794
      %v3806 = vpack.c.b16 %v3797, %v3796
      %v3807 = vpack.c.b16 %v3799, %v3798
      %3816 = vmatprep.subr.bf16.mxu0 0
      %3817 = vmatpush1.bf16.msra.mxu0 %v3800
      %3818 = vmatprep.subr.bf16.mxu0 0
      %3819 = vmatpush1.bf16.msra.mxu0 %v3801
      %3820 = vmatprep.subr.bf16.mxu0 0
      %3821 = vmatpush1.bf16.msra.mxu0 %v3802
      %3822 = vmatprep.subr.bf16.mxu0 0
      %3823 = vmatpush1.bf16.msra.mxu0 %v3803
      %3824 = vmatprep.subr.bf16.mxu0 0
      %3825 = vmatpush1.bf16.msra.mxu0 %v3804
      %3826 = vmatprep.subr.bf16.mxu0 0
      %3827 = vmatpush1.bf16.msra.mxu0 %v3805
      %3828 = vmatprep.subr.bf16.mxu0 0
      %3829 = vmatpush1.bf16.msra.mxu0 %v3806
      %3830 = vmatprep.subr.bf16.mxu0 0
      %3831 = vmatpush1.bf16.msra.mxu0 %v3807
      %3832 = vmatprep.subr.bf16.mxu0 0
      %3833 = vmatpush1.bf16.msra.mxu0 0
      %3834 = vmatprep.subr.bf16.mxu0 0
      %3835 = vmatpush1.bf16.msra.mxu0 0
      %3836 = vmatprep.subr.bf16.mxu0 0
      %3837 = vmatpush1.bf16.msra.mxu0 0
      %3838 = vmatprep.subr.bf16.mxu0 0
      %3839 = vmatpush1.bf16.msra.mxu0 0
      %3840 = vmatprep.subr.bf16.mxu0 0
      %3841 = vmatpush1.bf16.msra.mxu0 0
      %3842 = vmatprep.subr.bf16.mxu0 0
      %3843 = vmatpush1.bf16.msra.mxu0 0
      %3844 = vmatprep.subr.bf16.mxu0 0
      %3845 = vmatpush1.bf16.msra.mxu0 0
      %3846 = vmatprep.subr.bf16.mxu0 0
      %3847 = vmatpush1.bf16.msra.mxu0 0
      %3848 = vmatprep.mubr.bf16.mxu0 0
      %3849 = vmatmul.mubr.bf16.gmra.mrb[0].mxu0 %v3631
      %v3850 = vpop.f32.mrb[0].mxu0
      %v3851 = vadd.f32 0.0, %v3850
      %v3852 = vpop.f32.mrb[0].mxu0
      %v3853 = vpop.f32.mrb[0].mxu0
      %v3854 = vadd.f32 0.0, %v3853
      %v3855 = vpop.f32.mrb[0].mxu0
      %3856 = vmatprep.mubr.bf16.mxu0 0
      %3857 = vmatmul.mubr.bf16.gmra.mrb[0].mxu0 %v3639
      %v3858 = vpop.f32.mrb[0].mxu0
      %v3859 = vadd.f32 0.0, %v3858
      %v3860 = vpop.f32.mrb[0].mxu0
      %v3861 = vpop.f32.mrb[0].mxu0
      %v3862 = vadd.f32 0.0, %v3861
      %v3863 = vpop.f32.mrb[0].mxu0
      %3864 = vmatprep.mubr.bf16.mxu0 0
      %3865 = vmatmul.mubr.bf16.gmra.mrb[0].mxu0 %v3647
      %v3866 = vpop.f32.mrb[0].mxu0
      %v3867 = vadd.f32 0.0, %v3866
      %v3868 = vpop.f32.mrb[0].mxu0
      %v3869 = vpop.f32.mrb[0].mxu0
      %v3870 = vadd.f32 0.0, %v3869
      %v3871 = vpop.f32.mrb[0].mxu0
      %3872 = vmatprep.mubr.bf16.mxu0 0
      %3873 = vmatmul.mubr.bf16.gmra.mrb[0].mxu0 %v3655
      %v3874 = vpop.f32.mrb[0].mxu0
      %v3875 = vadd.f32 0.0, %v3874
      %v3876 = vpop.f32.mrb[0].mxu0
      %v3877 = vpop.f32.mrb[0].mxu0
      %v3878 = vadd.f32 0.0, %v3877
      %v3879 = vpop.f32.mrb[0].mxu0
      %3880 = vmatprep.mubr.bf16.mxu0 0
      %3881 = vmatmul.mubr.bf16.gmra.mrb[0].mxu0 %v3663
      %v3882 = vpop.f32.mrb[0].mxu0
      %v3883 = vadd.f32 0.0, %v3882
      %v3884 = vpop.f32.mrb[0].mxu0
      %v3885 = vpop.f32.mrb[0].mxu0
      %v3886 = vadd.f32 0.0, %v3885
      %v3887 = vpop.f32.mrb[0].mxu0
      %3888 = vmatprep.mubr.bf16.mxu0 0
      %3889 = vmatmul.mubr.bf16.gmra.mrb[0].mxu0 %v3671
      %v3890 = vpop.f32.mrb[0].mxu0
      %v3891 = vadd.f32 0.0, %v3890
      %v3892 = vpop.f32.mrb[0].mxu0
      %v3893 = vpop.f32.mrb[0].mxu0
      %v3894 = vadd.f32 0.0, %v3893
      %v3895 = vpop.f32.mrb[0].mxu0
      %3896 = vmatprep.mubr.bf16.mxu0 0
      %3897 = vmatmul.mubr.bf16.gmra.mrb[0].mxu0 %v3679
      %v3898 = vpop.f32.mrb[0].mxu0
      %v3899 = vadd.f32 0.0, %v3898
      %v3900 = vpop.f32.mrb[0].mxu0
      %v3901 = vpop.f32.mrb[0].mxu0
      %v3902 = vadd.f32 0.0, %v3901
      %v3903 = vpop.f32.mrb[0].mxu0
      %3904 = vmatprep.mubr.bf16.mxu0 0
      %3905 = vmatmul.mubr.bf16.gmra.mrb[0].mxu0 %v3687
      %v3906 = vpop.f32.mrb[0].mxu0
      %v3907 = vadd.f32 0.0, %v3906
      %v3908 = vpop.f32.mrb[0].mxu0
      %v3909 = vpop.f32.mrb[0].mxu0
      %v3910 = vadd.f32 0.0, %v3909
      %v3911 = vpop.f32.mrb[0].mxu0
      %3912 = vmatprep.mubr.bf16.mxu0 0
      %3913 = vmatmul.mubr.bf16.gmra.mrb[0].mxu0 %v3695
      %v3914 = vpop.f32.mrb[0].mxu0
      %v3915 = vadd.f32 0.0, %v3914
      %v3916 = vpop.f32.mrb[0].mxu0
      %v3917 = vpop.f32.mrb[0].mxu0
      %v3918 = vadd.f32 0.0, %v3917
      %v3919 = vpop.f32.mrb[0].mxu0
      %3920 = vmatprep.mubr.bf16.mxu0 0
      %3921 = vmatmul.mubr.bf16.gmra.mrb[0].mxu0 %v3703
      %v3922 = vpop.f32.mrb[0].mxu0
      %v3923 = vadd.f32 0.0, %v3922
      %v3924 = vpop.f32.mrb[0].mxu0
      %v3925 = vpop.f32.mrb[0].mxu0
      %v3926 = vadd.f32 0.0, %v3925
      %v3927 = vpop.f32.mrb[0].mxu0
      %3928 = vmatprep.mubr.bf16.mxu0 0
      %3929 = vmatmul.mubr.bf16.gmra.mrb[0].mxu0 %v3711
      %v3930 = vpop.f32.mrb[0].mxu0
      %v3931 = vadd.f32 0.0, %v3930
      %v3932 = vpop.f32.mrb[0].mxu0
      %v3933 = vpop.f32.mrb[0].mxu0
      %v3934 = vadd.f32 0.0, %v3933
      %v3935 = vpop.f32.mrb[0].mxu0
      %3936 = vmatprep.mubr.bf16.mxu0 0
      %3937 = vmatmul.mubr.bf16.gmra.mrb[0].mxu0 %v3719
      %v3938 = vpop.f32.mrb[0].mxu0
      %v3939 = vadd.f32 0.0, %v3938
      %v3940 = vpop.f32.mrb[0].mxu0
      %v3941 = vpop.f32.mrb[0].mxu0
      %v3942 = vadd.f32 0.0, %v3941
      %v3943 = vpop.f32.mrb[0].mxu0
      %3944 = vmatprep.mubr.bf16.mxu0 0
      %3945 = vmatmul.mubr.bf16.gmra.mrb[0].mxu0 %v3727
      %v3946 = vpop.f32.mrb[0].mxu0
      %v3947 = vadd.f32 0.0, %v3946
      %v3948 = vpop.f32.mrb[0].mxu0
      %v3949 = vpop.f32.mrb[0].mxu0
      %v3950 = vadd.f32 0.0, %v3949
      %v3951 = vpop.f32.mrb[0].mxu0
      %3952 = vmatprep.mubr.bf16.mxu0 0
      %3953 = vmatmul.mubr.bf16.gmra.mrb[0].mxu0 %v3735
      %v3954 = vpop.f32.mrb[0].mxu0
      %v3955 = vadd.f32 0.0, %v3954
      %v3956 = vpop.f32.mrb[0].mxu0
      %v3957 = vpop.f32.mrb[0].mxu0
      %v3958 = vadd.f32 0.0, %v3957
      %v3959 = vpop.f32.mrb[0].mxu0
      %3960 = vmatprep.mubr.bf16.mxu0 0
      %3961 = vmatmul.mubr.bf16.gmra.mrb[0].mxu0 %v3743
      %v3962 = vpop.f32.mrb[0].mxu0
      %v3963 = vadd.f32 0.0, %v3962
      %v3964 = vpop.f32.mrb[0].mxu0
      %v3965 = vpop.f32.mrb[0].mxu0
      %v3966 = vadd.f32 0.0, %v3965
      %v3967 = vpop.f32.mrb[0].mxu0
      %3968 = vmatprep.mubr.bf16.mxu0 0
      %3969 = vmatmul.mubr.bf16.gmra.mrb[0].mxu0 %v3751
      %v3970 = vpop.f32.mrb[0].mxu0
      %v3971 = vadd.f32 0.0, %v3970
      %v3972 = vpop.f32.mrb[0].mxu0
      %v3973 = vpop.f32.mrb[0].mxu0
      %v3974 = vadd.f32 0.0, %v3973
      %v3975 = vpop.f32.mrb[0].mxu0
      %3976 = vdwg.mxu0
      %v3977 = vadd.f32 %v3123, %v3851
      %v3978 = vadd.f32 %v3126, %v3854
      %v3979 = vadd.f32 %v3131, %v3859
      %v3980 = vadd.f32 %v3134, %v3862
      %v3981 = vadd.f32 %v3139, %v3867
      %v3982 = vadd.f32 %v3142, %v3870
      %v3983 = vadd.f32 %v3147, %v3875
      %v3984 = vadd.f32 %v3150, %v3878
      %v3985 = vadd.f32 %v3155, %v3883
      %v3986 = vadd.f32 %v3158, %v3886
      %v3987 = vadd.f32 %v3163, %v3891
      %v3988 = vadd.f32 %v3166, %v3894
      %v3989 = vadd.f32 %v3171, %v3899
      %v3990 = vadd.f32 %v3174, %v3902
      %v3991 = vadd.f32 %v3179, %v3907
      %v3992 = vadd.f32 %v3182, %v3910
      %v3993 = vadd.f32 %v3187, %v3915
      %v3994 = vadd.f32 %v3190, %v3918
      %v3995 = vadd.f32 %v3195, %v3923
      %v3996 = vadd.f32 %v3198, %v3926
      %v3997 = vadd.f32 %v3203, %v3931
      %v3998 = vadd.f32 %v3206, %v3934
      %v3999 = vadd.f32 %v3211, %v3939
      %v4000 = vadd.f32 %v3214, %v3942
      %v4001 = vadd.f32 %v3219, %v3947
      %v4002 = vadd.f32 %v3222, %v3950
      %v4003 = vadd.f32 %v3227, %v3955
      %v4004 = vadd.f32 %v3230, %v3958
      %v4005 = vadd.f32 %v3235, %v3963
      %v4006 = vadd.f32 %v3238, %v3966
      %v4007 = vadd.f32 %v3243, %v3971
      %v4008 = vadd.f32 %v3246, %v3974
      %v4009 = vld [vmem:[#allocation2 + $0x8] sm:$0x80]
      %v4010 = vld [vmem:[#allocation2 + $0x88] sm:$0xff]
      %v4011 = vsel %vm2615, %v4009, 0
      %v4012 = vsel %vm2616, %v3250, 0
      %v4013 = vsel %vm2617, %v3251, 0
      %v4014 = vsel %vm2618, %v3252, 0
      %v4015 = vsel %vm2619, %v3253, 0
      %v4016 = vsel %vm2620, %v3254, 0
      %v4017 = vsel %vm2621, %v3255, 0
      %v4018 = vsel %vm2622, %v3256, 0
      %v4019 = vsel %vm2623, %v3257, 0
      %v4020 = vsel %vm2624, %v3258, 0
      %v4021 = vsel %vm2625, %v3259, 0
      %v4022 = vsel %vm2626, %v3260, 0
      %v4023 = vsel %vm2627, %v3261, 0
      %v4024 = vsel %vm2628, %v3262, 0
      %v4025 = vsel %vm2629, %v3263, 0
      %v4026 = vsel %vm2630, %v3264, 0
      %v4027 = vsel %vm2631, %v4010, 0
      %s4028 = scalar_lea.vmem %s8, 192
      %v4029 = vld [vmem:[%s4028] sm:$0xf]
      %v4030 = vld [vmem:[%s4028 + $0x4] sm:$0xf]
      %v4031 = vld [vmem:[%s4028 + $0x8] sm:$0xf]
      %v4032 = vld [vmem:[%s4028 + $0xc] sm:$0xf]
      %v4033 = vld [vmem:[%s4028 + $0x10] sm:$0xf]
      %v4034 = vld [vmem:[%s4028 + $0x14] sm:$0xf]
      %v4035 = vld [vmem:[%s4028 + $0x18] sm:$0xf]
      %v4036 = vld [vmem:[%s4028 + $0x1c] sm:$0xf]
      %v4037 = vld [vmem:[%s4028 + $0x20] sm:$0xf]
      %v4038 = vld [vmem:[%s4028 + $0x24] sm:$0xf]
      %v4039 = vld [vmem:[%s4028 + $0x28] sm:$0xf]
      %v4040 = vld [vmem:[%s4028 + $0x2c] sm:$0xf]
      %v4041 = vld [vmem:[%s4028 + $0x30] sm:$0xf]
      %v4042 = vld [vmem:[%s4028 + $0x34] sm:$0xf]
      %v4043 = vld [vmem:[%s4028 + $0x38] sm:$0xf]
      %v4044 = vld [vmem:[%s4028 + $0x3c] sm:$0xf]
      %v4046 = vshrl.u32 %v4011, 16
      %v4048 = vrot.slane %v4046, 7
      %v4050 = vshrl.u32 %v4012, 16
      %v4052 = vrot.slane %v4050, 7
      %v4053 = vshll.u32 %v4012, 16
      %v4055 = vor.u32 %v4052, %v4053
      %v4056 = vsel %vm2891, %v4048, %v4055
      %v4058 = vshrl.u32 %v4013, 16
      %v4060 = vrot.slane %v4058, 7
      %v4061 = vshll.u32 %v4013, 16
      %v4063 = vor.u32 %v4060, %v4061
      %v4064 = vsel %vm2891, %v4052, %v4063
      %v4066 = vshrl.u32 %v4014, 16
      %v4068 = vrot.slane %v4066, 7
      %v4069 = vshll.u32 %v4014, 16
      %v4071 = vor.u32 %v4068, %v4069
      %v4072 = vsel %vm2891, %v4060, %v4071
      %v4074 = vshrl.u32 %v4015, 16
      %v4076 = vrot.slane %v4074, 7
      %v4077 = vshll.u32 %v4015, 16
      %v4079 = vor.u32 %v4076, %v4077
      %v4080 = vsel %vm2891, %v4068, %v4079
      %v4082 = vshrl.u32 %v4016, 16
      %v4084 = vrot.slane %v4082, 7
      %v4085 = vshll.u32 %v4016, 16
      %v4087 = vor.u32 %v4084, %v4085
      %v4088 = vsel %vm2891, %v4076, %v4087
      %v4090 = vshrl.u32 %v4017, 16
      %v4092 = vrot.slane %v4090, 7
      %v4093 = vshll.u32 %v4017, 16
      %v4095 = vor.u32 %v4092, %v4093
      %v4096 = vsel %vm2891, %v4084, %v4095
      %v4098 = vshrl.u32 %v4018, 16
      %v4100 = vrot.slane %v4098, 7
      %v4101 = vshll.u32 %v4018, 16
      %v4103 = vor.u32 %v4100, %v4101
      %v4104 = vsel %vm2891, %v4092, %v4103
      %v4106 = vshrl.u32 %v4019, 16
      %v4108 = vrot.slane %v4106, 7
      %v4109 = vshll.u32 %v4019, 16
      %v4111 = vor.u32 %v4108, %v4109
      %v4112 = vsel %vm2891, %v4100, %v4111
      %v4114 = vshrl.u32 %v4020, 16
      %v4116 = vrot.slane %v4114, 7
      %v4117 = vshll.u32 %v4020, 16
      %v4119 = vor.u32 %v4116, %v4117
      %v4120 = vsel %vm2891, %v4108, %v4119
      %v4122 = vshrl.u32 %v4021, 16
      %v4124 = vrot.slane %v4122, 7
      %v4125 = vshll.u32 %v4021, 16
      %v4127 = vor.u32 %v4124, %v4125
      %v4128 = vsel %vm2891, %v4116, %v4127
      %v4130 = vshrl.u32 %v4022, 16
      %v4132 = vrot.slane %v4130, 7
      %v4133 = vshll.u32 %v4022, 16
      %v4135 = vor.u32 %v4132, %v4133
      %v4136 = vsel %vm2891, %v4124, %v4135
      %v4138 = vshrl.u32 %v4023, 16
      %v4140 = vrot.slane %v4138, 7
      %v4141 = vshll.u32 %v4023, 16
      %v4143 = vor.u32 %v4140, %v4141
      %v4144 = vsel %vm2891, %v4132, %v4143
      %v4146 = vshrl.u32 %v4024, 16
      %v4148 = vrot.slane %v4146, 7
      %v4149 = vshll.u32 %v4024, 16
      %v4151 = vor.u32 %v4148, %v4149
      %v4152 = vsel %vm2891, %v4140, %v4151
      %v4154 = vshrl.u32 %v4025, 16
      %v4156 = vrot.slane %v4154, 7
      %v4157 = vshll.u32 %v4025, 16
      %v4159 = vor.u32 %v4156, %v4157
      %v4160 = vsel %vm2891, %v4148, %v4159
      %v4162 = vshrl.u32 %v4026, 16
      %v4164 = vrot.slane %v4162, 7
      %v4165 = vshll.u32 %v4026, 16
      %v4167 = vor.u32 %v4164, %v4165
      %v4168 = vsel %vm2891, %v4156, %v4167
      %v4170 = vshrl.u32 %v4027, 16
      %v4172 = vrot.slane %v4170, 7
      %v4173 = vshll.u32 %v4027, 16
      %v4175 = vor.u32 %v4172, %v4173
      %v4176 = vsel %vm2891, %v4164, %v4175
      %v4209 = vunpack.c.l.b16 %v4029
      %v4210 = vunpack.c.l.b16 %v4030
      %v4211 = vunpack.c.l.b16 %v4031
      %v4212 = vunpack.c.l.b16 %v4032
      %v4213 = vunpack.c.l.b16 %v4033
      %v4214 = vunpack.c.l.b16 %v4034
      %v4215 = vunpack.c.l.b16 %v4035
      %v4216 = vunpack.c.l.b16 %v4036
      %v4217 = vunpack.c.l.b16 %v4037
      %v4218 = vunpack.c.l.b16 %v4038
      %v4219 = vunpack.c.l.b16 %v4039
      %v4220 = vunpack.c.l.b16 %v4040
      %v4221 = vunpack.c.l.b16 %v4041
      %v4222 = vunpack.c.l.b16 %v4042
      %v4223 = vunpack.c.l.b16 %v4043
      %v4224 = vunpack.c.l.b16 %v4044
      %v4225 = vpack.c.b16 %v4210, %v4209
      %v4226 = vpack.c.b16 %v4212, %v4211
      %v4227 = vpack.c.b16 %v4214, %v4213
      %v4228 = vpack.c.b16 %v4216, %v4215
      %v4229 = vpack.c.b16 %v4218, %v4217
      %v4230 = vpack.c.b16 %v4220, %v4219
      %v4231 = vpack.c.b16 %v4222, %v4221
      %v4232 = vpack.c.b16 %v4224, %v4223
      %4241 = vmatprep.subr.bf16.mxu0 0
      %4242 = vmatpush1.bf16.msra.mxu0 %v4225
      %4243 = vmatprep.subr.bf16.mxu0 0
      %4244 = vmatpush1.bf16.msra.mxu0 %v4226
      %4245 = vmatprep.subr.bf16.mxu0 0
      %4246 = vmatpush1.bf16.msra.mxu0 %v4227
      %4247 = vmatprep.subr.bf16.mxu0 0
      %4248 = vmatpush1.bf16.msra.mxu0 %v4228
      %4249 = vmatprep.subr.bf16.mxu0 0
      %4250 = vmatpush1.bf16.msra.mxu0 %v4229
      %4251 = vmatprep.subr.bf16.mxu0 0
      %4252 = vmatpush1.bf16.msra.mxu0 %v4230
      %4253 = vmatprep.subr.bf16.mxu0 0
      %4254 = vmatpush1.bf16.msra.mxu0 %v4231
      %4255 = vmatprep.subr.bf16.mxu0 0
      %4256 = vmatpush1.bf16.msra.mxu0 %v4232
      %4257 = vmatprep.subr.bf16.mxu0 0
      %4258 = vmatpush1.bf16.msra.mxu0 0
      %4259 = vmatprep.subr.bf16.mxu0 0
      %4260 = vmatpush1.bf16.msra.mxu0 0
      %4261 = vmatprep.subr.bf16.mxu0 0
      %4262 = vmatpush1.bf16.msra.mxu0 0
      %4263 = vmatprep.subr.bf16.mxu0 0
      %4264 = vmatpush1.bf16.msra.mxu0 0
      %4265 = vmatprep.subr.bf16.mxu0 0
      %4266 = vmatpush1.bf16.msra.mxu0 0
      %4267 = vmatprep.subr.bf16.mxu0 0
      %4268 = vmatpush1.bf16.msra.mxu0 0
      %4269 = vmatprep.subr.bf16.mxu0 0
      %4270 = vmatpush1.bf16.msra.mxu0 0
      %4271 = vmatprep.subr.bf16.mxu0 0
      %4272 = vmatpush1.bf16.msra.mxu0 0
      %4273 = vmatprep.mubr.bf16.mxu0 0
      %4274 = vmatmul.mubr.bf16.gmra.mrb[0].mxu0 %v4056
      %v4275 = vpop.f32.mrb[0].mxu0
      %v4276 = vadd.f32 0.0, %v4275
      %v4277 = vpop.f32.mrb[0].mxu0
      %v4278 = vpop.f32.mrb[0].mxu0
      %v4279 = vadd.f32 0.0, %v4278
      %v4280 = vpop.f32.mrb[0].mxu0
      %4281 = vmatprep.mubr.bf16.mxu0 0
      %4282 = vmatmul.mubr.bf16.gmra.mrb[0].mxu0 %v4064
      %v4283 = vpop.f32.mrb[0].mxu0
      %v4284 = vadd.f32 0.0, %v4283
      %v4285 = vpop.f32.mrb[0].mxu0
      %v4286 = vpop.f32.mrb[0].mxu0
      %v4287 = vadd.f32 0.0, %v4286
      %v4288 = vpop.f32.mrb[0].mxu0
      %4289 = vmatprep.mubr.bf16.mxu0 0
      %4290 = vmatmul.mubr.bf16.gmra.mrb[0].mxu0 %v4072
      %v4291 = vpop.f32.mrb[0].mxu0
      %v4292 = vadd.f32 0.0, %v4291
      %v4293 = vpop.f32.mrb[0].mxu0
      %v4294 = vpop.f32.mrb[0].mxu0
      %v4295 = vadd.f32 0.0, %v4294
      %v4296 = vpop.f32.mrb[0].mxu0
      %4297 = vmatprep.mubr.bf16.mxu0 0
      %4298 = vmatmul.mubr.bf16.gmra.mrb[0].mxu0 %v4080
      %v4299 = vpop.f32.mrb[0].mxu0
      %v4300 = vadd.f32 0.0, %v4299
      %v4301 = vpop.f32.mrb[0].mxu0
      %v4302 = vpop.f32.mrb[0].mxu0
      %v4303 = vadd.f32 0.0, %v4302
      %v4304 = vpop.f32.mrb[0].mxu0
      %4305 = vmatprep.mubr.bf16.mxu0 0
      %4306 = vmatmul.mubr.bf16.gmra.mrb[0].mxu0 %v4088
      %v4307 = vpop.f32.mrb[0].mxu0
      %v4308 = vadd.f32 0.0, %v4307
      %v4309 = vpop.f32.mrb[0].mxu0
      %v4310 = vpop.f32.mrb[0].mxu0
      %v4311 = vadd.f32 0.0, %v4310
      %v4312 = vpop.f32.mrb[0].mxu0
      %4313 = vmatprep.mubr.bf16.mxu0 0
      %4314 = vmatmul.mubr.bf16.gmra.mrb[0].mxu0 %v4096
      %v4315 = vpop.f32.mrb[0].mxu0
      %v4316 = vadd.f32 0.0, %v4315
      %v4317 = vpop.f32.mrb[0].mxu0
      %v4318 = vpop.f32.mrb[0].mxu0
      %v4319 = vadd.f32 0.0, %v4318
      %v4320 = vpop.f32.mrb[0].mxu0
      %4321 = vmatprep.mubr.bf16.mxu0 0
      %4322 = vmatmul.mubr.bf16.gmra.mrb[0].mxu0 %v4104
      %v4323 = vpop.f32.mrb[0].mxu0
      %v4324 = vadd.f32 0.0, %v4323
      %v4325 = vpop.f32.mrb[0].mxu0
      %v4326 = vpop.f32.mrb[0].mxu0
      %v4327 = vadd.f32 0.0, %v4326
      %v4328 = vpop.f32.mrb[0].mxu0
      %4329 = vmatprep.mubr.bf16.mxu0 0
      %4330 = vmatmul.mubr.bf16.gmra.mrb[0].mxu0 %v4112
      %v4331 = vpop.f32.mrb[0].mxu0
      %v4332 = vadd.f32 0.0, %v4331
      %v4333 = vpop.f32.mrb[0].mxu0
      %v4334 = vpop.f32.mrb[0].mxu0
      %v4335 = vadd.f32 0.0, %v4334
      %v4336 = vpop.f32.mrb[0].mxu0
      %4337 = vmatprep.mubr.bf16.mxu0 0
      %4338 = vmatmul.mubr.bf16.gmra.mrb[0].mxu0 %v4120
      %v4339 = vpop.f32.mrb[0].mxu0
      %v4340 = vadd.f32 0.0, %v4339
      %v4341 = vpop.f32.mrb[0].mxu0
      %v4342 = vpop.f32.mrb[0].mxu0
      %v4343 = vadd.f32 0.0, %v4342
      %v4344 = vpop.f32.mrb[0].mxu0
      %4345 = vmatprep.mubr.bf16.mxu0 0
      %4346 = vmatmul.mubr.bf16.gmra.mrb[0].mxu0 %v4128
      %v4347 = vpop.f32.mrb[0].mxu0
      %v4348 = vadd.f32 0.0, %v4347
      %v4349 = vpop.f32.mrb[0].mxu0
      %v4350 = vpop.f32.mrb[0].mxu0
      %v4351 = vadd.f32 0.0, %v4350
      %v4352 = vpop.f32.mrb[0].mxu0
      %4353 = vmatprep.mubr.bf16.mxu0 0
      %4354 = vmatmul.mubr.bf16.gmra.mrb[0].mxu0 %v4136
      %v4355 = vpop.f32.mrb[0].mxu0
      %v4356 = vadd.f32 0.0, %v4355
      %v4357 = vpop.f32.mrb[0].mxu0
      %v4358 = vpop.f32.mrb[0].mxu0
      %v4359 = vadd.f32 0.0, %v4358
      %v4360 = vpop.f32.mrb[0].mxu0
      %4361 = vmatprep.mubr.bf16.mxu0 0
      %4362 = vmatmul.mubr.bf16.gmra.mrb[0].mxu0 %v4144
      %v4363 = vpop.f32.mrb[0].mxu0
      %v4364 = vadd.f32 0.0, %v4363
      %v4365 = vpop.f32.mrb[0].mxu0
      %v4366 = vpop.f32.mrb[0].mxu0
      %v4367 = vadd.f32 0.0, %v4366
      %v4368 = vpop.f32.mrb[0].mxu0
      %4369 = vmatprep.mubr.bf16.mxu0 0
      %4370 = vmatmul.mubr.bf16.gmra.mrb[0].mxu0 %v4152
      %v4371 = vpop.f32.mrb[0].mxu0
      %v4372 = vadd.f32 0.0, %v4371
      %v4373 = vpop.f32.mrb[0].mxu0
      %v4374 = vpop.f32.mrb[0].mxu0
      %v4375 = vadd.f32 0.0, %v4374
      %v4376 = vpop.f32.mrb[0].mxu0
      %4377 = vmatprep.mubr.bf16.mxu0 0
      %4378 = vmatmul.mubr.bf16.gmra.mrb[0].mxu0 %v4160
      %v4379 = vpop.f32.mrb[0].mxu0
      %v4380 = vadd.f32 0.0, %v4379
      %v4381 = vpop.f32.mrb[0].mxu0
      %v4382 = vpop.f32.mrb[0].mxu0
      %v4383 = vadd.f32 0.0, %v4382
      %v4384 = vpop.f32.mrb[0].mxu0
      %4385 = vmatprep.mubr.bf16.mxu0 0
      %4386 = vmatmul.mubr.bf16.gmra.mrb[0].mxu0 %v4168
      %v4387 = vpop.f32.mrb[0].mxu0
      %v4388 = vadd.f32 0.0, %v4387
      %v4389 = vpop.f32.mrb[0].mxu0
      %v4390 = vpop.f32.mrb[0].mxu0
      %v4391 = vadd.f32 0.0, %v4390
      %v4392 = vpop.f32.mrb[0].mxu0
      %4393 = vmatprep.mubr.bf16.mxu0 0
      %4394 = vmatmul.mubr.bf16.gmra.mrb[0].mxu0 %v4176
      %v4395 = vpop.f32.mrb[0].mxu0
      %v4396 = vadd.f32 0.0, %v4395
      %v4397 = vpop.f32.mrb[0].mxu0
      %v4398 = vpop.f32.mrb[0].mxu0
      %v4399 = vadd.f32 0.0, %v4398
      %v4400 = vpop.f32.mrb[0].mxu0
      %4401 = vdwg.mxu0
      %v4402 = vadd.f32 %v3977, %v4276
      %v4403 = vadd.f32 %v3978, %v4279
      %v4404 = vadd.f32 %v3979, %v4284
      %v4405 = vadd.f32 %v3980, %v4287
      %v4406 = vadd.f32 %v3981, %v4292
      %v4407 = vadd.f32 %v3982, %v4295
      %v4408 = vadd.f32 %v3983, %v4300
      %v4409 = vadd.f32 %v3984, %v4303
      %v4410 = vadd.f32 %v3985, %v4308
      %v4411 = vadd.f32 %v3986, %v4311
      %v4412 = vadd.f32 %v3987, %v4316
      %v4413 = vadd.f32 %v3988, %v4319
      %v4414 = vadd.f32 %v3989, %v4324
      %v4415 = vadd.f32 %v3990, %v4327
      %v4416 = vadd.f32 %v3991, %v4332
      %v4417 = vadd.f32 %v3992, %v4335
      %v4418 = vadd.f32 %v3993, %v4340
      %v4419 = vadd.f32 %v3994, %v4343
      %v4420 = vadd.f32 %v3995, %v4348
      %v4421 = vadd.f32 %v3996, %v4351
      %v4422 = vadd.f32 %v3997, %v4356
      %v4423 = vadd.f32 %v3998, %v4359
      %v4424 = vadd.f32 %v3999, %v4364
      %v4425 = vadd.f32 %v4000, %v4367
      %v4426 = vadd.f32 %v4001, %v4372
      %v4427 = vadd.f32 %v4002, %v4375
      %v4428 = vadd.f32 %v4003, %v4380
      %v4429 = vadd.f32 %v4004, %v4383
      %v4430 = vadd.f32 %v4005, %v4388
      %v4431 = vadd.f32 %v4006, %v4391
      %v4432 = vadd.f32 %v4007, %v4396
      %v4433 = vadd.f32 %v4008, %v4399
      %s4434 = scalar_lea.vmem %s8, 256
      %v4435 = vld [vmem:[%s4434] sm:$0xf]
      %v4436 = vld [vmem:[%s4434 + $0x4] sm:$0xf]
      %v4437 = vld [vmem:[%s4434 + $0x8] sm:$0xf]
      %v4438 = vld [vmem:[%s4434 + $0xc] sm:$0xf]
      %v4439 = vld [vmem:[%s4434 + $0x10] sm:$0xf]
      %v4440 = vld [vmem:[%s4434 + $0x14] sm:$0xf]
      %v4441 = vld [vmem:[%s4434 + $0x18] sm:$0xf]
      %v4442 = vld [vmem:[%s4434 + $0x1c] sm:$0xf]
      %v4443 = vld [vmem:[%s4434 + $0x20] sm:$0xf]
      %v4444 = vld [vmem:[%s4434 + $0x24] sm:$0xf]
      %v4445 = vld [vmem:[%s4434 + $0x28] sm:$0xf]
      %v4446 = vld [vmem:[%s4434 + $0x2c] sm:$0xf]
      %v4447 = vld [vmem:[%s4434 + $0x30] sm:$0xf]
      %v4448 = vld [vmem:[%s4434 + $0x34] sm:$0xf]
      %v4449 = vld [vmem:[%s4434 + $0x38] sm:$0xf]
      %v4450 = vld [vmem:[%s4434 + $0x3c] sm:$0xf]
      %v4467 = vunpack.c.l.b16 %v4435
      %v4468 = vunpack.c.l.b16 %v4436
      %v4469 = vunpack.c.l.b16 %v4437
      %v4470 = vunpack.c.l.b16 %v4438
      %v4471 = vunpack.c.l.b16 %v4439
      %v4472 = vunpack.c.l.b16 %v4440
      %v4473 = vunpack.c.l.b16 %v4441
      %v4474 = vunpack.c.l.b16 %v4442
      %v4475 = vunpack.c.l.b16 %v4443
      %v4476 = vunpack.c.l.b16 %v4444
      %v4477 = vunpack.c.l.b16 %v4445
      %v4478 = vunpack.c.l.b16 %v4446
      %v4479 = vunpack.c.l.b16 %v4447
      %v4480 = vunpack.c.l.b16 %v4448
      %v4481 = vunpack.c.l.b16 %v4449
      %v4482 = vunpack.c.l.b16 %v4450
      %v4483 = vpack.c.b16 %v4468, %v4467
      %v4484 = vpack.c.b16 %v4470, %v4469
      %v4485 = vpack.c.b16 %v4472, %v4471
      %v4486 = vpack.c.b16 %v4474, %v4473
      %v4487 = vpack.c.b16 %v4476, %v4475
      %v4488 = vpack.c.b16 %v4478, %v4477
      %v4489 = vpack.c.b16 %v4480, %v4479
      %v4490 = vpack.c.b16 %v4482, %v4481
      %4499 = vmatprep.subr.bf16.mxu0 0
      %4500 = vmatpush1.bf16.msra.mxu0 %v4483
      %4501 = vmatprep.subr.bf16.mxu0 0
      %4502 = vmatpush1.bf16.msra.mxu0 %v4484
      %4503 = vmatprep.subr.bf16.mxu0 0
      %4504 = vmatpush1.bf16.msra.mxu0 %v4485
      %4505 = vmatprep.subr.bf16.mxu0 0
      %4506 = vmatpush1.bf16.msra.mxu0 %v4486
      %4507 = vmatprep.subr.bf16.mxu0 0
      %4508 = vmatpush1.bf16.msra.mxu0 %v4487
      %4509 = vmatprep.subr.bf16.mxu0 0
      %4510 = vmatpush1.bf16.msra.mxu0 %v4488
      %4511 = vmatprep.subr.bf16.mxu0 0
      %4512 = vmatpush1.bf16.msra.mxu0 %v4489
      %4513 = vmatprep.subr.bf16.mxu0 0
      %4514 = vmatpush1.bf16.msra.mxu0 %v4490
      %4515 = vmatprep.subr.bf16.mxu0 0
      %4516 = vmatpush1.bf16.msra.mxu0 0
      %4517 = vmatprep.subr.bf16.mxu0 0
      %4518 = vmatpush1.bf16.msra.mxu0 0
      %4519 = vmatprep.subr.bf16.mxu0 0
      %4520 = vmatpush1.bf16.msra.mxu0 0
      %4521 = vmatprep.subr.bf16.mxu0 0
      %4522 = vmatpush1.bf16.msra.mxu0 0
      %4523 = vmatprep.subr.bf16.mxu0 0
      %4524 = vmatpush1.bf16.msra.mxu0 0
      %4525 = vmatprep.subr.bf16.mxu0 0
      %4526 = vmatpush1.bf16.msra.mxu0 0
      %4527 = vmatprep.subr.bf16.mxu0 0
      %4528 = vmatpush1.bf16.msra.mxu0 0
      %4529 = vmatprep.subr.bf16.mxu0 0
      %4530 = vmatpush1.bf16.msra.mxu0 0
      %4531 = vmatprep.mubr.bf16.mxu0 0
      %4532 = vmatmul.mubr.bf16.gmra.mrb[0].mxu0 %v3250
      %v4533 = vpop.f32.mrb[0].mxu0
      %v4534 = vadd.f32 0.0, %v4533
      %v4535 = vpop.f32.mrb[0].mxu0
      %v4536 = vpop.f32.mrb[0].mxu0
      %v4537 = vadd.f32 0.0, %v4536
      %v4538 = vpop.f32.mrb[0].mxu0
      %4539 = vmatprep.mubr.bf16.mxu0 0
      %4540 = vmatmul.mubr.bf16.gmra.mrb[0].mxu0 %v3251
      %v4541 = vpop.f32.mrb[0].mxu0
      %v4542 = vadd.f32 0.0, %v4541
      %v4543 = vpop.f32.mrb[0].mxu0
      %v4544 = vpop.f32.mrb[0].mxu0
      %v4545 = vadd.f32 0.0, %v4544
      %v4546 = vpop.f32.mrb[0].mxu0
      %4547 = vmatprep.mubr.bf16.mxu0 0
      %4548 = vmatmul.mubr.bf16.gmra.mrb[0].mxu0 %v3252
      %v4549 = vpop.f32.mrb[0].mxu0
      %v4550 = vadd.f32 0.0, %v4549
      %v4551 = vpop.f32.mrb[0].mxu0
      %v4552 = vpop.f32.mrb[0].mxu0
      %v4553 = vadd.f32 0.0, %v4552
      %v4554 = vpop.f32.mrb[0].mxu0
      %4555 = vmatprep.mubr.bf16.mxu0 0
      %4556 = vmatmul.mubr.bf16.gmra.mrb[0].mxu0 %v3253
      %v4557 = vpop.f32.mrb[0].mxu0
      %v4558 = vadd.f32 0.0, %v4557
      %v4559 = vpop.f32.mrb[0].mxu0
      %v4560 = vpop.f32.mrb[0].mxu0
      %v4561 = vadd.f32 0.0, %v4560
      %v4562 = vpop.f32.mrb[0].mxu0
      %4563 = vmatprep.mubr.bf16.mxu0 0
      %4564 = vmatmul.mubr.bf16.gmra.mrb[0].mxu0 %v3254
      %v4565 = vpop.f32.mrb[0].mxu0
      %v4566 = vadd.f32 0.0, %v4565
      %v4567 = vpop.f32.mrb[0].mxu0
      %v4568 = vpop.f32.mrb[0].mxu0
      %v4569 = vadd.f32 0.0, %v4568
      %v4570 = vpop.f32.mrb[0].mxu0
      %4571 = vmatprep.mubr.bf16.mxu0 0
      %4572 = vmatmul.mubr.bf16.gmra.mrb[0].mxu0 %v3255
      %v4573 = vpop.f32.mrb[0].mxu0
      %v4574 = vadd.f32 0.0, %v4573
      %v4575 = vpop.f32.mrb[0].mxu0
      %v4576 = vpop.f32.mrb[0].mxu0
      %v4577 = vadd.f32 0.0, %v4576
      %v4578 = vpop.f32.mrb[0].mxu0
      %4579 = vmatprep.mubr.bf16.mxu0 0
      %4580 = vmatmul.mubr.bf16.gmra.mrb[0].mxu0 %v3256
      %v4581 = vpop.f32.mrb[0].mxu0
      %v4582 = vadd.f32 0.0, %v4581
      %v4583 = vpop.f32.mrb[0].mxu0
      %v4584 = vpop.f32.mrb[0].mxu0
      %v4585 = vadd.f32 0.0, %v4584
      %v4586 = vpop.f32.mrb[0].mxu0
      %4587 = vmatprep.mubr.bf16.mxu0 0
      %4588 = vmatmul.mubr.bf16.gmra.mrb[0].mxu0 %v3257
      %v4589 = vpop.f32.mrb[0].mxu0
      %v4590 = vadd.f32 0.0, %v4589
      %v4591 = vpop.f32.mrb[0].mxu0
      %v4592 = vpop.f32.mrb[0].mxu0
      %v4593 = vadd.f32 0.0, %v4592
      %v4594 = vpop.f32.mrb[0].mxu0
      %4595 = vmatprep.mubr.bf16.mxu0 0
      %4596 = vmatmul.mubr.bf16.gmra.mrb[0].mxu0 %v3258
      %v4597 = vpop.f32.mrb[0].mxu0
      %v4598 = vadd.f32 0.0, %v4597
      %v4599 = vpop.f32.mrb[0].mxu0
      %v4600 = vpop.f32.mrb[0].mxu0
      %v4601 = vadd.f32 0.0, %v4600
      %v4602 = vpop.f32.mrb[0].mxu0
      %4603 = vmatprep.mubr.bf16.mxu0 0
      %4604 = vmatmul.mubr.bf16.gmra.mrb[0].mxu0 %v3259
      %v4605 = vpop.f32.mrb[0].mxu0
      %v4606 = vadd.f32 0.0, %v4605
      %v4607 = vpop.f32.mrb[0].mxu0
      %v4608 = vpop.f32.mrb[0].mxu0
      %v4609 = vadd.f32 0.0, %v4608
      %v4610 = vpop.f32.mrb[0].mxu0
      %4611 = vmatprep.mubr.bf16.mxu0 0
      %4612 = vmatmul.mubr.bf16.gmra.mrb[0].mxu0 %v3260
      %v4613 = vpop.f32.mrb[0].mxu0
      %v4614 = vadd.f32 0.0, %v4613
      %v4615 = vpop.f32.mrb[0].mxu0
      %v4616 = vpop.f32.mrb[0].mxu0
      %v4617 = vadd.f32 0.0, %v4616
      %v4618 = vpop.f32.mrb[0].mxu0
      %4619 = vmatprep.mubr.bf16.mxu0 0
      %4620 = vmatmul.mubr.bf16.gmra.mrb[0].mxu0 %v3261
      %v4621 = vpop.f32.mrb[0].mxu0
      %v4622 = vadd.f32 0.0, %v4621
      %v4623 = vpop.f32.mrb[0].mxu0
      %v4624 = vpop.f32.mrb[0].mxu0
      %v4625 = vadd.f32 0.0, %v4624
      %v4626 = vpop.f32.mrb[0].mxu0
      %4627 = vmatprep.mubr.bf16.mxu0 0
      %4628 = vmatmul.mubr.bf16.gmra.mrb[0].mxu0 %v3262
      %v4629 = vpop.f32.mrb[0].mxu0
      %v4630 = vadd.f32 0.0, %v4629
      %v4631 = vpop.f32.mrb[0].mxu0
      %v4632 = vpop.f32.mrb[0].mxu0
      %v4633 = vadd.f32 0.0, %v4632
      %v4634 = vpop.f32.mrb[0].mxu0
      %4635 = vmatprep.mubr.bf16.mxu0 0
      %4636 = vmatmul.mubr.bf16.gmra.mrb[0].mxu0 %v3263
      %v4637 = vpop.f32.mrb[0].mxu0
      %v4638 = vadd.f32 0.0, %v4637
      %v4639 = vpop.f32.mrb[0].mxu0
      %v4640 = vpop.f32.mrb[0].mxu0
      %v4641 = vadd.f32 0.0, %v4640
      %v4642 = vpop.f32.mrb[0].mxu0
      %4643 = vmatprep.mubr.bf16.mxu0 0
      %4644 = vmatmul.mubr.bf16.gmra.mrb[0].mxu0 %v3264
      %v4645 = vpop.f32.mrb[0].mxu0
      %v4646 = vadd.f32 0.0, %v4645
      %v4647 = vpop.f32.mrb[0].mxu0
      %v4648 = vpop.f32.mrb[0].mxu0
      %v4649 = vadd.f32 0.0, %v4648
      %v4650 = vpop.f32.mrb[0].mxu0
      %4651 = vmatprep.mubr.bf16.mxu0 0
      %4652 = vmatmul.mubr.bf16.gmra.mrb[0].mxu0 %v4010
      %v4653 = vpop.f32.mrb[0].mxu0
      %v4654 = vadd.f32 0.0, %v4653
      %v4655 = vpop.f32.mrb[0].mxu0
      %v4656 = vpop.f32.mrb[0].mxu0
      %v4657 = vadd.f32 0.0, %v4656
      %v4658 = vpop.f32.mrb[0].mxu0
      %4659 = vdwg.mxu0
      %v4660 = vadd.f32 %v4402, %v4534
      %v4661 = vadd.f32 %v4403, %v4537
      %v4662 = vadd.f32 %v4404, %v4542
      %v4663 = vadd.f32 %v4405, %v4545
      %v4664 = vadd.f32 %v4406, %v4550
      %v4665 = vadd.f32 %v4407, %v4553
      %v4666 = vadd.f32 %v4408, %v4558
      %v4667 = vadd.f32 %v4409, %v4561
      %v4668 = vadd.f32 %v4410, %v4566
      %v4669 = vadd.f32 %v4411, %v4569
      %v4670 = vadd.f32 %v4412, %v4574
      %v4671 = vadd.f32 %v4413, %v4577
      %v4672 = vadd.f32 %v4414, %v4582
      %v4673 = vadd.f32 %v4415, %v4585
      %v4674 = vadd.f32 %v4416, %v4590
      %v4675 = vadd.f32 %v4417, %v4593
      %v4676 = vadd.f32 %v4418, %v4598
      %v4677 = vadd.f32 %v4419, %v4601
      %v4678 = vadd.f32 %v4420, %v4606
      %v4679 = vadd.f32 %v4421, %v4609
      %v4680 = vadd.f32 %v4422, %v4614
      %v4681 = vadd.f32 %v4423, %v4617
      %v4682 = vadd.f32 %v4424, %v4622
      %v4683 = vadd.f32 %v4425, %v4625
      %v4684 = vadd.f32 %v4426, %v4630
      %v4685 = vadd.f32 %v4427, %v4633
      %v4686 = vadd.f32 %v4428, %v4638
      %v4687 = vadd.f32 %v4429, %v4641
      %v4688 = vadd.f32 %v4430, %v4646
      %v4689 = vadd.f32 %v4431, %v4649
      %v4690 = vadd.f32 %v4432, %v4654
      %v4691 = vadd.f32 %v4433, %v4657
      %v4692 = vld [vmem:[#allocation2 + $0x10] sm:$0xff]
      %v4693 = vld [vmem:[#allocation2 + $0x18] sm:$0xff]
      %v4694 = vld [vmem:[#allocation2 + $0x20] sm:$0xff]
      %v4695 = vld [vmem:[#allocation2 + $0x28] sm:$0xff]
      %v4696 = vld [vmem:[#allocation2 + $0x30] sm:$0xff]
      %v4697 = vld [vmem:[#allocation2 + $0x38] sm:$0xff]
      %v4698 = vld [vmem:[#allocation2 + $0x40] sm:$0xff]
      %v4699 = vld [vmem:[#allocation2 + $0x48] sm:$0xff]
      %v4700 = vld [vmem:[#allocation2 + $0x50] sm:$0xff]
      %v4701 = vld [vmem:[#allocation2 + $0x58] sm:$0xff]
      %v4702 = vld [vmem:[#allocation2 + $0x60] sm:$0xff]
      %v4703 = vld [vmem:[#allocation2 + $0x68] sm:$0xff]
      %v4704 = vld [vmem:[#allocation2 + $0x70] sm:$0xff]
      %v4705 = vld [vmem:[#allocation2 + $0x78] sm:$0xff]
      %v4706 = vld [vmem:[#allocation2 + $0x80] sm:$0xff]
      %v4707 = vld [vmem:[#allocation2 + $0x88] sm:$0xff]
      %v4708 = vld [vmem:[#allocation2 + $0x90] sm:$0x1]
      %v4709 = vsel %vm3569, %v4692, 0
      %v4710 = vsel %vm3570, %v4693, 0
      %v4711 = vsel %vm3571, %v4694, 0
      %v4712 = vsel %vm3572, %v4695, 0
      %v4713 = vsel %vm3573, %v4696, 0
      %v4714 = vsel %vm3574, %v4697, 0
      %v4715 = vsel %vm3575, %v4698, 0
      %v4716 = vsel %vm3576, %v4699, 0
      %v4717 = vsel %vm3577, %v4700, 0
      %v4718 = vsel %vm3578, %v4701, 0
      %v4719 = vsel %vm3579, %v4702, 0
      %v4720 = vsel %vm3580, %v4703, 0
      %v4721 = vsel %vm3581, %v4704, 0
      %v4722 = vsel %vm3582, %v4705, 0
      %v4723 = vsel %vm3583, %v4706, 0
      %v4724 = vsel %vm3584, %v4707, 0
      %v4725 = vsel %vm3585, %v4708, 0
      %s4726 = scalar_lea.vmem %s8, 320
      %v4727 = vld [vmem:[%s4726] sm:$0xf]
      %v4728 = vld [vmem:[%s4726 + $0x4] sm:$0xf]
      %v4729 = vld [vmem:[%s4726 + $0x8] sm:$0xf]
      %v4730 = vld [vmem:[%s4726 + $0xc] sm:$0xf]
      %v4731 = vld [vmem:[%s4726 + $0x10] sm:$0xf]
      %v4732 = vld [vmem:[%s4726 + $0x14] sm:$0xf]
      %v4733 = vld [vmem:[%s4726 + $0x18] sm:$0xf]
      %v4734 = vld [vmem:[%s4726 + $0x1c] sm:$0xf]
      %v4735 = vld [vmem:[%s4726 + $0x20] sm:$0xf]
      %v4736 = vld [vmem:[%s4726 + $0x24] sm:$0xf]
      %v4737 = vld [vmem:[%s4726 + $0x28] sm:$0xf]
      %v4738 = vld [vmem:[%s4726 + $0x2c] sm:$0xf]
      %v4739 = vld [vmem:[%s4726 + $0x30] sm:$0xf]
      %v4740 = vld [vmem:[%s4726 + $0x34] sm:$0xf]
      %v4741 = vld [vmem:[%s4726 + $0x38] sm:$0xf]
      %v4742 = vld [vmem:[%s4726 + $0x3c] sm:$0xf]
      %v4744 = vshrl.u32 %v4709, 16
      %v4746 = vshll.u32 %v4709, 16
      %v4748 = vrot.slane %v4746, 1
      %v4749 = vor.u32 %v4744, %v4748
      %v4751 = vshll.u32 %v4710, 16
      %v4753 = vrot.slane %v4751, 1
      %v4754 = vsel %vm2487, %v4749, %v4753
      %v4755 = vshrl.u32 %v4710, 16
      %v4757 = vor.u32 %v4755, %v4753
      %v4759 = vshll.u32 %v4711, 16
      %v4761 = vrot.slane %v4759, 1
      %v4762 = vsel %vm2487, %v4757, %v4761
      %v4763 = vshrl.u32 %v4711, 16
      %v4765 = vor.u32 %v4763, %v4761
      %v4767 = vshll.u32 %v4712, 16
      %v4769 = vrot.slane %v4767, 1
      %v4770 = vsel %vm2487, %v4765, %v4769
      %v4771 = vshrl.u32 %v4712, 16
      %v4773 = vor.u32 %v4771, %v4769
      %v4775 = vshll.u32 %v4713, 16
      %v4777 = vrot.slane %v4775, 1
      %v4778 = vsel %vm2487, %v4773, %v4777
      %v4779 = vshrl.u32 %v4713, 16
      %v4781 = vor.u32 %v4779, %v4777
      %v4783 = vshll.u32 %v4714, 16
      %v4785 = vrot.slane %v4783, 1
      %v4786 = vsel %vm2487, %v4781, %v4785
      %v4787 = vshrl.u32 %v4714, 16
      %v4789 = vor.u32 %v4787, %v4785
      %v4791 = vshll.u32 %v4715, 16
      %v4793 = vrot.slane %v4791, 1
      %v4794 = vsel %vm2487, %v4789, %v4793
      %v4795 = vshrl.u32 %v4715, 16
      %v4797 = vor.u32 %v4795, %v4793
      %v4799 = vshll.u32 %v4716, 16
      %v4801 = vrot.slane %v4799, 1
      %v4802 = vsel %vm2487, %v4797, %v4801
      %v4803 = vshrl.u32 %v4716, 16
      %v4805 = vor.u32 %v4803, %v4801
      %v4807 = vshll.u32 %v4717, 16
      %v4809 = vrot.slane %v4807, 1
      %v4810 = vsel %vm2487, %v4805, %v4809
      %v4811 = vshrl.u32 %v4717, 16
      %v4813 = vor.u32 %v4811, %v4809
      %v4815 = vshll.u32 %v4718, 16
      %v4817 = vrot.slane %v4815, 1
      %v4818 = vsel %vm2487, %v4813, %v4817
      %v4819 = vshrl.u32 %v4718, 16
      %v4821 = vor.u32 %v4819, %v4817
      %v4823 = vshll.u32 %v4719, 16
      %v4825 = vrot.slane %v4823, 1
      %v4826 = vsel %vm2487, %v4821, %v4825
      %v4827 = vshrl.u32 %v4719, 16
      %v4829 = vor.u32 %v4827, %v4825
      %v4831 = vshll.u32 %v4720, 16
      %v4833 = vrot.slane %v4831, 1
      %v4834 = vsel %vm2487, %v4829, %v4833
      %v4835 = vshrl.u32 %v4720, 16
      %v4837 = vor.u32 %v4835, %v4833
      %v4839 = vshll.u32 %v4721, 16
      %v4841 = vrot.slane %v4839, 1
      %v4842 = vsel %vm2487, %v4837, %v4841
      %v4843 = vshrl.u32 %v4721, 16
      %v4845 = vor.u32 %v4843, %v4841
      %v4847 = vshll.u32 %v4722, 16
      %v4849 = vrot.slane %v4847, 1
      %v4850 = vsel %vm2487, %v4845, %v4849
      %v4851 = vshrl.u32 %v4722, 16
      %v4853 = vor.u32 %v4851, %v4849
      %v4855 = vshll.u32 %v4723, 16
      %v4857 = vrot.slane %v4855, 1
      %v4858 = vsel %vm2487, %v4853, %v4857
      %v4859 = vshrl.u32 %v4723, 16
      %v4861 = vor.u32 %v4859, %v4857
      %v4863 = vshll.u32 %v4724, 16
      %v4865 = vrot.slane %v4863, 1
      %v4866 = vsel %vm2487, %v4861, %v4865
      %v4867 = vshrl.u32 %v4724, 16
      %v4869 = vor.u32 %v4867, %v4865
      %v4871 = vshll.u32 %v4725, 16
      %v4873 = vrot.slane %v4871, 1
      %v4874 = vsel %vm2487, %v4869, %v4873
      %v4907 = vunpack.c.l.b16 %v4727
      %v4908 = vunpack.c.l.b16 %v4728
      %v4909 = vunpack.c.l.b16 %v4729
      %v4910 = vunpack.c.l.b16 %v4730
      %v4911 = vunpack.c.l.b16 %v4731
      %v4912 = vunpack.c.l.b16 %v4732
      %v4913 = vunpack.c.l.b16 %v4733
      %v4914 = vunpack.c.l.b16 %v4734
      %v4915 = vunpack.c.l.b16 %v4735
      %v4916 = vunpack.c.l.b16 %v4736
      %v4917 = vunpack.c.l.b16 %v4737
      %v4918 = vunpack.c.l.b16 %v4738
      %v4919 = vunpack.c.l.b16 %v4739
      %v4920 = vunpack.c.l.b16 %v4740
      %v4921 = vunpack.c.l.b16 %v4741
      %v4922 = vunpack.c.l.b16 %v4742
      %v4923 = vpack.c.b16 %v4908, %v4907
      %v4924 = vpack.c.b16 %v4910, %v4909
      %v4925 = vpack.c.b16 %v4912, %v4911
      %v4926 = vpack.c.b16 %v4914, %v4913
      %v4927 = vpack.c.b16 %v4916, %v4915
      %v4928 = vpack.c.b16 %v4918, %v4917
      %v4929 = vpack.c.b16 %v4920, %v4919
      %v4930 = vpack.c.b16 %v4922, %v4921
      %4939 = vmatprep.subr.bf16.mxu0 0
      %4940 = vmatpush1.bf16.msra.mxu0 %v4923
      %4941 = vmatprep.subr.bf16.mxu0 0
      %4942 = vmatpush1.bf16.msra.mxu0 %v4924
      %4943 = vmatprep.subr.bf16.mxu0 0
      %4944 = vmatpush1.bf16.msra.mxu0 %v4925
      %4945 = vmatprep.subr.bf16.mxu0 0
      %4946 = vmatpush1.bf16.msra.mxu0 %v4926
      %4947 = vmatprep.subr.bf16.mxu0 0
      %4948 = vmatpush1.bf16.msra.mxu0 %v4927
      %4949 = vmatprep.subr.bf16.mxu0 0
      %4950 = vmatpush1.bf16.msra.mxu0 %v4928
      %4951 = vmatprep.subr.bf16.mxu0 0
      %4952 = vmatpush1.bf16.msra.mxu0 %v4929
      %4953 = vmatprep.subr.bf16.mxu0 0
      %4954 = vmatpush1.bf16.msra.mxu0 %v4930
      %4955 = vmatprep.subr.bf16.mxu0 0
      %4956 = vmatpush1.bf16.msra.mxu0 0
      %4957 = vmatprep.subr.bf16.mxu0 0
      %4958 = vmatpush1.bf16.msra.mxu0 0
      %4959 = vmatprep.subr.bf16.mxu0 0
      %4960 = vmatpush1.bf16.msra.mxu0 0
      %4961 = vmatprep.subr.bf16.mxu0 0
      %4962 = vmatpush1.bf16.msra.mxu0 0
      %4963 = vmatprep.subr.bf16.mxu0 0
      %4964 = vmatpush1.bf16.msra.mxu0 0
      %4965 = vmatprep.subr.bf16.mxu0 0
      %4966 = vmatpush1.bf16.msra.mxu0 0
      %4967 = vmatprep.subr.bf16.mxu0 0
      %4968 = vmatpush1.bf16.msra.mxu0 0
      %4969 = vmatprep.subr.bf16.mxu0 0
      %4970 = vmatpush1.bf16.msra.mxu0 0
      %4971 = vmatprep.mubr.bf16.mxu0 0
      %4972 = vmatmul.mubr.bf16.gmra.mrb[0].mxu0 %v4754
      %v4973 = vpop.f32.mrb[0].mxu0
      %v4974 = vadd.f32 0.0, %v4973
      %v4975 = vpop.f32.mrb[0].mxu0
      %v4976 = vpop.f32.mrb[0].mxu0
      %v4977 = vadd.f32 0.0, %v4976
      %v4978 = vpop.f32.mrb[0].mxu0
      %4979 = vmatprep.mubr.bf16.mxu0 0
      %4980 = vmatmul.mubr.bf16.gmra.mrb[0].mxu0 %v4762
      %v4981 = vpop.f32.mrb[0].mxu0
      %v4982 = vadd.f32 0.0, %v4981
      %v4983 = vpop.f32.mrb[0].mxu0
      %v4984 = vpop.f32.mrb[0].mxu0
      %v4985 = vadd.f32 0.0, %v4984
      %v4986 = vpop.f32.mrb[0].mxu0
      %4987 = vmatprep.mubr.bf16.mxu0 0
      %4988 = vmatmul.mubr.bf16.gmra.mrb[0].mxu0 %v4770
      %v4989 = vpop.f32.mrb[0].mxu0
      %v4990 = vadd.f32 0.0, %v4989
      %v4991 = vpop.f32.mrb[0].mxu0
      %v4992 = vpop.f32.mrb[0].mxu0
      %v4993 = vadd.f32 0.0, %v4992
      %v4994 = vpop.f32.mrb[0].mxu0
      %4995 = vmatprep.mubr.bf16.mxu0 0
      %4996 = vmatmul.mubr.bf16.gmra.mrb[0].mxu0 %v4778
      %v4997 = vpop.f32.mrb[0].mxu0
      %v4998 = vadd.f32 0.0, %v4997
      %v4999 = vpop.f32.mrb[0].mxu0
      %v5000 = vpop.f32.mrb[0].mxu0
      %v5001 = vadd.f32 0.0, %v5000
      %v5002 = vpop.f32.mrb[0].mxu0
      %5003 = vmatprep.mubr.bf16.mxu0 0
      %5004 = vmatmul.mubr.bf16.gmra.mrb[0].mxu0 %v4786
      %v5005 = vpop.f32.mrb[0].mxu0
      %v5006 = vadd.f32 0.0, %v5005
      %v5007 = vpop.f32.mrb[0].mxu0
      %v5008 = vpop.f32.mrb[0].mxu0
      %v5009 = vadd.f32 0.0, %v5008
      %v5010 = vpop.f32.mrb[0].mxu0
      %5011 = vmatprep.mubr.bf16.mxu0 0
      %5012 = vmatmul.mubr.bf16.gmra.mrb[0].mxu0 %v4794
      %v5013 = vpop.f32.mrb[0].mxu0
      %v5014 = vadd.f32 0.0, %v5013
      %v5015 = vpop.f32.mrb[0].mxu0
      %v5016 = vpop.f32.mrb[0].mxu0
      %v5017 = vadd.f32 0.0, %v5016
      %v5018 = vpop.f32.mrb[0].mxu0
      %5019 = vmatprep.mubr.bf16.mxu0 0
      %5020 = vmatmul.mubr.bf16.gmra.mrb[0].mxu0 %v4802
      %v5021 = vpop.f32.mrb[0].mxu0
      %v5022 = vadd.f32 0.0, %v5021
      %v5023 = vpop.f32.mrb[0].mxu0
      %v5024 = vpop.f32.mrb[0].mxu0
      %v5025 = vadd.f32 0.0, %v5024
      %v5026 = vpop.f32.mrb[0].mxu0
      %5027 = vmatprep.mubr.bf16.mxu0 0
      %5028 = vmatmul.mubr.bf16.gmra.mrb[0].mxu0 %v4810
      %v5029 = vpop.f32.mrb[0].mxu0
      %v5030 = vadd.f32 0.0, %v5029
      %v5031 = vpop.f32.mrb[0].mxu0
      %v5032 = vpop.f32.mrb[0].mxu0
      %v5033 = vadd.f32 0.0, %v5032
      %v5034 = vpop.f32.mrb[0].mxu0
      %5035 = vmatprep.mubr.bf16.mxu0 0
      %5036 = vmatmul.mubr.bf16.gmra.mrb[0].mxu0 %v4818
      %v5037 = vpop.f32.mrb[0].mxu0
      %v5038 = vadd.f32 0.0, %v5037
      %v5039 = vpop.f32.mrb[0].mxu0
      %v5040 = vpop.f32.mrb[0].mxu0
      %v5041 = vadd.f32 0.0, %v5040
      %v5042 = vpop.f32.mrb[0].mxu0
      %5043 = vmatprep.mubr.bf16.mxu0 0
      %5044 = vmatmul.mubr.bf16.gmra.mrb[0].mxu0 %v4826
      %v5045 = vpop.f32.mrb[0].mxu0
      %v5046 = vadd.f32 0.0, %v5045
      %v5047 = vpop.f32.mrb[0].mxu0
      %v5048 = vpop.f32.mrb[0].mxu0
      %v5049 = vadd.f32 0.0, %v5048
      %v5050 = vpop.f32.mrb[0].mxu0
      %5051 = vmatprep.mubr.bf16.mxu0 0
      %5052 = vmatmul.mubr.bf16.gmra.mrb[0].mxu0 %v4834
      %v5053 = vpop.f32.mrb[0].mxu0
      %v5054 = vadd.f32 0.0, %v5053
      %v5055 = vpop.f32.mrb[0].mxu0
      %v5056 = vpop.f32.mrb[0].mxu0
      %v5057 = vadd.f32 0.0, %v5056
      %v5058 = vpop.f32.mrb[0].mxu0
      %5059 = vmatprep.mubr.bf16.mxu0 0
      %5060 = vmatmul.mubr.bf16.gmra.mrb[0].mxu0 %v4842
      %v5061 = vpop.f32.mrb[0].mxu0
      %v5062 = vadd.f32 0.0, %v5061
      %v5063 = vpop.f32.mrb[0].mxu0
      %v5064 = vpop.f32.mrb[0].mxu0
      %v5065 = vadd.f32 0.0, %v5064
      %v5066 = vpop.f32.mrb[0].mxu0
      %5067 = vmatprep.mubr.bf16.mxu0 0
      %5068 = vmatmul.mubr.bf16.gmra.mrb[0].mxu0 %v4850
      %v5069 = vpop.f32.mrb[0].mxu0
      %v5070 = vadd.f32 0.0, %v5069
      %v5071 = vpop.f32.mrb[0].mxu0
      %v5072 = vpop.f32.mrb[0].mxu0
      %v5073 = vadd.f32 0.0, %v5072
      %v5074 = vpop.f32.mrb[0].mxu0
      %5075 = vmatprep.mubr.bf16.mxu0 0
      %5076 = vmatmul.mubr.bf16.gmra.mrb[0].mxu0 %v4858
      %v5077 = vpop.f32.mrb[0].mxu0
      %v5078 = vadd.f32 0.0, %v5077
      %v5079 = vpop.f32.mrb[0].mxu0
      %v5080 = vpop.f32.mrb[0].mxu0
      %v5081 = vadd.f32 0.0, %v5080
      %v5082 = vpop.f32.mrb[0].mxu0
      %5083 = vmatprep.mubr.bf16.mxu0 0
      %5084 = vmatmul.mubr.bf16.gmra.mrb[0].mxu0 %v4866
      %v5085 = vpop.f32.mrb[0].mxu0
      %v5086 = vadd.f32 0.0, %v5085
      %v5087 = vpop.f32.mrb[0].mxu0
      %v5088 = vpop.f32.mrb[0].mxu0
      %v5089 = vadd.f32 0.0, %v5088
      %v5090 = vpop.f32.mrb[0].mxu0
      %5091 = vmatprep.mubr.bf16.mxu0 0
      %5092 = vmatmul.mubr.bf16.gmra.mrb[0].mxu0 %v4874
      %v5093 = vpop.f32.mrb[0].mxu0
      %v5094 = vadd.f32 0.0, %v5093
      %v5095 = vpop.f32.mrb[0].mxu0
      %v5096 = vpop.f32.mrb[0].mxu0
      %v5097 = vadd.f32 0.0, %v5096
      %v5098 = vpop.f32.mrb[0].mxu0
      %5099 = vdwg.mxu0
      %v5100 = vadd.f32 %v4660, %v4974
      %v5101 = vadd.f32 %v4661, %v4977
      %v5102 = vadd.f32 %v4662, %v4982
      %v5103 = vadd.f32 %v4663, %v4985
      %v5104 = vadd.f32 %v4664, %v4990
      %v5105 = vadd.f32 %v4665, %v4993
      %v5106 = vadd.f32 %v4666, %v4998
      %v5107 = vadd.f32 %v4667, %v5001
      %v5108 = vadd.f32 %v4668, %v5006
      %v5109 = vadd.f32 %v4669, %v5009
      %v5110 = vadd.f32 %v4670, %v5014
      %v5111 = vadd.f32 %v4671, %v5017
      %v5112 = vadd.f32 %v4672, %v5022
      %v5113 = vadd.f32 %v4673, %v5025
      %v5114 = vadd.f32 %v4674, %v5030
      %v5115 = vadd.f32 %v4675, %v5033
      %v5116 = vadd.f32 %v4676, %v5038
      %v5117 = vadd.f32 %v4677, %v5041
      %v5118 = vadd.f32 %v4678, %v5046
      %v5119 = vadd.f32 %v4679, %v5049
      %v5120 = vadd.f32 %v4680, %v5054
      %v5121 = vadd.f32 %v4681, %v5057
      %v5122 = vadd.f32 %v4682, %v5062
      %v5123 = vadd.f32 %v4683, %v5065
      %v5124 = vadd.f32 %v4684, %v5070
      %v5125 = vadd.f32 %v4685, %v5073
      %v5126 = vadd.f32 %v4686, %v5078
      %v5127 = vadd.f32 %v4687, %v5081
      %v5128 = vadd.f32 %v4688, %v5086
      %v5129 = vadd.f32 %v4689, %v5089
      %v5130 = vadd.f32 %v4690, %v5094
      %v5131 = vadd.f32 %v4691, %v5097
      %v5132 = vld [vmem:[#allocation2 + $0x10] sm:$0x80]
      %v5133 = vld [vmem:[#allocation2 + $0x90] sm:$0xff]
      %v5134 = vsel %vm2615, %v5132, 0
      %v5135 = vsel %vm2616, %v4693, 0
      %v5136 = vsel %vm2617, %v4694, 0
      %v5137 = vsel %vm2618, %v4695, 0
      %v5138 = vsel %vm2619, %v4696, 0
      %v5139 = vsel %vm2620, %v4697, 0
      %v5140 = vsel %vm2621, %v4698, 0
      %v5141 = vsel %vm2622, %v4699, 0
      %v5142 = vsel %vm2623, %v4700, 0
      %v5143 = vsel %vm2624, %v4701, 0
      %v5144 = vsel %vm2625, %v4702, 0
      %v5145 = vsel %vm2626, %v4703, 0
      %v5146 = vsel %vm2627, %v4704, 0
      %v5147 = vsel %vm2628, %v4705, 0
      %v5148 = vsel %vm2629, %v4706, 0
      %v5149 = vsel %vm2630, %v4707, 0
      %v5150 = vsel %vm2631, %v5133, 0
      %s5151 = scalar_lea.vmem %s8, 384
      %v5152 = vld [vmem:[%s5151] sm:$0xf]
      %v5153 = vld [vmem:[%s5151 + $0x4] sm:$0xf]
      %v5154 = vld [vmem:[%s5151 + $0x8] sm:$0xf]
      %v5155 = vld [vmem:[%s5151 + $0xc] sm:$0xf]
      %v5156 = vld [vmem:[%s5151 + $0x10] sm:$0xf]
      %v5157 = vld [vmem:[%s5151 + $0x14] sm:$0xf]
      %v5158 = vld [vmem:[%s5151 + $0x18] sm:$0xf]
      %v5159 = vld [vmem:[%s5151 + $0x1c] sm:$0xf]
      %v5160 = vld [vmem:[%s5151 + $0x20] sm:$0xf]
      %v5161 = vld [vmem:[%s5151 + $0x24] sm:$0xf]
      %v5162 = vld [vmem:[%s5151 + $0x28] sm:$0xf]
      %v5163 = vld [vmem:[%s5151 + $0x2c] sm:$0xf]
      %v5164 = vld [vmem:[%s5151 + $0x30] sm:$0xf]
      %v5165 = vld [vmem:[%s5151 + $0x34] sm:$0xf]
      %v5166 = vld [vmem:[%s5151 + $0x38] sm:$0xf]
      %v5167 = vld [vmem:[%s5151 + $0x3c] sm:$0xf]
      %v5169 = vshrl.u32 %v5134, 16
      %v5171 = vrot.slane %v5169, 7
      %v5173 = vshrl.u32 %v5135, 16
      %v5175 = vrot.slane %v5173, 7
      %v5176 = vshll.u32 %v5135, 16
      %v5178 = vor.u32 %v5175, %v5176
      %v5179 = vsel %vm2891, %v5171, %v5178
      %v5181 = vshrl.u32 %v5136, 16
      %v5183 = vrot.slane %v5181, 7
      %v5184 = vshll.u32 %v5136, 16
      %v5186 = vor.u32 %v5183, %v5184
      %v5187 = vsel %vm2891, %v5175, %v5186
      %v5189 = vshrl.u32 %v5137, 16
      %v5191 = vrot.slane %v5189, 7
      %v5192 = vshll.u32 %v5137, 16
      %v5194 = vor.u32 %v5191, %v5192
      %v5195 = vsel %vm2891, %v5183, %v5194
      %v5197 = vshrl.u32 %v5138, 16
      %v5199 = vrot.slane %v5197, 7
      %v5200 = vshll.u32 %v5138, 16
      %v5202 = vor.u32 %v5199, %v5200
      %v5203 = vsel %vm2891, %v5191, %v5202
      %v5205 = vshrl.u32 %v5139, 16
      %v5207 = vrot.slane %v5205, 7
      %v5208 = vshll.u32 %v5139, 16
      %v5210 = vor.u32 %v5207, %v5208
      %v5211 = vsel %vm2891, %v5199, %v5210
      %v5213 = vshrl.u32 %v5140, 16
      %v5215 = vrot.slane %v5213, 7
      %v5216 = vshll.u32 %v5140, 16
      %v5218 = vor.u32 %v5215, %v5216
      %v5219 = vsel %vm2891, %v5207, %v5218
      %v5221 = vshrl.u32 %v5141, 16
      %v5223 = vrot.slane %v5221, 7
      %v5224 = vshll.u32 %v5141, 16
      %v5226 = vor.u32 %v5223, %v5224
      %v5227 = vsel %vm2891, %v5215, %v5226
      %v5229 = vshrl.u32 %v5142, 16
      %v5231 = vrot.slane %v5229, 7
      %v5232 = vshll.u32 %v5142, 16
      %v5234 = vor.u32 %v5231, %v5232
      %v5235 = vsel %vm2891, %v5223, %v5234
      %v5237 = vshrl.u32 %v5143, 16
      %v5239 = vrot.slane %v5237, 7
      %v5240 = vshll.u32 %v5143, 16
      %v5242 = vor.u32 %v5239, %v5240
      %v5243 = vsel %vm2891, %v5231, %v5242
      %v5245 = vshrl.u32 %v5144, 16
      %v5247 = vrot.slane %v5245, 7
      %v5248 = vshll.u32 %v5144, 16
      %v5250 = vor.u32 %v5247, %v5248
      %v5251 = vsel %vm2891, %v5239, %v5250
      %v5253 = vshrl.u32 %v5145, 16
      %v5255 = vrot.slane %v5253, 7
      %v5256 = vshll.u32 %v5145, 16
      %v5258 = vor.u32 %v5255, %v5256
      %v5259 = vsel %vm2891, %v5247, %v5258
      %v5261 = vshrl.u32 %v5146, 16
      %v5263 = vrot.slane %v5261, 7
      %v5264 = vshll.u32 %v5146, 16
      %v5266 = vor.u32 %v5263, %v5264
      %v5267 = vsel %vm2891, %v5255, %v5266
      %v5269 = vshrl.u32 %v5147, 16
      %v5271 = vrot.slane %v5269, 7
      %v5272 = vshll.u32 %v5147, 16
      %v5274 = vor.u32 %v5271, %v5272
      %v5275 = vsel %vm2891, %v5263, %v5274
      %v5277 = vshrl.u32 %v5148, 16
      %v5279 = vrot.slane %v5277, 7
      %v5280 = vshll.u32 %v5148, 16
      %v5282 = vor.u32 %v5279, %v5280
      %v5283 = vsel %vm2891, %v5271, %v5282
      %v5285 = vshrl.u32 %v5149, 16
      %v5287 = vrot.slane %v5285, 7
      %v5288 = vshll.u32 %v5149, 16
      %v5290 = vor.u32 %v5287, %v5288
      %v5291 = vsel %vm2891, %v5279, %v5290
      %v5293 = vshrl.u32 %v5150, 16
      %v5295 = vrot.slane %v5293, 7
      %v5296 = vshll.u32 %v5150, 16
      %v5298 = vor.u32 %v5295, %v5296
      %v5299 = vsel %vm2891, %v5287, %v5298
      %v5332 = vunpack.c.l.b16 %v5152
      %v5333 = vunpack.c.l.b16 %v5153
      %v5334 = vunpack.c.l.b16 %v5154
      %v5335 = vunpack.c.l.b16 %v5155
      %v5336 = vunpack.c.l.b16 %v5156
      %v5337 = vunpack.c.l.b16 %v5157
      %v5338 = vunpack.c.l.b16 %v5158
      %v5339 = vunpack.c.l.b16 %v5159
      %v5340 = vunpack.c.l.b16 %v5160
      %v5341 = vunpack.c.l.b16 %v5161
      %v5342 = vunpack.c.l.b16 %v5162
      %v5343 = vunpack.c.l.b16 %v5163
      %v5344 = vunpack.c.l.b16 %v5164
      %v5345 = vunpack.c.l.b16 %v5165
      %v5346 = vunpack.c.l.b16 %v5166
      %v5347 = vunpack.c.l.b16 %v5167
      %v5348 = vpack.c.b16 %v5333, %v5332
      %v5349 = vpack.c.b16 %v5335, %v5334
      %v5350 = vpack.c.b16 %v5337, %v5336
      %v5351 = vpack.c.b16 %v5339, %v5338
      %v5352 = vpack.c.b16 %v5341, %v5340
      %v5353 = vpack.c.b16 %v5343, %v5342
      %v5354 = vpack.c.b16 %v5345, %v5344
      %v5355 = vpack.c.b16 %v5347, %v5346
      %5364 = vmatprep.subr.bf16.mxu0 0
      %5365 = vmatpush1.bf16.msra.mxu0 %v5348
      %5366 = vmatprep.subr.bf16.mxu0 0
      %5367 = vmatpush1.bf16.msra.mxu0 %v5349
      %5368 = vmatprep.subr.bf16.mxu0 0
      %5369 = vmatpush1.bf16.msra.mxu0 %v5350
      %5370 = vmatprep.subr.bf16.mxu0 0
      %5371 = vmatpush1.bf16.msra.mxu0 %v5351
      %5372 = vmatprep.subr.bf16.mxu0 0
      %5373 = vmatpush1.bf16.msra.mxu0 %v5352
      %5374 = vmatprep.subr.bf16.mxu0 0
      %5375 = vmatpush1.bf16.msra.mxu0 %v5353
      %5376 = vmatprep.subr.bf16.mxu0 0
      %5377 = vmatpush1.bf16.msra.mxu0 %v5354
      %5378 = vmatprep.subr.bf16.mxu0 0
      %5379 = vmatpush1.bf16.msra.mxu0 %v5355
      %5380 = vmatprep.subr.bf16.mxu0 0
      %5381 = vmatpush1.bf16.msra.mxu0 0
      %5382 = vmatprep.subr.bf16.mxu0 0
      %5383 = vmatpush1.bf16.msra.mxu0 0
      %5384 = vmatprep.subr.bf16.mxu0 0
      %5385 = vmatpush1.bf16.msra.mxu0 0
      %5386 = vmatprep.subr.bf16.mxu0 0
      %5387 = vmatpush1.bf16.msra.mxu0 0
      %5388 = vmatprep.subr.bf16.mxu0 0
      %5389 = vmatpush1.bf16.msra.mxu0 0
      %5390 = vmatprep.subr.bf16.mxu0 0
      %5391 = vmatpush1.bf16.msra.mxu0 0
      %5392 = vmatprep.subr.bf16.mxu0 0
      %5393 = vmatpush1.bf16.msra.mxu0 0
      %5394 = vmatprep.subr.bf16.mxu0 0
      %5395 = vmatpush1.bf16.msra.mxu0 0
      %5396 = vmatprep.mubr.bf16.mxu0 0
      %5397 = vmatmul.mubr.bf16.gmra.mrb[0].mxu0 %v5179
      %v5398 = vpop.f32.mrb[0].mxu0
      %v5399 = vadd.f32 0.0, %v5398
      %v5400 = vpop.f32.mrb[0].mxu0
      %v5401 = vpop.f32.mrb[0].mxu0
      %v5402 = vadd.f32 0.0, %v5401
      %v5403 = vpop.f32.mrb[0].mxu0
      %5404 = vmatprep.mubr.bf16.mxu0 0
      %5405 = vmatmul.mubr.bf16.gmra.mrb[0].mxu0 %v5187
      %v5406 = vpop.f32.mrb[0].mxu0
      %v5407 = vadd.f32 0.0, %v5406
      %v5408 = vpop.f32.mrb[0].mxu0
      %v5409 = vpop.f32.mrb[0].mxu0
      %v5410 = vadd.f32 0.0, %v5409
      %v5411 = vpop.f32.mrb[0].mxu0
      %5412 = vmatprep.mubr.bf16.mxu0 0
      %5413 = vmatmul.mubr.bf16.gmra.mrb[0].mxu0 %v5195
      %v5414 = vpop.f32.mrb[0].mxu0
      %v5415 = vadd.f32 0.0, %v5414
      %v5416 = vpop.f32.mrb[0].mxu0
      %v5417 = vpop.f32.mrb[0].mxu0
      %v5418 = vadd.f32 0.0, %v5417
      %v5419 = vpop.f32.mrb[0].mxu0
      %5420 = vmatprep.mubr.bf16.mxu0 0
      %5421 = vmatmul.mubr.bf16.gmra.mrb[0].mxu0 %v5203
      %v5422 = vpop.f32.mrb[0].mxu0
      %v5423 = vadd.f32 0.0, %v5422
      %v5424 = vpop.f32.mrb[0].mxu0
      %v5425 = vpop.f32.mrb[0].mxu0
      %v5426 = vadd.f32 0.0, %v5425
      %v5427 = vpop.f32.mrb[0].mxu0
      %5428 = vmatprep.mubr.bf16.mxu0 0
      %5429 = vmatmul.mubr.bf16.gmra.mrb[0].mxu0 %v5211
      %v5430 = vpop.f32.mrb[0].mxu0
      %v5431 = vadd.f32 0.0, %v5430
      %v5432 = vpop.f32.mrb[0].mxu0
      %v5433 = vpop.f32.mrb[0].mxu0
      %v5434 = vadd.f32 0.0, %v5433
      %v5435 = vpop.f32.mrb[0].mxu0
      %5436 = vmatprep.mubr.bf16.mxu0 0
      %5437 = vmatmul.mubr.bf16.gmra.mrb[0].mxu0 %v5219
      %v5438 = vpop.f32.mrb[0].mxu0
      %v5439 = vadd.f32 0.0, %v5438
      %v5440 = vpop.f32.mrb[0].mxu0
      %v5441 = vpop.f32.mrb[0].mxu0
      %v5442 = vadd.f32 0.0, %v5441
      %v5443 = vpop.f32.mrb[0].mxu0
      %5444 = vmatprep.mubr.bf16.mxu0 0
      %5445 = vmatmul.mubr.bf16.gmra.mrb[0].mxu0 %v5227
      %v5446 = vpop.f32.mrb[0].mxu0
      %v5447 = vadd.f32 0.0, %v5446
      %v5448 = vpop.f32.mrb[0].mxu0
      %v5449 = vpop.f32.mrb[0].mxu0
      %v5450 = vadd.f32 0.0, %v5449
      %v5451 = vpop.f32.mrb[0].mxu0
      %5452 = vmatprep.mubr.bf16.mxu0 0
      %5453 = vmatmul.mubr.bf16.gmra.mrb[0].mxu0 %v5235
      %v5454 = vpop.f32.mrb[0].mxu0
      %v5455 = vadd.f32 0.0, %v5454
      %v5456 = vpop.f32.mrb[0].mxu0
      %v5457 = vpop.f32.mrb[0].mxu0
      %v5458 = vadd.f32 0.0, %v5457
      %v5459 = vpop.f32.mrb[0].mxu0
      %5460 = vmatprep.mubr.bf16.mxu0 0
      %5461 = vmatmul.mubr.bf16.gmra.mrb[0].mxu0 %v5243
      %v5462 = vpop.f32.mrb[0].mxu0
      %v5463 = vadd.f32 0.0, %v5462
      %v5464 = vpop.f32.mrb[0].mxu0
      %v5465 = vpop.f32.mrb[0].mxu0
      %v5466 = vadd.f32 0.0, %v5465
      %v5467 = vpop.f32.mrb[0].mxu0
      %5468 = vmatprep.mubr.bf16.mxu0 0
      %5469 = vmatmul.mubr.bf16.gmra.mrb[0].mxu0 %v5251
      %v5470 = vpop.f32.mrb[0].mxu0
      %v5471 = vadd.f32 0.0, %v5470
      %v5472 = vpop.f32.mrb[0].mxu0
      %v5473 = vpop.f32.mrb[0].mxu0
      %v5474 = vadd.f32 0.0, %v5473
      %v5475 = vpop.f32.mrb[0].mxu0
      %5476 = vmatprep.mubr.bf16.mxu0 0
      %5477 = vmatmul.mubr.bf16.gmra.mrb[0].mxu0 %v5259
      %v5478 = vpop.f32.mrb[0].mxu0
      %v5479 = vadd.f32 0.0, %v5478
      %v5480 = vpop.f32.mrb[0].mxu0
      %v5481 = vpop.f32.mrb[0].mxu0
      %v5482 = vadd.f32 0.0, %v5481
      %v5483 = vpop.f32.mrb[0].mxu0
      %5484 = vmatprep.mubr.bf16.mxu0 0
      %5485 = vmatmul.mubr.bf16.gmra.mrb[0].mxu0 %v5267
      %v5486 = vpop.f32.mrb[0].mxu0
      %v5487 = vadd.f32 0.0, %v5486
      %v5488 = vpop.f32.mrb[0].mxu0
      %v5489 = vpop.f32.mrb[0].mxu0
      %v5490 = vadd.f32 0.0, %v5489
      %v5491 = vpop.f32.mrb[0].mxu0
      %5492 = vmatprep.mubr.bf16.mxu0 0
      %5493 = vmatmul.mubr.bf16.gmra.mrb[0].mxu0 %v5275
      %v5494 = vpop.f32.mrb[0].mxu0
      %v5495 = vadd.f32 0.0, %v5494
      %v5496 = vpop.f32.mrb[0].mxu0
      %v5497 = vpop.f32.mrb[0].mxu0
      %v5498 = vadd.f32 0.0, %v5497
      %v5499 = vpop.f32.mrb[0].mxu0
      %5500 = vmatprep.mubr.bf16.mxu0 0
      %5501 = vmatmul.mubr.bf16.gmra.mrb[0].mxu0 %v5283
      %v5502 = vpop.f32.mrb[0].mxu0
      %v5503 = vadd.f32 0.0, %v5502
      %v5504 = vpop.f32.mrb[0].mxu0
      %v5505 = vpop.f32.mrb[0].mxu0
      %v5506 = vadd.f32 0.0, %v5505
      %v5507 = vpop.f32.mrb[0].mxu0
      %5508 = vmatprep.mubr.bf16.mxu0 0
      %5509 = vmatmul.mubr.bf16.gmra.mrb[0].mxu0 %v5291
      %v5510 = vpop.f32.mrb[0].mxu0
      %v5511 = vadd.f32 0.0, %v5510
      %v5512 = vpop.f32.mrb[0].mxu0
      %v5513 = vpop.f32.mrb[0].mxu0
      %v5514 = vadd.f32 0.0, %v5513
      %v5515 = vpop.f32.mrb[0].mxu0
      %5516 = vmatprep.mubr.bf16.mxu0 0
      %5517 = vmatmul.mubr.bf16.gmra.mrb[0].mxu0 %v5299
      %v5518 = vpop.f32.mrb[0].mxu0
      %v5519 = vadd.f32 0.0, %v5518
      %v5520 = vpop.f32.mrb[0].mxu0
      %v5521 = vpop.f32.mrb[0].mxu0
      %v5522 = vadd.f32 0.0, %v5521
      %v5523 = vpop.f32.mrb[0].mxu0
      %5524 = vdwg.mxu0
      %v5525 = vadd.f32 %v5100, %v5399
      %v5526 = vadd.f32 %v5101, %v5402
      %v5527 = vadd.f32 %v5102, %v5407
      %v5528 = vadd.f32 %v5103, %v5410
      %v5529 = vadd.f32 %v5104, %v5415
      %v5530 = vadd.f32 %v5105, %v5418
      %v5531 = vadd.f32 %v5106, %v5423
      %v5532 = vadd.f32 %v5107, %v5426
      %v5533 = vadd.f32 %v5108, %v5431
      %v5534 = vadd.f32 %v5109, %v5434
      %v5535 = vadd.f32 %v5110, %v5439
      %v5536 = vadd.f32 %v5111, %v5442
      %v5537 = vadd.f32 %v5112, %v5447
      %v5538 = vadd.f32 %v5113, %v5450
      %v5539 = vadd.f32 %v5114, %v5455
      %v5540 = vadd.f32 %v5115, %v5458
      %v5541 = vadd.f32 %v5116, %v5463
      %v5542 = vadd.f32 %v5117, %v5466
      %v5543 = vadd.f32 %v5118, %v5471
      %v5544 = vadd.f32 %v5119, %v5474
      %v5545 = vadd.f32 %v5120, %v5479
      %v5546 = vadd.f32 %v5121, %v5482
      %v5547 = vadd.f32 %v5122, %v5487
      %v5548 = vadd.f32 %v5123, %v5490
      %v5549 = vadd.f32 %v5124, %v5495
      %v5550 = vadd.f32 %v5125, %v5498
      %v5551 = vadd.f32 %v5126, %v5503
      %v5552 = vadd.f32 %v5127, %v5506
      %v5553 = vadd.f32 %v5128, %v5511
      %v5554 = vadd.f32 %v5129, %v5514
      %v5555 = vadd.f32 %v5130, %v5519
      %v5556 = vadd.f32 %v5131, %v5522
      %s5557 = scalar_lea.vmem %s8, 448
      %v5558 = vld [vmem:[%s5557] sm:$0xf]
      %v5559 = vld [vmem:[%s5557 + $0x4] sm:$0xf]
      %v5560 = vld [vmem:[%s5557 + $0x8] sm:$0xf]
      %v5561 = vld [vmem:[%s5557 + $0xc] sm:$0xf]
      %v5562 = vld [vmem:[%s5557 + $0x10] sm:$0xf]
      %v5563 = vld [vmem:[%s5557 + $0x14] sm:$0xf]
      %v5564 = vld [vmem:[%s5557 + $0x18] sm:$0xf]
      %v5565 = vld [vmem:[%s5557 + $0x1c] sm:$0xf]
      %v5566 = vld [vmem:[%s5557 + $0x20] sm:$0xf]
      %v5567 = vld [vmem:[%s5557 + $0x24] sm:$0xf]
      %v5568 = vld [vmem:[%s5557 + $0x28] sm:$0xf]
      %v5569 = vld [vmem:[%s5557 + $0x2c] sm:$0xf]
      %v5570 = vld [vmem:[%s5557 + $0x30] sm:$0xf]
      %v5571 = vld [vmem:[%s5557 + $0x34] sm:$0xf]
      %v5572 = vld [vmem:[%s5557 + $0x38] sm:$0xf]
      %v5573 = vld [vmem:[%s5557 + $0x3c] sm:$0xf]
      %v5590 = vunpack.c.l.b16 %v5558
      %v5591 = vunpack.c.l.b16 %v5559
      %v5592 = vunpack.c.l.b16 %v5560
      %v5593 = vunpack.c.l.b16 %v5561
      %v5594 = vunpack.c.l.b16 %v5562
      %v5595 = vunpack.c.l.b16 %v5563
      %v5596 = vunpack.c.l.b16 %v5564
      %v5597 = vunpack.c.l.b16 %v5565
      %v5598 = vunpack.c.l.b16 %v5566
      %v5599 = vunpack.c.l.b16 %v5567
      %v5600 = vunpack.c.l.b16 %v5568
      %v5601 = vunpack.c.l.b16 %v5569
      %v5602 = vunpack.c.l.b16 %v5570
      %v5603 = vunpack.c.l.b16 %v5571
      %v5604 = vunpack.c.l.b16 %v5572
      %v5605 = vunpack.c.l.b16 %v5573
      %v5606 = vpack.c.b16 %v5591, %v5590
      %v5607 = vpack.c.b16 %v5593, %v5592
      %v5608 = vpack.c.b16 %v5595, %v5594
      %v5609 = vpack.c.b16 %v5597, %v5596
      %v5610 = vpack.c.b16 %v5599, %v5598
      %v5611 = vpack.c.b16 %v5601, %v5600
      %v5612 = vpack.c.b16 %v5603, %v5602
      %v5613 = vpack.c.b16 %v5605, %v5604
      %5622 = vmatprep.subr.bf16.mxu0 0
      %5623 = vmatpush1.bf16.msra.mxu0 %v5606
      %5624 = vmatprep.subr.bf16.mxu0 0
      %5625 = vmatpush1.bf16.msra.mxu0 %v5607
      %5626 = vmatprep.subr.bf16.mxu0 0
      %5627 = vmatpush1.bf16.msra.mxu0 %v5608
      %5628 = vmatprep.subr.bf16.mxu0 0
      %5629 = vmatpush1.bf16.msra.mxu0 %v5609
      %5630 = vmatprep.subr.bf16.mxu0 0
      %5631 = vmatpush1.bf16.msra.mxu0 %v5610
      %5632 = vmatprep.subr.bf16.mxu0 0
      %5633 = vmatpush1.bf16.msra.mxu0 %v5611
      %5634 = vmatprep.subr.bf16.mxu0 0
      %5635 = vmatpush1.bf16.msra.mxu0 %v5612
      %5636 = vmatprep.subr.bf16.mxu0 0
      %5637 = vmatpush1.bf16.msra.mxu0 %v5613
      %5638 = vmatprep.subr.bf16.mxu0 0
      %5639 = vmatpush1.bf16.msra.mxu0 0
      %5640 = vmatprep.subr.bf16.mxu0 0
      %5641 = vmatpush1.bf16.msra.mxu0 0
      %5642 = vmatprep.subr.bf16.mxu0 0
      %5643 = vmatpush1.bf16.msra.mxu0 0
      %5644 = vmatprep.subr.bf16.mxu0 0
      %5645 = vmatpush1.bf16.msra.mxu0 0
      %5646 = vmatprep.subr.bf16.mxu0 0
      %5647 = vmatpush1.bf16.msra.mxu0 0
      %5648 = vmatprep.subr.bf16.mxu0 0
      %5649 = vmatpush1.bf16.msra.mxu0 0
      %5650 = vmatprep.subr.bf16.mxu0 0
      %5651 = vmatpush1.bf16.msra.mxu0 0
      %5652 = vmatprep.subr.bf16.mxu0 0
      %5653 = vmatpush1.bf16.msra.mxu0 0
      %5654 = vmatprep.mubr.bf16.mxu0 0
      %5655 = vmatmul.mubr.bf16.gmra.mrb[0].mxu0 %v4693
      %v5656 = vpop.f32.mrb[0].mxu0
      %v5657 = vadd.f32 0.0, %v5656
      %v5658 = vpop.f32.mrb[0].mxu0
      %v5659 = vpop.f32.mrb[0].mxu0
      %v5660 = vadd.f32 0.0, %v5659
      %v5661 = vpop.f32.mrb[0].mxu0
      %5662 = vmatprep.mubr.bf16.mxu0 0
      %5663 = vmatmul.mubr.bf16.gmra.mrb[0].mxu0 %v4694
      %v5664 = vpop.f32.mrb[0].mxu0
      %v5665 = vadd.f32 0.0, %v5664
      %v5666 = vpop.f32.mrb[0].mxu0
      %v5667 = vpop.f32.mrb[0].mxu0
      %v5668 = vadd.f32 0.0, %v5667
      %v5669 = vpop.f32.mrb[0].mxu0
      %5670 = vmatprep.mubr.bf16.mxu0 0
      %5671 = vmatmul.mubr.bf16.gmra.mrb[0].mxu0 %v4695
      %v5672 = vpop.f32.mrb[0].mxu0
      %v5673 = vadd.f32 0.0, %v5672
      %v5674 = vpop.f32.mrb[0].mxu0
      %v5675 = vpop.f32.mrb[0].mxu0
      %v5676 = vadd.f32 0.0, %v5675
      %v5677 = vpop.f32.mrb[0].mxu0
      %5678 = vmatprep.mubr.bf16.mxu0 0
      %5679 = vmatmul.mubr.bf16.gmra.mrb[0].mxu0 %v4696
      %v5680 = vpop.f32.mrb[0].mxu0
      %v5681 = vadd.f32 0.0, %v5680
      %v5682 = vpop.f32.mrb[0].mxu0
      %v5683 = vpop.f32.mrb[0].mxu0
      %v5684 = vadd.f32 0.0, %v5683
      %v5685 = vpop.f32.mrb[0].mxu0
      %5686 = vmatprep.mubr.bf16.mxu0 0
      %5687 = vmatmul.mubr.bf16.gmra.mrb[0].mxu0 %v4697
      %v5688 = vpop.f32.mrb[0].mxu0
      %v5689 = vadd.f32 0.0, %v5688
      %v5690 = vpop.f32.mrb[0].mxu0
      %v5691 = vpop.f32.mrb[0].mxu0
      %v5692 = vadd.f32 0.0, %v5691
      %v5693 = vpop.f32.mrb[0].mxu0
      %5694 = vmatprep.mubr.bf16.mxu0 0
      %5695 = vmatmul.mubr.bf16.gmra.mrb[0].mxu0 %v4698
      %v5696 = vpop.f32.mrb[0].mxu0
      %v5697 = vadd.f32 0.0, %v5696
      %v5698 = vpop.f32.mrb[0].mxu0
      %v5699 = vpop.f32.mrb[0].mxu0
      %v5700 = vadd.f32 0.0, %v5699
      %v5701 = vpop.f32.mrb[0].mxu0
      %5702 = vmatprep.mubr.bf16.mxu0 0
      %5703 = vmatmul.mubr.bf16.gmra.mrb[0].mxu0 %v4699
      %v5704 = vpop.f32.mrb[0].mxu0
      %v5705 = vadd.f32 0.0, %v5704
      %v5706 = vpop.f32.mrb[0].mxu0
      %v5707 = vpop.f32.mrb[0].mxu0
      %v5708 = vadd.f32 0.0, %v5707
      %v5709 = vpop.f32.mrb[0].mxu0
      %5710 = vmatprep.mubr.bf16.mxu0 0
      %5711 = vmatmul.mubr.bf16.gmra.mrb[0].mxu0 %v4700
      %v5712 = vpop.f32.mrb[0].mxu0
      %v5713 = vadd.f32 0.0, %v5712
      %v5714 = vpop.f32.mrb[0].mxu0
      %v5715 = vpop.f32.mrb[0].mxu0
      %v5716 = vadd.f32 0.0, %v5715
      %v5717 = vpop.f32.mrb[0].mxu0
      %5718 = vmatprep.mubr.bf16.mxu0 0
      %5719 = vmatmul.mubr.bf16.gmra.mrb[0].mxu0 %v4701
      %v5720 = vpop.f32.mrb[0].mxu0
      %v5721 = vadd.f32 0.0, %v5720
      %v5722 = vpop.f32.mrb[0].mxu0
      %v5723 = vpop.f32.mrb[0].mxu0
      %v5724 = vadd.f32 0.0, %v5723
      %v5725 = vpop.f32.mrb[0].mxu0
      %5726 = vmatprep.mubr.bf16.mxu0 0
      %5727 = vmatmul.mubr.bf16.gmra.mrb[0].mxu0 %v4702
      %v5728 = vpop.f32.mrb[0].mxu0
      %v5729 = vadd.f32 0.0, %v5728
      %v5730 = vpop.f32.mrb[0].mxu0
      %v5731 = vpop.f32.mrb[0].mxu0
      %v5732 = vadd.f32 0.0, %v5731
      %v5733 = vpop.f32.mrb[0].mxu0
      %5734 = vmatprep.mubr.bf16.mxu0 0
      %5735 = vmatmul.mubr.bf16.gmra.mrb[0].mxu0 %v4703
      %v5736 = vpop.f32.mrb[0].mxu0
      %v5737 = vadd.f32 0.0, %v5736
      %v5738 = vpop.f32.mrb[0].mxu0
      %v5739 = vpop.f32.mrb[0].mxu0
      %v5740 = vadd.f32 0.0, %v5739
      %v5741 = vpop.f32.mrb[0].mxu0
      %5742 = vmatprep.mubr.bf16.mxu0 0
      %5743 = vmatmul.mubr.bf16.gmra.mrb[0].mxu0 %v4704
      %v5744 = vpop.f32.mrb[0].mxu0
      %v5745 = vadd.f32 0.0, %v5744
      %v5746 = vpop.f32.mrb[0].mxu0
      %v5747 = vpop.f32.mrb[0].mxu0
      %v5748 = vadd.f32 0.0, %v5747
      %v5749 = vpop.f32.mrb[0].mxu0
      %5750 = vmatprep.mubr.bf16.mxu0 0
      %5751 = vmatmul.mubr.bf16.gmra.mrb[0].mxu0 %v4705
      %v5752 = vpop.f32.mrb[0].mxu0
      %v5753 = vadd.f32 0.0, %v5752
      %v5754 = vpop.f32.mrb[0].mxu0
      %v5755 = vpop.f32.mrb[0].mxu0
      %v5756 = vadd.f32 0.0, %v5755
      %v5757 = vpop.f32.mrb[0].mxu0
      %5758 = vmatprep.mubr.bf16.mxu0 0
      %5759 = vmatmul.mubr.bf16.gmra.mrb[0].mxu0 %v4706
      %v5760 = vpop.f32.mrb[0].mxu0
      %v5761 = vadd.f32 0.0, %v5760
      %v5762 = vpop.f32.mrb[0].mxu0
      %v5763 = vpop.f32.mrb[0].mxu0
      %v5764 = vadd.f32 0.0, %v5763
      %v5765 = vpop.f32.mrb[0].mxu0
      %5766 = vmatprep.mubr.bf16.mxu0 0
      %5767 = vmatmul.mubr.bf16.gmra.mrb[0].mxu0 %v4707
      %v5768 = vpop.f32.mrb[0].mxu0
      %v5769 = vadd.f32 0.0, %v5768
      %v5770 = vpop.f32.mrb[0].mxu0
      %v5771 = vpop.f32.mrb[0].mxu0
      %v5772 = vadd.f32 0.0, %v5771
      %v5773 = vpop.f32.mrb[0].mxu0
      %5774 = vmatprep.mubr.bf16.mxu0 0
      %5775 = vmatmul.mubr.bf16.gmra.mrb[0].mxu0 %v5133
      %v5776 = vpop.f32.mrb[0].mxu0
      %v5777 = vadd.f32 0.0, %v5776
      %v5778 = vpop.f32.mrb[0].mxu0
      %v5779 = vpop.f32.mrb[0].mxu0
      %v5780 = vadd.f32 0.0, %v5779
      %v5781 = vpop.f32.mrb[0].mxu0
      %5782 = vdwg.mxu0
      %v5783 = vadd.f32 %v5525, %v5657
      %v5784 = vadd.f32 %v5526, %v5660
      %v5785 = vadd.f32 %v5527, %v5665
      %v5786 = vadd.f32 %v5528, %v5668
      %v5787 = vadd.f32 %v5529, %v5673
      %v5788 = vadd.f32 %v5530, %v5676
      %v5789 = vadd.f32 %v5531, %v5681
      %v5790 = vadd.f32 %v5532, %v5684
      %v5791 = vadd.f32 %v5533, %v5689
      %v5792 = vadd.f32 %v5534, %v5692
      %v5793 = vadd.f32 %v5535, %v5697
      %v5794 = vadd.f32 %v5536, %v5700
      %v5795 = vadd.f32 %v5537, %v5705
      %v5796 = vadd.f32 %v5538, %v5708
      %v5797 = vadd.f32 %v5539, %v5713
      %v5798 = vadd.f32 %v5540, %v5716
      %v5799 = vadd.f32 %v5541, %v5721
      %v5800 = vadd.f32 %v5542, %v5724
      %v5801 = vadd.f32 %v5543, %v5729
      %v5802 = vadd.f32 %v5544, %v5732
      %v5803 = vadd.f32 %v5545, %v5737
      %v5804 = vadd.f32 %v5546, %v5740
      %v5805 = vadd.f32 %v5547, %v5745
      %v5806 = vadd.f32 %v5548, %v5748
      %v5807 = vadd.f32 %v5549, %v5753
      %v5808 = vadd.f32 %v5550, %v5756
      %v5809 = vadd.f32 %v5551, %v5761
      %v5810 = vadd.f32 %v5552, %v5764
      %v5811 = vadd.f32 %v5553, %v5769
      %v5812 = vadd.f32 %v5554, %v5772
      %v5813 = vadd.f32 %v5555, %v5777
      %v5814 = vadd.f32 %v5556, %v5780
      %v5815 = vld [vmem:[#allocation2 + $0x18] sm:$0xff]
      %v5816 = vld [vmem:[#allocation2 + $0x20] sm:$0xff]
      %v5817 = vld [vmem:[#allocation2 + $0x28] sm:$0xff]
      %v5818 = vld [vmem:[#allocation2 + $0x30] sm:$0xff]
      %v5819 = vld [vmem:[#allocation2 + $0x38] sm:$0xff]
      %v5820 = vld [vmem:[#allocation2 + $0x40] sm:$0xff]
      %v5821 = vld [vmem:[#allocation2 + $0x48] sm:$0xff]
      %v5822 = vld [vmem:[#allocation2 + $0x50] sm:$0xff]
      %v5823 = vld [vmem:[#allocation2 + $0x58] sm:$0xff]
      %v5824 = vld [vmem:[#allocation2 + $0x60] sm:$0xff]
      %v5825 = vld [vmem:[#allocation2 + $0x68] sm:$0xff]
      %v5826 = vld [vmem:[#allocation2 + $0x70] sm:$0xff]
      %v5827 = vld [vmem:[#allocation2 + $0x78] sm:$0xff]
      %v5828 = vld [vmem:[#allocation2 + $0x80] sm:$0xff]
      %v5829 = vld [vmem:[#allocation2 + $0x88] sm:$0xff]
      %v5830 = vld [vmem:[#allocation2 + $0x90] sm:$0xff]
      %v5831 = vld [vmem:[#allocation2 + $0x98] sm:$0x1]
      %v5832 = vsel %vm3569, %v5815, 0
      %v5833 = vsel %vm3570, %v5816, 0
      %v5834 = vsel %vm3571, %v5817, 0
      %v5835 = vsel %vm3572, %v5818, 0
      %v5836 = vsel %vm3573, %v5819, 0
      %v5837 = vsel %vm3574, %v5820, 0
      %v5838 = vsel %vm3575, %v5821, 0
      %v5839 = vsel %vm3576, %v5822, 0
      %v5840 = vsel %vm3577, %v5823, 0
      %v5841 = vsel %vm3578, %v5824, 0
      %v5842 = vsel %vm3579, %v5825, 0
      %v5843 = vsel %vm3580, %v5826, 0
      %v5844 = vsel %vm3581, %v5827, 0
      %v5845 = vsel %vm3582, %v5828, 0
      %v5846 = vsel %vm3583, %v5829, 0
      %v5847 = vsel %vm3584, %v5830, 0
      %v5848 = vsel %vm3585, %v5831, 0
      %s5849 = scalar_lea.vmem %s8, 512
      %v5850 = vld [vmem:[%s5849] sm:$0xf]
      %v5851 = vld [vmem:[%s5849 + $0x4] sm:$0xf]
      %v5852 = vld [vmem:[%s5849 + $0x8] sm:$0xf]
      %v5853 = vld [vmem:[%s5849 + $0xc] sm:$0xf]
      %v5854 = vld [vmem:[%s5849 + $0x10] sm:$0xf]
      %v5855 = vld [vmem:[%s5849 + $0x14] sm:$0xf]
      %v5856 = vld [vmem:[%s5849 + $0x18] sm:$0xf]
      %v5857 = vld [vmem:[%s5849 + $0x1c] sm:$0xf]
      %v5858 = vld [vmem:[%s5849 + $0x20] sm:$0xf]
      %v5859 = vld [vmem:[%s5849 + $0x24] sm:$0xf]
      %v5860 = vld [vmem:[%s5849 + $0x28] sm:$0xf]
      %v5861 = vld [vmem:[%s5849 + $0x2c] sm:$0xf]
      %v5862 = vld [vmem:[%s5849 + $0x30] sm:$0xf]
      %v5863 = vld [vmem:[%s5849 + $0x34] sm:$0xf]
      %v5864 = vld [vmem:[%s5849 + $0x38] sm:$0xf]
      %v5865 = vld [vmem:[%s5849 + $0x3c] sm:$0xf]
      %v5867 = vshrl.u32 %v5832, 16
      %v5869 = vshll.u32 %v5832, 16
      %v5871 = vrot.slane %v5869, 1
      %v5872 = vor.u32 %v5867, %v5871
      %v5874 = vshll.u32 %v5833, 16
      %v5876 = vrot.slane %v5874, 1
      %v5877 = vsel %vm2487, %v5872, %v5876
      %v5878 = vshrl.u32 %v5833, 16
      %v5880 = vor.u32 %v5878, %v5876
      %v5882 = vshll.u32 %v5834, 16
      %v5884 = vrot.slane %v5882, 1
      %v5885 = vsel %vm2487, %v5880, %v5884
      %v5886 = vshrl.u32 %v5834, 16
      %v5888 = vor.u32 %v5886, %v5884
      %v5890 = vshll.u32 %v5835, 16
      %v5892 = vrot.slane %v5890, 1
      %v5893 = vsel %vm2487, %v5888, %v5892
      %v5894 = vshrl.u32 %v5835, 16
      %v5896 = vor.u32 %v5894, %v5892
      %v5898 = vshll.u32 %v5836, 16
      %v5900 = vrot.slane %v5898, 1
      %v5901 = vsel %vm2487, %v5896, %v5900
      %v5902 = vshrl.u32 %v5836, 16
      %v5904 = vor.u32 %v5902, %v5900
      %v5906 = vshll.u32 %v5837, 16
      %v5908 = vrot.slane %v5906, 1
      %v5909 = vsel %vm2487, %v5904, %v5908
      %v5910 = vshrl.u32 %v5837, 16
      %v5912 = vor.u32 %v5910, %v5908
      %v5914 = vshll.u32 %v5838, 16
      %v5916 = vrot.slane %v5914, 1
      %v5917 = vsel %vm2487, %v5912, %v5916
      %v5918 = vshrl.u32 %v5838, 16
      %v5920 = vor.u32 %v5918, %v5916
      %v5922 = vshll.u32 %v5839, 16
      %v5924 = vrot.slane %v5922, 1
      %v5925 = vsel %vm2487, %v5920, %v5924
      %v5926 = vshrl.u32 %v5839, 16
      %v5928 = vor.u32 %v5926, %v5924
      %v5930 = vshll.u32 %v5840, 16
      %v5932 = vrot.slane %v5930, 1
      %v5933 = vsel %vm2487, %v5928, %v5932
      %v5934 = vshrl.u32 %v5840, 16
      %v5936 = vor.u32 %v5934, %v5932
      %v5938 = vshll.u32 %v5841, 16
      %v5940 = vrot.slane %v5938, 1
      %v5941 = vsel %vm2487, %v5936, %v5940
      %v5942 = vshrl.u32 %v5841, 16
      %v5944 = vor.u32 %v5942, %v5940
      %v5946 = vshll.u32 %v5842, 16
      %v5948 = vrot.slane %v5946, 1
      %v5949 = vsel %vm2487, %v5944, %v5948
      %v5950 = vshrl.u32 %v5842, 16
      %v5952 = vor.u32 %v5950, %v5948
      %v5954 = vshll.u32 %v5843, 16
      %v5956 = vrot.slane %v5954, 1
      %v5957 = vsel %vm2487, %v5952, %v5956
      %v5958 = vshrl.u32 %v5843, 16
      %v5960 = vor.u32 %v5958, %v5956
      %v5962 = vshll.u32 %v5844, 16
      %v5964 = vrot.slane %v5962, 1
      %v5965 = vsel %vm2487, %v5960, %v5964
      %v5966 = vshrl.u32 %v5844, 16
      %v5968 = vor.u32 %v5966, %v5964
      %v5970 = vshll.u32 %v5845, 16
      %v5972 = vrot.slane %v5970, 1
      %v5973 = vsel %vm2487, %v5968, %v5972
      %v5974 = vshrl.u32 %v5845, 16
      %v5976 = vor.u32 %v5974, %v5972
      %v5978 = vshll.u32 %v5846, 16
      %v5980 = vrot.slane %v5978, 1
      %v5981 = vsel %vm2487, %v5976, %v5980
      %v5982 = vshrl.u32 %v5846, 16
      %v5984 = vor.u32 %v5982, %v5980
      %v5986 = vshll.u32 %v5847, 16
      %v5988 = vrot.slane %v5986, 1
      %v5989 = vsel %vm2487, %v5984, %v5988
      %v5990 = vshrl.u32 %v5847, 16
      %v5992 = vor.u32 %v5990, %v5988
      %v5994 = vshll.u32 %v5848, 16
      %v5996 = vrot.slane %v5994, 1
      %v5997 = vsel %vm2487, %v5992, %v5996
      %v6030 = vunpack.c.l.b16 %v5850
      %v6031 = vunpack.c.l.b16 %v5851
      %v6032 = vunpack.c.l.b16 %v5852
      %v6033 = vunpack.c.l.b16 %v5853
      %v6034 = vunpack.c.l.b16 %v5854
      %v6035 = vunpack.c.l.b16 %v5855
      %v6036 = vunpack.c.l.b16 %v5856
      %v6037 = vunpack.c.l.b16 %v5857
      %v6038 = vunpack.c.l.b16 %v5858
      %v6039 = vunpack.c.l.b16 %v5859
      %v6040 = vunpack.c.l.b16 %v5860
      %v6041 = vunpack.c.l.b16 %v5861
      %v6042 = vunpack.c.l.b16 %v5862
      %v6043 = vunpack.c.l.b16 %v5863
      %v6044 = vunpack.c.l.b16 %v5864
      %v6045 = vunpack.c.l.b16 %v5865
      %v6046 = vpack.c.b16 %v6031, %v6030
      %v6047 = vpack.c.b16 %v6033, %v6032
      %v6048 = vpack.c.b16 %v6035, %v6034
      %v6049 = vpack.c.b16 %v6037, %v6036
      %v6050 = vpack.c.b16 %v6039, %v6038
      %v6051 = vpack.c.b16 %v6041, %v6040
      %v6052 = vpack.c.b16 %v6043, %v6042
      %v6053 = vpack.c.b16 %v6045, %v6044
      %6062 = vmatprep.subr.bf16.mxu0 0
      %6063 = vmatpush1.bf16.msra.mxu0 %v6046
      %6064 = vmatprep.subr.bf16.mxu0 0
      %6065 = vmatpush1.bf16.msra.mxu0 %v6047
      %6066 = vmatprep.subr.bf16.mxu0 0
      %6067 = vmatpush1.bf16.msra.mxu0 %v6048
      %6068 = vmatprep.subr.bf16.mxu0 0
      %6069 = vmatpush1.bf16.msra.mxu0 %v6049
      %6070 = vmatprep.subr.bf16.mxu0 0
      %6071 = vmatpush1.bf16.msra.mxu0 %v6050
      %6072 = vmatprep.subr.bf16.mxu0 0
      %6073 = vmatpush1.bf16.msra.mxu0 %v6051
      %6074 = vmatprep.subr.bf16.mxu0 0
      %6075 = vmatpush1.bf16.msra.mxu0 %v6052
      %6076 = vmatprep.subr.bf16.mxu0 0
      %6077 = vmatpush1.bf16.msra.mxu0 %v6053
      %6078 = vmatprep.subr.bf16.mxu0 0
      %6079 = vmatpush1.bf16.msra.mxu0 0
      %6080 = vmatprep.subr.bf16.mxu0 0
      %6081 = vmatpush1.bf16.msra.mxu0 0
      %6082 = vmatprep.subr.bf16.mxu0 0
      %6083 = vmatpush1.bf16.msra.mxu0 0
      %6084 = vmatprep.subr.bf16.mxu0 0
      %6085 = vmatpush1.bf16.msra.mxu0 0
      %6086 = vmatprep.subr.bf16.mxu0 0
      %6087 = vmatpush1.bf16.msra.mxu0 0
      %6088 = vmatprep.subr.bf16.mxu0 0
      %6089 = vmatpush1.bf16.msra.mxu0 0
      %6090 = vmatprep.subr.bf16.mxu0 0
      %6091 = vmatpush1.bf16.msra.mxu0 0
      %6092 = vmatprep.subr.bf16.mxu0 0
      %6093 = vmatpush1.bf16.msra.mxu0 0
      %6094 = vmatprep.mubr.bf16.mxu0 0
      %6095 = vmatmul.mubr.bf16.gmra.mrb[0].mxu0 %v5877
      %v6096 = vpop.f32.mrb[0].mxu0
      %v6097 = vadd.f32 0.0, %v6096
      %v6098 = vpop.f32.mrb[0].mxu0
      %v6099 = vpop.f32.mrb[0].mxu0
      %v6100 = vadd.f32 0.0, %v6099
      %v6101 = vpop.f32.mrb[0].mxu0
      %6102 = vmatprep.mubr.bf16.mxu0 0
      %6103 = vmatmul.mubr.bf16.gmra.mrb[0].mxu0 %v5885
      %v6104 = vpop.f32.mrb[0].mxu0
      %v6105 = vadd.f32 0.0, %v6104
      %v6106 = vpop.f32.mrb[0].mxu0
      %v6107 = vpop.f32.mrb[0].mxu0
      %v6108 = vadd.f32 0.0, %v6107
      %v6109 = vpop.f32.mrb[0].mxu0
      %6110 = vmatprep.mubr.bf16.mxu0 0
      %6111 = vmatmul.mubr.bf16.gmra.mrb[0].mxu0 %v5893
      %v6112 = vpop.f32.mrb[0].mxu0
      %v6113 = vadd.f32 0.0, %v6112
      %v6114 = vpop.f32.mrb[0].mxu0
      %v6115 = vpop.f32.mrb[0].mxu0
      %v6116 = vadd.f32 0.0, %v6115
      %v6117 = vpop.f32.mrb[0].mxu0
      %6118 = vmatprep.mubr.bf16.mxu0 0
      %6119 = vmatmul.mubr.bf16.gmra.mrb[0].mxu0 %v5901
      %v6120 = vpop.f32.mrb[0].mxu0
      %v6121 = vadd.f32 0.0, %v6120
      %v6122 = vpop.f32.mrb[0].mxu0
      %v6123 = vpop.f32.mrb[0].mxu0
      %v6124 = vadd.f32 0.0, %v6123
      %v6125 = vpop.f32.mrb[0].mxu0
      %6126 = vmatprep.mubr.bf16.mxu0 0
      %6127 = vmatmul.mubr.bf16.gmra.mrb[0].mxu0 %v5909
      %v6128 = vpop.f32.mrb[0].mxu0
      %v6129 = vadd.f32 0.0, %v6128
      %v6130 = vpop.f32.mrb[0].mxu0
      %v6131 = vpop.f32.mrb[0].mxu0
      %v6132 = vadd.f32 0.0, %v6131
      %v6133 = vpop.f32.mrb[0].mxu0
      %6134 = vmatprep.mubr.bf16.mxu0 0
      %6135 = vmatmul.mubr.bf16.gmra.mrb[0].mxu0 %v5917
      %v6136 = vpop.f32.mrb[0].mxu0
      %v6137 = vadd.f32 0.0, %v6136
      %v6138 = vpop.f32.mrb[0].mxu0
      %v6139 = vpop.f32.mrb[0].mxu0
      %v6140 = vadd.f32 0.0, %v6139
      %v6141 = vpop.f32.mrb[0].mxu0
      %6142 = vmatprep.mubr.bf16.mxu0 0
      %6143 = vmatmul.mubr.bf16.gmra.mrb[0].mxu0 %v5925
      %v6144 = vpop.f32.mrb[0].mxu0
      %v6145 = vadd.f32 0.0, %v6144
      %v6146 = vpop.f32.mrb[0].mxu0
      %v6147 = vpop.f32.mrb[0].mxu0
      %v6148 = vadd.f32 0.0, %v6147
      %v6149 = vpop.f32.mrb[0].mxu0
      %6150 = vmatprep.mubr.bf16.mxu0 0
      %6151 = vmatmul.mubr.bf16.gmra.mrb[0].mxu0 %v5933
      %v6152 = vpop.f32.mrb[0].mxu0
      %v6153 = vadd.f32 0.0, %v6152
      %v6154 = vpop.f32.mrb[0].mxu0
      %v6155 = vpop.f32.mrb[0].mxu0
      %v6156 = vadd.f32 0.0, %v6155
      %v6157 = vpop.f32.mrb[0].mxu0
      %6158 = vmatprep.mubr.bf16.mxu0 0
      %6159 = vmatmul.mubr.bf16.gmra.mrb[0].mxu0 %v5941
      %v6160 = vpop.f32.mrb[0].mxu0
      %v6161 = vadd.f32 0.0, %v6160
      %v6162 = vpop.f32.mrb[0].mxu0
      %v6163 = vpop.f32.mrb[0].mxu0
      %v6164 = vadd.f32 0.0, %v6163
      %v6165 = vpop.f32.mrb[0].mxu0
      %6166 = vmatprep.mubr.bf16.mxu0 0
      %6167 = vmatmul.mubr.bf16.gmra.mrb[0].mxu0 %v5949
      %v6168 = vpop.f32.mrb[0].mxu0
      %v6169 = vadd.f32 0.0, %v6168
      %v6170 = vpop.f32.mrb[0].mxu0
      %v6171 = vpop.f32.mrb[0].mxu0
      %v6172 = vadd.f32 0.0, %v6171
      %v6173 = vpop.f32.mrb[0].mxu0
      %6174 = vmatprep.mubr.bf16.mxu0 0
      %6175 = vmatmul.mubr.bf16.gmra.mrb[0].mxu0 %v5957
      %v6176 = vpop.f32.mrb[0].mxu0
      %v6177 = vadd.f32 0.0, %v6176
      %v6178 = vpop.f32.mrb[0].mxu0
      %v6179 = vpop.f32.mrb[0].mxu0
      %v6180 = vadd.f32 0.0, %v6179
      %v6181 = vpop.f32.mrb[0].mxu0
      %6182 = vmatprep.mubr.bf16.mxu0 0
      %6183 = vmatmul.mubr.bf16.gmra.mrb[0].mxu0 %v5965
      %v6184 = vpop.f32.mrb[0].mxu0
      %v6185 = vadd.f32 0.0, %v6184
      %v6186 = vpop.f32.mrb[0].mxu0
      %v6187 = vpop.f32.mrb[0].mxu0
      %v6188 = vadd.f32 0.0, %v6187
      %v6189 = vpop.f32.mrb[0].mxu0
      %6190 = vmatprep.mubr.bf16.mxu0 0
      %6191 = vmatmul.mubr.bf16.gmra.mrb[0].mxu0 %v5973
      %v6192 = vpop.f32.mrb[0].mxu0
      %v6193 = vadd.f32 0.0, %v6192
      %v6194 = vpop.f32.mrb[0].mxu0
      %v6195 = vpop.f32.mrb[0].mxu0
      %v6196 = vadd.f32 0.0, %v6195
      %v6197 = vpop.f32.mrb[0].mxu0
      %6198 = vmatprep.mubr.bf16.mxu0 0
      %6199 = vmatmul.mubr.bf16.gmra.mrb[0].mxu0 %v5981
      %v6200 = vpop.f32.mrb[0].mxu0
      %v6201 = vadd.f32 0.0, %v6200
      %v6202 = vpop.f32.mrb[0].mxu0
      %v6203 = vpop.f32.mrb[0].mxu0
      %v6204 = vadd.f32 0.0, %v6203
      %v6205 = vpop.f32.mrb[0].mxu0
      %6206 = vmatprep.mubr.bf16.mxu0 0
      %6207 = vmatmul.mubr.bf16.gmra.mrb[0].mxu0 %v5989
      %v6208 = vpop.f32.mrb[0].mxu0
      %v6209 = vadd.f32 0.0, %v6208
      %v6210 = vpop.f32.mrb[0].mxu0
      %v6211 = vpop.f32.mrb[0].mxu0
      %v6212 = vadd.f32 0.0, %v6211
      %v6213 = vpop.f32.mrb[0].mxu0
      %6214 = vmatprep.mubr.bf16.mxu0 0
      %6215 = vmatmul.mubr.bf16.gmra.mrb[0].mxu0 %v5997
      %v6216 = vpop.f32.mrb[0].mxu0
      %v6217 = vadd.f32 0.0, %v6216
      %v6218 = vpop.f32.mrb[0].mxu0
      %v6219 = vpop.f32.mrb[0].mxu0
      %v6220 = vadd.f32 0.0, %v6219
      %v6221 = vpop.f32.mrb[0].mxu0
      %6222 = vdwg.mxu0
      %v6223 = vadd.f32 %v5783, %v6097
      %v6224 = vadd.f32 %v5784, %v6100
      %v6225 = vadd.f32 %v5785, %v6105
      %v6226 = vadd.f32 %v5786, %v6108
      %v6227 = vadd.f32 %v5787, %v6113
      %v6228 = vadd.f32 %v5788, %v6116
      %v6229 = vadd.f32 %v5789, %v6121
      %v6230 = vadd.f32 %v5790, %v6124
      %v6231 = vadd.f32 %v5791, %v6129
      %v6232 = vadd.f32 %v5792, %v6132
      %v6233 = vadd.f32 %v5793, %v6137
      %v6234 = vadd.f32 %v5794, %v6140
      %v6235 = vadd.f32 %v5795, %v6145
      %v6236 = vadd.f32 %v5796, %v6148
      %v6237 = vadd.f32 %v5797, %v6153
      %v6238 = vadd.f32 %v5798, %v6156
      %v6239 = vadd.f32 %v5799, %v6161
      %v6240 = vadd.f32 %v5800, %v6164
      %v6241 = vadd.f32 %v5801, %v6169
      %v6242 = vadd.f32 %v5802, %v6172
      %v6243 = vadd.f32 %v5803, %v6177
      %v6244 = vadd.f32 %v5804, %v6180
      %v6245 = vadd.f32 %v5805, %v6185
      %v6246 = vadd.f32 %v5806, %v6188
      %v6247 = vadd.f32 %v5807, %v6193
      %v6248 = vadd.f32 %v5808, %v6196
      %v6249 = vadd.f32 %v5809, %v6201
      %v6250 = vadd.f32 %v5810, %v6204
      %v6251 = vadd.f32 %v5811, %v6209
      %v6252 = vadd.f32 %v5812, %v6212
      %v6253 = vadd.f32 %v5813, %v6217
      %v6254 = vadd.f32 %v5814, %v6220
      %v6255 = vld [vmem:[%s9] sm:$0x1]
      %v6257 = vlaneseq
      %v6258 = vshrl.u32 %v6257, 7
      %v6259 = vsub.s32 0, %v6258
      %v6260 = vrot.slane %v6255, %v6259
      %v6262 = vadd.f32 %v6223, %v6260
      %v6263 = vadd.f32 %v6224, %v6260
      %v6264 = vadd.f32 %v6225, %v6260
      %v6265 = vadd.f32 %v6226, %v6260
      %v6266 = vadd.f32 %v6227, %v6260
      %v6267 = vadd.f32 %v6228, %v6260
      %v6268 = vadd.f32 %v6229, %v6260
      %v6269 = vadd.f32 %v6230, %v6260
      %v6270 = vadd.f32 %v6231, %v6260
      %v6271 = vadd.f32 %v6232, %v6260
      %v6272 = vadd.f32 %v6233, %v6260
      %v6273 = vadd.f32 %v6234, %v6260
      %v6274 = vadd.f32 %v6235, %v6260
      %v6275 = vadd.f32 %v6236, %v6260
      %v6276 = vadd.f32 %v6237, %v6260
      %v6277 = vadd.f32 %v6238, %v6260
      %v6278 = vadd.f32 %v6239, %v6260
      %v6279 = vadd.f32 %v6240, %v6260
      %v6280 = vadd.f32 %v6241, %v6260
      %v6281 = vadd.f32 %v6242, %v6260
      %v6282 = vadd.f32 %v6243, %v6260
      %v6283 = vadd.f32 %v6244, %v6260
      %v6284 = vadd.f32 %v6245, %v6260
      %v6285 = vadd.f32 %v6246, %v6260
      %v6286 = vadd.f32 %v6247, %v6260
      %v6287 = vadd.f32 %v6248, %v6260
      %v6288 = vadd.f32 %v6249, %v6260
      %v6289 = vadd.f32 %v6250, %v6260
      %v6290 = vadd.f32 %v6251, %v6260
      %v6291 = vadd.f32 %v6252, %v6260
      %v6292 = vadd.f32 %v6253, %v6260
      %v6293 = vadd.f32 %v6254, %v6260
      %v6294 = vtanh.pop %v6262
      %v6295 = vtanh.pop %v6263
      %v6296 = vtanh.pop %v6264
      %v6297 = vtanh.pop %v6265
      %v6298 = vtanh.pop %v6266
      %v6299 = vtanh.pop %v6267
      %v6300 = vtanh.pop %v6268
      %v6301 = vtanh.pop %v6269
      %v6302 = vtanh.pop %v6270
      %v6303 = vtanh.pop %v6271
      %v6304 = vtanh.pop %v6272
      %v6305 = vtanh.pop %v6273
      %v6306 = vtanh.pop %v6274
      %v6307 = vtanh.pop %v6275
      %v6308 = vtanh.pop %v6276
      %v6309 = vtanh.pop %v6277
      %v6310 = vtanh.pop %v6278
      %v6311 = vtanh.pop %v6279
      %v6312 = vtanh.pop %v6280
      %v6313 = vtanh.pop %v6281
      %v6314 = vtanh.pop %v6282
      %v6315 = vtanh.pop %v6283
      %v6316 = vtanh.pop %v6284
      %v6317 = vtanh.pop %v6285
      %v6318 = vtanh.pop %v6286
      %v6319 = vtanh.pop %v6287
      %v6320 = vtanh.pop %v6288
      %v6321 = vtanh.pop %v6289
      %v6322 = vtanh.pop %v6290
      %v6323 = vtanh.pop %v6291
      %v6324 = vtanh.pop %v6292
      %v6325 = vtanh.pop %v6293
      %v6326 = vpack.c.bf16 %v6295, %v6294
      %v6327 = vpack.c.bf16 %v6297, %v6296
      %v6328 = vpack.c.bf16 %v6299, %v6298
      %v6329 = vpack.c.bf16 %v6301, %v6300
      %v6330 = vpack.c.bf16 %v6303, %v6302
      %v6331 = vpack.c.bf16 %v6305, %v6304
      %v6332 = vpack.c.bf16 %v6307, %v6306
      %v6333 = vpack.c.bf16 %v6309, %v6308
      %v6334 = vpack.c.bf16 %v6311, %v6310
      %v6335 = vpack.c.bf16 %v6313, %v6312
      %v6336 = vpack.c.bf16 %v6315, %v6314
      %v6337 = vpack.c.bf16 %v6317, %v6316
      %v6338 = vpack.c.bf16 %v6319, %v6318
      %v6339 = vpack.c.bf16 %v6321, %v6320
      %v6340 = vpack.c.bf16 %v6323, %v6322
      %v6341 = vpack.c.bf16 %v6325, %v6324
      %v6358 = vunpack.c.l.b16 %v6326
      %v6359 = vunpack.c.h.b16 %v6326
      %v6360 = vunpack.c.l.b16 %v6327
      %v6361 = vunpack.c.h.b16 %v6327
      %v6362 = vunpack.c.l.b16 %v6328
      %v6363 = vunpack.c.h.b16 %v6328
      %v6364 = vunpack.c.l.b16 %v6329
      %v6365 = vunpack.c.h.b16 %v6329
      %v6366 = vunpack.c.l.b16 %v6330
      %v6367 = vunpack.c.h.b16 %v6330
      %v6368 = vunpack.c.l.b16 %v6331
      %v6369 = vunpack.c.h.b16 %v6331
      %v6370 = vunpack.c.l.b16 %v6332
      %v6371 = vunpack.c.h.b16 %v6332
      %v6372 = vunpack.c.l.b16 %v6333
      %v6373 = vunpack.c.h.b16 %v6333
      %v6374 = vunpack.c.l.b16 %v6334
      %v6375 = vunpack.c.h.b16 %v6334
      %v6376 = vunpack.c.l.b16 %v6335
      %v6377 = vunpack.c.h.b16 %v6335
      %v6378 = vunpack.c.l.b16 %v6336
      %v6379 = vunpack.c.h.b16 %v6336
      %v6380 = vunpack.c.l.b16 %v6337
      %v6381 = vunpack.c.h.b16 %v6337
      %v6382 = vunpack.c.l.b16 %v6338
      %v6383 = vunpack.c.h.b16 %v6338
      %v6384 = vunpack.c.l.b16 %v6339
      %v6385 = vunpack.c.h.b16 %v6339
      %v6386 = vunpack.c.l.b16 %v6340
      %v6387 = vunpack.c.h.b16 %v6340
      %v6388 = vunpack.c.l.b16 %v6341
      %v6389 = vunpack.c.h.b16 %v6341
      %v6390 = vpack.c.b16 %v6358, %v6358
      %v6391 = vpack.c.b16 %v6359, %v6359
      %v6392 = vpack.c.b16 %v6360, %v6360
      %v6393 = vpack.c.b16 %v6361, %v6361
      %v6394 = vpack.c.b16 %v6362, %v6362
      %v6395 = vpack.c.b16 %v6363, %v6363
      %v6396 = vpack.c.b16 %v6364, %v6364
      %v6397 = vpack.c.b16 %v6365, %v6365
      %v6398 = vpack.c.b16 %v6366, %v6366
      %v6399 = vpack.c.b16 %v6367, %v6367
      %v6400 = vpack.c.b16 %v6368, %v6368
      %v6401 = vpack.c.b16 %v6369, %v6369
      %v6402 = vpack.c.b16 %v6370, %v6370
      %v6403 = vpack.c.b16 %v6371, %v6371
      %v6404 = vpack.c.b16 %v6372, %v6372
      %v6405 = vpack.c.b16 %v6373, %v6373
      %v6406 = vpack.c.b16 %v6374, %v6374
      %v6407 = vpack.c.b16 %v6375, %v6375
      %v6408 = vpack.c.b16 %v6376, %v6376
      %v6409 = vpack.c.b16 %v6377, %v6377
      %v6410 = vpack.c.b16 %v6378, %v6378
      %v6411 = vpack.c.b16 %v6379, %v6379
      %v6412 = vpack.c.b16 %v6380, %v6380
      %v6413 = vpack.c.b16 %v6381, %v6381
      %v6414 = vpack.c.b16 %v6382, %v6382
      %v6415 = vpack.c.b16 %v6383, %v6383
      %v6416 = vpack.c.b16 %v6384, %v6384
      %v6417 = vpack.c.b16 %v6385, %v6385
      %v6418 = vpack.c.b16 %v6386, %v6386
      %v6419 = vpack.c.b16 %v6387, %v6387
      %v6420 = vpack.c.b16 %v6388, %v6388
      %v6421 = vpack.c.b16 %v6389, %v6389
      %vm6454 = vcmask 60416
      %6455 = vst.msk [vmem:[%s379] sm:$0xf] %vm6454, %v6390
      %6456 = vst.msk [vmem:[%s379 + $0x4] sm:$0xf] %vm6454, %v6391
      %6457 = vst.msk [vmem:[%s379 + $0x8] sm:$0xf] %vm6454, %v6392
      %6458 = vst.msk [vmem:[%s379 + $0xc] sm:$0xf] %vm6454, %v6393
      %6459 = vst.msk [vmem:[%s379 + $0x10] sm:$0xf] %vm6454, %v6394
      %6460 = vst.msk [vmem:[%s379 + $0x14] sm:$0xf] %vm6454, %v6395
      %6461 = vst.msk [vmem:[%s379 + $0x18] sm:$0xf] %vm6454, %v6396
      %6462 = vst.msk [vmem:[%s379 + $0x1c] sm:$0xf] %vm6454, %v6397
      %6463 = vst.msk [vmem:[%s379 + $0x20] sm:$0xf] %vm6454, %v6398
      %6464 = vst.msk [vmem:[%s379 + $0x24] sm:$0xf] %vm6454, %v6399
      %6465 = vst.msk [vmem:[%s379 + $0x28] sm:$0xf] %vm6454, %v6400
      %6466 = vst.msk [vmem:[%s379 + $0x2c] sm:$0xf] %vm6454, %v6401
      %6467 = vst.msk [vmem:[%s379 + $0x30] sm:$0xf] %vm6454, %v6402
      %6468 = vst.msk [vmem:[%s379 + $0x34] sm:$0xf] %vm6454, %v6403
      %6469 = vst.msk [vmem:[%s379 + $0x38] sm:$0xf] %vm6454, %v6404
      %6470 = vst.msk [vmem:[%s379 + $0x3c] sm:$0xf] %vm6454, %v6405
      %6471 = vst.msk [vmem:[%s379 + $0x40] sm:$0xf] %vm6454, %v6406
      %6472 = vst.msk [vmem:[%s379 + $0x44] sm:$0xf] %vm6454, %v6407
      %6473 = vst.msk [vmem:[%s379 + $0x48] sm:$0xf] %vm6454, %v6408
      %6474 = vst.msk [vmem:[%s379 + $0x4c] sm:$0xf] %vm6454, %v6409
      %6475 = vst.msk [vmem:[%s379 + $0x50] sm:$0xf] %vm6454, %v6410
      %6476 = vst.msk [vmem:[%s379 + $0x54] sm:$0xf] %vm6454, %v6411
      %6477 = vst.msk [vmem:[%s379 + $0x58] sm:$0xf] %vm6454, %v6412
      %6478 = vst.msk [vmem:[%s379 + $0x5c] sm:$0xf] %vm6454, %v6413
      %6479 = vst.msk [vmem:[%s379 + $0x60] sm:$0xf] %vm6454, %v6414
      %6480 = vst.msk [vmem:[%s379 + $0x64] sm:$0xf] %vm6454, %v6415
      %6481 = vst.msk [vmem:[%s379 + $0x68] sm:$0xf] %vm6454, %v6416
      %6482 = vst.msk [vmem:[%s379 + $0x6c] sm:$0xf] %vm6454, %v6417
      %6483 = vst.msk [vmem:[%s379 + $0x70] sm:$0xf] %vm6454, %v6418
      %6484 = vst.msk [vmem:[%s379 + $0x74] sm:$0xf] %vm6454, %v6419
      %6485 = vst.msk [vmem:[%s379 + $0x78] sm:$0xf] %vm6454, %v6420
      %6486 = vst.msk [vmem:[%s379 + $0x7c] sm:$0xf] %vm6454, %v6421
      %p6487 = scmp.lt.s32.totalorder %s21, 1
      %s6488 = scalar_select %p6487, %s21, 1
      %s6489 = smul.addr %s6488, 32
      %s6490 = smul.addr %s6489, 4
      %s6491 = scalar_lea.vmem %s10, %s6490
      // Predicated region
      $region61: #{evaluate_reference.1} parent=59 // pred_check
        %p6492 = pneg %p259
      $region62: #{evaluate_reference.1} parent=59 // pred_check_branch
        %6494 = sbr.rel (%p6492) target = $region64
      $region63: #{evaluate_reference.1} parent=59 // pred_region
        _
      $region64: #{evaluate_reference.1} parent=59 // pred_fallthru
        _
    $region60: #{evaluate_reference.1} parent=5 // pred_fallthru
      _
    %p6495 = scmp.le.s32.totalorder 2, %s16
    // Predicated region
    $region65: #{evaluate_reference.1} parent=5 // pred_check
      %p6496 = pneg %p6495
    $region66: #{evaluate_reference.1} parent=5 // pred_check_branch
      %6498 = sbr.rel (%p6496) target = $region68
    $region67: #{evaluate_reference.1} parent=5 // pred_region
      %s6499 = ssub.s32 %s16, 2
      // Predicated region
      $region69: #{evaluate_reference.1} parent=67 // pred_check
        %p6500 = pneg %p265
      $region70: #{evaluate_reference.1} parent=67 // pred_check_branch
        %6502 = sbr.rel (%p6500) target = $region72
      $region71: #{evaluate_reference.1} parent=67 // pred_region
        %p6503 = scmp.lt.s32.totalorder %s22, 1
        %s6504 = scalar_select %p6503, %s22, 1
        %s6505 = smul.addr %s6504, 32
        %s6506 = smul.addr %s6505, 4
        %s6507 = scalar_lea.vmem %s10, %s6506
      $region72: #{evaluate_reference.1} parent=67 // pred_fallthru
        _
    $region68: #{evaluate_reference.1} parent=5 // pred_fallthru
      _
  $region6: #{evaluate_reference.1} parent=0 // loop_footer
    %s20 = sadd.s32 1, %s16
  $region7: #{evaluate_reference.1} parent=0 // loop_footer_branch
    %15 = sbr.rel target = $region3
  $region8: #{evaluate_reference.1} parent=0 // loop_exit
    _

</llo_original>
